<compile_context>
chip_gen: v7x
topology: tpu7x:2x2x1
jax: 0.10.0
libtpu: 0.0.40
codegen_flags: <defaults>
</compile_context>

<pallas_src>
import functools
import math

import jax
import jax.numpy as jnp
from jax.experimental import pallas as pl
from jax.experimental.pallas import tpu as pltpu

LN_EPS = 1e-5
NEG_INF = -1e9


# ----------------------------------------------------------------------------
# In-kernel math helpers (operate on VMEM values)
# ----------------------------------------------------------------------------
def _layernorm(h, gamma, beta):
    mu = jnp.mean(h, axis=-1, keepdims=True)
    var = jnp.mean((h - mu) * (h - mu), axis=-1, keepdims=True)
    return (h - mu) * jax.lax.rsqrt(var + LN_EPS) * gamma + beta


def _encoder_layer(x, mask, heads,
                   ln1_g, ln1_b, wqkv, bqkv, woh, bo,
                   ln2_g, ln2_b, w1, b1, w2, b2):
    """Pre-norm Transformer encoder layer for one batch element.

    x    : [L, D] f32
    mask : [1, L] f32 (1 = valid key position)
    wqkv : [D, 3D] bf16 (fused q|k|v projection),   bqkv: [1, 3D] f32
    woh  : [H, dh, D] bf16 (per-head slices of Wo), bo  : [1, D] f32
    """
    L, D = x.shape
    dh = D // heads
    inv_sqrt_dh = 1.0 / math.sqrt(dh)

    # ---- sublayer 1: x + SelfAttn(LN(x), mask)   (dropout = identity, eval mode)
    h = _layernorm(x, ln1_g, ln1_b)
    # Single fused QKV projection: one wide (N = 3D) MXU matmul instead of three.
    qkv = jnp.dot(h.astype(jnp.bfloat16), wqkv,
                  preferred_element_type=jnp.float32) + bqkv           # [L, 3D] f32

    # Split heads along the SUBLANE axis (no per-head lane slices, no lane concat):
    #   qkv.T            : 2-D minor-dims transpose          [3D, L]
    #   [:D].reshape(...) : tile-aligned sublane split        [H, dh, L]
    #   (0,2,1) on q only : minor-dims swap                   [H, L, dh]
    qkvT = qkv.T                                                        # [3D, L]
    qh = jnp.transpose(qkvT[:D].reshape(heads, dh, L), (0, 2, 1))       # [H, L, dh]
    qh = qh.astype(jnp.bfloat16)
    kT = qkvT[D:2 * D].reshape(heads, dh, L).astype(jnp.bfloat16)       # [H, dh, L]
    vT = qkvT[2 * D:].reshape(heads, dh, L).astype(jnp.bfloat16)        # [H, dh, L]

    # Mask -> additive bias, computed ONCE per layer (hoisted out of the heads).
    bias = jnp.where(mask == 0.0, jnp.float32(NEG_INF), jnp.float32(0.0))  # [1, L]

    # Batched score matmul over all heads at once.
    s = jnp.einsum('hqd,hdk->hqk', qh, kT,
                   preferred_element_type=jnp.float32) * inv_sqrt_dh    # [H, L, L]
    s = s + bias[None]                                                  # bcast h, q
    m = jnp.max(s, axis=-1, keepdims=True)
    p = jnp.exp(s - m)
    p = p * pl.reciprocal(jnp.sum(p, axis=-1, keepdims=True), approx=True)  # EUP rcp

    # Batched PV matmul over all heads at once.
    o = jnp.einsum('hqk,hdk->hqd', p.astype(jnp.bfloat16), vT,
                   preferred_element_type=jnp.float32)                  # [H, L, dh]

    # Merge heads via per-head output projection + sum over the leading head axis.
    attn = jnp.sum(jnp.einsum('hqd,hde->hqe', o.astype(jnp.bfloat16), woh,
                              preferred_element_type=jnp.float32),
                   axis=0) + bo                                         # [L, D]
    x = x + attn

    # ---- sublayer 2: x + FFN(LN(x))
    h = _layernorm(x, ln2_g, ln2_b)
    f = jnp.dot(h.astype(jnp.bfloat16), w1, preferred_element_type=jnp.float32) + b1
    f = jnp.maximum(f, 0.0)
    f = jnp.dot(f.astype(jnp.bfloat16), w2, preferred_element_type=jnp.float32) + b2
    return x + f


# ----------------------------------------------------------------------------
# Fused multi-scale-encoder kernel: grid = (batch, layer), state carried in VMEM
# ----------------------------------------------------------------------------
def multiscale_kernel(scales_ref,                      # SMEM [N] f32
                      x_ref, mask0_ref,                # per-batch inputs
                      fn_g_ref, fn_b_ref,              # shared final LayerNorm
                      ln1_g_ref, ln1_b_ref,
                      wqkv_ref, bqkv_ref, woh_ref, bo_ref,
                      ln2_g_ref, ln2_b_ref,
                      w1_ref, b1_ref, w2_ref, b2_ref,  # per-layer (leading axis 1)
                      out_norm_ref, out_mask_ref,      # outputs (last 3 layers)
                      x_state, mask_state, lane_num,   # VMEM scratch (carried)
                      *, heads, n_layers):
    i = pl.program_id(1)                               # layer index (sequential)
    L, _ = x_state.shape

    # ---- first layer of this batch tile: load x / mask, compute lane_num
    @pl.when(i == 0)
    def _init():
        x_state[...] = x_ref[0]
        mask_state[...] = mask0_ref[0]
        lane_num[...] = jnp.sum((mask0_ref[0] == 1.0).astype(jnp.float32),
                                axis=-1, keepdims=True)           # [1, 1]

    # ---- get_max_lane: set the first int(lane_num*scale) positions to 1
    #      (matches the reference: it never clears existing 1s)
    @pl.when(i >= n_layers - 3)
    def _grow_mask():
        scale = scales_ref[i]                                      # SMEM scalar
        thresh = (lane_num[...] * scale).astype(jnp.int32)         # trunc == .int()
        pos = jax.lax.broadcasted_iota(jnp.int32, (1, L), 1)
        mask_state[...] = jnp.where(pos < thresh, 1.0, mask_state[...])

    # ---- x = layer(x, mask)
    x_state[...] = _encoder_layer(
        x_state[...], mask_state[...], heads,
        ln1_g_ref[0], ln1_b_ref[0],
        wqkv_ref[0], bqkv_ref[0], woh_ref[0], bo_ref[0],
        ln2_g_ref[0], ln2_b_ref[0],
        w1_ref[0], b1_ref[0], w2_ref[0], b2_ref[0])

    # ---- record [norm(x), mask.clone()] for the last 3 layers
    @pl.when(i >= n_layers - 3)
    def _emit():
        out_norm_ref[0, 0] = _layernorm(x_state[...], fn_g_ref[...], fn_b_ref[...])
        out_mask_ref[0, 0] = mask_state[...]


# ----------------------------------------------------------------------------
# pallas_call wrapper
# ----------------------------------------------------------------------------
def multi_scale_encoder(x, x_mask, params, *, n_layers, heads,
                        scaled_list=(1.0, 0.7, 0.4)):
    """x: [B, L, D] f32, x_mask: [B, 1, L] f32 (0/1).
    Returns (out_norm [3, B, L, D], out_mask [3, B, 1, L])."""
    B, L, D = x.shape
    F = params['w1'].shape[-1]
    N = n_layers
    assert N >= 3, 'multiscale uses the last 3 layers as the output'
    assert D % heads == 0
    dh = D // heads
    scales = jnp.array([1.0] * (N - 3) + list(scaled_list), jnp.float32)

    # Wrapper-time weight fusion / rearrangement (plain JAX, outside the kernel):
    #   wqkv: fused [N, D, 3D] bf16;  woh: Wo split per head -> [N, H, dh, D] bf16.
    wqkv = jnp.concatenate([params['wq'], params['wk'], params['wv']], axis=-1)
    bqkv = jnp.concatenate([params['bq'], params['bk'], params['bv']], axis=-1)
    woh = params['wo'].reshape(N, heads, dh, D)

    def per_layer(shape):
        return pl.BlockSpec((1,) + shape, lambda b, i: (i,) + (0,) * len(shape))

    in_specs = [
        pl.BlockSpec(memory_space=pltpu.MemorySpace.SMEM),       # scales
        pl.BlockSpec((1, L, D), lambda b, i: (b, 0, 0)),         # x (batch tile)
        pl.BlockSpec((1, 1, L), lambda b, i: (b, 0, 0)),         # x_mask
        pl.BlockSpec((1, D), lambda b, i: (0, 0)),               # final norm gamma
        pl.BlockSpec((1, D), lambda b, i: (0, 0)),               # final norm beta
        per_layer((1, D)), per_layer((1, D)),                    # ln1 g/b
        per_layer((D, 3 * D)), per_layer((1, 3 * D)),            # wqkv, bqkv
        per_layer((heads, dh, D)), per_layer((1, D)),            # woh, bo
        per_layer((1, D)), per_layer((1, D)),                    # ln2 g/b
        per_layer((D, F)), per_layer((1, F)),                    # w1, b1
        per_layer((F, D)), per_layer((1, D)),                    # w2, b2
    ]
    out_specs = [
        pl.BlockSpec((1, 1, L, D),
                     lambda b, i: (jnp.maximum(i - (N - 3), 0), b, 0, 0)),
        pl.BlockSpec((1, 1, 1, L),
                     lambda b, i: (jnp.maximum(i - (N - 3), 0), b, 0, 0)),
    ]
    out_shape = [
        jax.ShapeDtypeStruct((3, B, L, D), jnp.float32),
        jax.ShapeDtypeStruct((3, B, 1, L), jnp.float32),
    ]
    grid_spec = pltpu.PrefetchScalarGridSpec(
        num_scalar_prefetch=0, grid=(B, N),
        in_specs=in_specs, out_specs=out_specs,
        scratch_shapes=[pltpu.VMEM((L, D), jnp.float32),    # carried x (per tile)
                        pltpu.VMEM((1, L), jnp.float32),    # carried mask
                        pltpu.VMEM((1, 1), jnp.float32)])   # lane_num

    kernel = functools.partial(multiscale_kernel, heads=heads, n_layers=N)
    out_norm, out_mask = pl.pallas_call(
        kernel,
        grid_spec=grid_spec,
        out_shape=out_shape,
        compiler_params=pltpu.CompilerParams(
            # batch axis -> megacore-parallel (v7x); layer axis is a recurrence.
            dimension_semantics=("parallel", "arbitrary")),
    )(scales, x, x_mask,
      params['fn_g'], params['fn_b'],
      params['ln1_g'], params['ln1_b'],
      wqkv, bqkv, woh, params['bo'],
      params['ln2_g'], params['ln2_b'],
      params['w1'], params['b1'], params['w2'], params['b2'])
    return out_norm, out_mask


# ----------------------------------------------------------------------------
# Deterministic synthetic parameters (stacked over layers; bf16 weight matrices)
# ----------------------------------------------------------------------------
def init_params(key, n, d_model, d_ff, scale=0.05):
    def lin(k, fin, fout):
        kw, kb = jax.random.split(k)
        return (scale * jax.random.normal(kw, (fin, fout), jnp.float32),
                scale * jax.random.normal(kb, (1, fout), jnp.float32))

    names = ('ln1_g', 'ln1_b', 'wq', 'bq', 'wk', 'bk', 'wv', 'bv',
             'wo', 'bo', 'ln2_g', 'ln2_b', 'w1', 'b1', 'w2', 'b2')
    stacks = {name: [] for name in names}
    for lk in jax.random.split(key, n):
        ks = jax.random.split(lk, 6)
        wq, bq = lin(ks[0], d_model, d_model)
        wk, bk = lin(ks[1], d_model, d_model)
        wv, bv = lin(ks[2], d_model, d_model)
        wo, bo = lin(ks[3], d_model, d_model)
        w1, b1 = lin(ks[4], d_model, d_ff)
        w2, b2 = lin(ks[5], d_ff, d_model)
        vals = dict(ln1_g=jnp.ones((1, d_model), jnp.float32),
                    ln1_b=jnp.zeros((1, d_model), jnp.float32),
                    wq=wq, bq=bq, wk=wk, bk=bk, wv=wv, bv=bv, wo=wo, bo=bo,
                    ln2_g=jnp.ones((1, d_model), jnp.float32),
                    ln2_b=jnp.zeros((1, d_model), jnp.float32),
                    w1=w1, b1=b1, w2=w2, b2=b2)
        for name in names:
            stacks[name].append(vals[name])
    params = {name: jnp.stack(v, axis=0) for name, v in stacks.items()}
    # bf16 weight matrices (halves weight DMA, MXU-native); biases/LN stay f32.
    for name in ('wq', 'wk', 'wv', 'wo', 'w1', 'w2'):
        params[name] = params[name].astype(jnp.bfloat16)
    # shared final LayerNorm (self.norm)
    params['fn_g'] = jnp.ones((1, d_model), jnp.float32)
    params['fn_b'] = jnp.zeros((1, d_model), jnp.float32)
    return params


# ----------------------------------------------------------------------------
if __name__ == "__main__":
    B, L, D, H, F, N = 2, 8, 128, 4, 256, 4   # batch, lanes, d_model, heads, d_ff, n

    root = jax.random.PRNGKey(0)
    kx, kp = jax.random.split(root)

    x = jax.random.normal(kx, (B, L, D), jnp.float32)
    # x_mask: [B, 1, L] with the first lane_count[b] lanes valid.
    lane_counts = jnp.array([6, 4], jnp.int32)
    pos = jnp.arange(L)[None, :]
    x_mask = (pos < lane_counts[:, None]).astype(jnp.float32)[:, None, :]

    params = init_params(kp, N, D, F)

    fwd = jax.jit(functools.partial(multi_scale_encoder, n_layers=N, heads=H))
    out_norm, out_mask = fwd(x, x_mask, params)
    jax.block_until_ready((out_norm, out_mask))

    assert out_norm.shape == (3, B, L, D), out_norm.shape
    assert out_mask.shape == (3, B, 1, L), out_mask.shape
    assert bool(jnp.all(jnp.isfinite(out_norm)))
    assert bool(jnp.all(jnp.isfinite(out_mask)))
    print("KERNEL_OK")
</pallas_src>

<mosaic_0001>
module attributes {stable_mosaic.version = 11 : i64} {
  func.func @multiscale_kernel(%arg0: i32, %arg1: i32, %arg2: memref<4xf32, #tpu.memory_space<smem>>, %arg3: memref<1x8x128xf32, #tpu.memory_space<vmem>>, %arg4: memref<1x1x8xf32, #tpu.memory_space<vmem>>, %arg5: memref<1x128xf32, #tpu.memory_space<vmem>>, %arg6: memref<1x128xf32, #tpu.memory_space<vmem>>, %arg7: memref<1x1x128xf32, #tpu.memory_space<vmem>>, %arg8: memref<1x1x128xf32, #tpu.memory_space<vmem>>, %arg9: memref<1x128x384xbf16, #tpu.memory_space<vmem>>, %arg10: memref<1x1x384xf32, #tpu.memory_space<vmem>>, %arg11: memref<1x4x32x128xbf16, #tpu.memory_space<vmem>>, %arg12: memref<1x1x128xf32, #tpu.memory_space<vmem>>, %arg13: memref<1x1x128xf32, #tpu.memory_space<vmem>>, %arg14: memref<1x1x128xf32, #tpu.memory_space<vmem>>, %arg15: memref<1x128x256xbf16, #tpu.memory_space<vmem>>, %arg16: memref<1x1x256xf32, #tpu.memory_space<vmem>>, %arg17: memref<1x256x128xbf16, #tpu.memory_space<vmem>>, %arg18: memref<1x1x128xf32, #tpu.memory_space<vmem>>, %arg19: memref<1x1x8x128xf32, #tpu.memory_space<vmem>>, %arg20: memref<1x1x1x8xf32, #tpu.memory_space<vmem>>, %arg21: memref<8x128xf32, #tpu.memory_space<vmem>>, %arg22: memref<1x8xf32, #tpu.memory_space<vmem>>, %arg23: memref<1x1xf32, #tpu.memory_space<vmem>>) attributes {dimension_semantics = [#tpu.dimension_semantics<parallel>, #tpu.dimension_semantics<arbitrary>], iteration_bounds = array<i64: 2, 4>, scalar_prefetch = 0 : i64, scratch_operands = 3 : i64, tpu.core_type = #tpu.core_type<tc>, window_params = [{transform_indices = @transform_0, window_bounds = array<i64: 4>}, {transform_indices = @transform_1, window_bounds = array<i64: 1, 8, 128>}, {transform_indices = @transform_2, window_bounds = array<i64: 1, 1, 8>}, {pipeline_mode = #tpu.pipeline_mode<synchronous>, transform_indices = @transform_3, window_bounds = array<i64: 1, 128>}, {pipeline_mode = #tpu.pipeline_mode<synchronous>, transform_indices = @transform_4, window_bounds = array<i64: 1, 128>}, {transform_indices = @transform_5, window_bounds = array<i64: 1, 1, 128>}, {transform_indices = @transform_6, window_bounds = array<i64: 1, 1, 128>}, {transform_indices = @transform_7, window_bounds = array<i64: 1, 128, 384>}, {transform_indices = @transform_8, window_bounds = array<i64: 1, 1, 384>}, {transform_indices = @transform_9, window_bounds = array<i64: 1, 4, 32, 128>}, {transform_indices = @transform_10, window_bounds = array<i64: 1, 1, 128>}, {transform_indices = @transform_11, window_bounds = array<i64: 1, 1, 128>}, {transform_indices = @transform_12, window_bounds = array<i64: 1, 1, 128>}, {transform_indices = @transform_13, window_bounds = array<i64: 1, 128, 256>}, {transform_indices = @transform_14, window_bounds = array<i64: 1, 1, 256>}, {transform_indices = @transform_15, window_bounds = array<i64: 1, 256, 128>}, {transform_indices = @transform_16, window_bounds = array<i64: 1, 1, 128>}, {transform_indices = @transform_17, window_bounds = array<i64: 1, 1, 8, 128>}, {transform_indices = @transform_18, window_bounds = array<i64: 1, 1, 1, 8>}]} {
    %c0_i32 = arith.constant 0 : i32
    %0 = arith.cmpi eq, %arg1, %c0_i32 : i32
    %1 = arith.extui %0 : i1 to i32
    %c0_i32_0 = arith.constant 0 : i32
    %2 = arith.cmpi ne, %1, %c0_i32_0 : i32
    scf.if %2 {
      %c0_69 = arith.constant 0 : index
      %c0_70 = arith.constant 0 : index
      %c0_71 = arith.constant 0 : index
      %139 = vector.load %arg3[%c0_69, %c0_70, %c0_71] : memref<1x8x128xf32, #tpu.memory_space<vmem>>, vector<1x8x128xf32>
      %140 = vector.shape_cast %139 : vector<1x8x128xf32> to vector<8x128xf32>
      %c0_72 = arith.constant 0 : index
      %c0_73 = arith.constant 0 : index
      %141 = vector.load %arg21[%c0_72, %c0_73] : memref<8x128xf32, #tpu.memory_space<vmem>>, vector<8x128xf32>
      tpu.vector_store %arg21[%c0_72, %c0_73], %140 {strides = array<i32>} : memref<8x128xf32, #tpu.memory_space<vmem>>, vector<8x128xf32>,
      %c0_74 = arith.constant 0 : index
      %c0_75 = arith.constant 0 : index
      %c0_76 = arith.constant 0 : index
      %142 = vector.load %arg4[%c0_74, %c0_75, %c0_76] : memref<1x1x8xf32, #tpu.memory_space<vmem>>, vector<1x1x8xf32>
      %143 = vector.shape_cast %142 : vector<1x1x8xf32> to vector<1x8xf32>
      %c0_77 = arith.constant 0 : index
      %c0_78 = arith.constant 0 : index
      %144 = vector.load %arg22[%c0_77, %c0_78] : memref<1x8xf32, #tpu.memory_space<vmem>>, vector<1x8xf32>
      tpu.vector_store %arg22[%c0_77, %c0_78], %143 {strides = array<i32>} : memref<1x8xf32, #tpu.memory_space<vmem>>, vector<1x8xf32>,
      %c0_79 = arith.constant 0 : index
      %c0_80 = arith.constant 0 : index
      %c0_81 = arith.constant 0 : index
      %145 = vector.load %arg4[%c0_79, %c0_80, %c0_81] : memref<1x1x8xf32, #tpu.memory_space<vmem>>, vector<1x1x8xf32>
      %146 = vector.shape_cast %145 : vector<1x1x8xf32> to vector<1x8xf32>
      %cst_82 = arith.constant 1.000000e+00 : f32
      %147 = vector.broadcast %cst_82 : f32 to vector<1x8xf32>
      %148 = arith.cmpf oeq, %146, %147 : vector<1x8xf32>
      %149 = arith.extui %148 : vector<1x8xi1> to vector<1x8xi32>
      %150 = arith.sitofp %149 : vector<1x8xi32> to vector<1x8xf32>
      %cst_83 = arith.constant dense<0.000000e+00> : vector<1xf32>
      %151 = vector.multi_reduction <add>, %150, %cst_83 [1] : vector<1x8xf32> to vector<1xf32>
      %152 = vector.shape_cast %151 : vector<1xf32> to vector<1x1xf32>
      %c0_84 = arith.constant 0 : index
      %c0_85 = arith.constant 0 : index
      %153 = vector.load %arg23[%c0_84, %c0_85] : memref<1x1xf32, #tpu.memory_space<vmem>>, vector<1x1xf32>
      tpu.vector_store %arg23[%c0_84, %c0_85], %152 {strides = array<i32>} : memref<1x1xf32, #tpu.memory_space<vmem>>, vector<1x1xf32>,
    } else {
    }
    %c1_i32 = arith.constant 1 : i32
    %3 = arith.cmpi sge, %arg1, %c1_i32 : i32
    %4 = arith.extui %3 : i1 to i32
    %c0_i32_1 = arith.constant 0 : i32
    %5 = arith.cmpi ne, %4, %c0_i32_1 : i32
    scf.if %5 {
      %139 = arith.index_cast %arg1 : i32 to index
      %140 = memref.load %arg2[%139] : memref<4xf32, #tpu.memory_space<smem>>
      %c0_69 = arith.constant 0 : index
      %c0_70 = arith.constant 0 : index
      %141 = vector.load %arg23[%c0_69, %c0_70] : memref<1x1xf32, #tpu.memory_space<vmem>>, vector<1x1xf32>
      %142 = vector.broadcast %140 : f32 to vector<1x1xf32>
      %143 = arith.mulf %141, %142 : vector<1x1xf32>
      %144 = arith.fptosi %143 : vector<1x1xf32> to vector<1x1xi32>
      %145 = tpu.iota {dimensions = array<i32: 1>} : vector<1x8xi32>
      %146 = vector.broadcast %144 : vector<1x1xi32> to vector<1x8xi32>
      %147 = arith.cmpi slt, %145, %146 : vector<1x8xi32>
      %c0_71 = arith.constant 0 : index
      %c0_72 = arith.constant 0 : index
      %148 = vector.load %arg22[%c0_71, %c0_72] : memref<1x8xf32, #tpu.memory_space<vmem>>, vector<1x8xf32>
      %cst_73 = arith.constant 1.000000e+00 : f32
      %149 = vector.broadcast %cst_73 : f32 to vector<1x8xf32>
      %150 = arith.select %147, %149, %148 : vector<1x8xi1>, vector<1x8xf32>
      %c0_74 = arith.constant 0 : index
      %c0_75 = arith.constant 0 : index
      %151 = vector.load %arg22[%c0_74, %c0_75] : memref<1x8xf32, #tpu.memory_space<vmem>>, vector<1x8xf32>
      tpu.vector_store %arg22[%c0_74, %c0_75], %150 {strides = array<i32>} : memref<1x8xf32, #tpu.memory_space<vmem>>, vector<1x8xf32>,
    } else {
    }
    %c0 = arith.constant 0 : index
    %c0_2 = arith.constant 0 : index
    %6 = vector.load %arg21[%c0, %c0_2] : memref<8x128xf32, #tpu.memory_space<vmem>>, vector<8x128xf32>
    %c0_3 = arith.constant 0 : index
    %c0_4 = arith.constant 0 : index
    %7 = vector.load %arg22[%c0_3, %c0_4] : memref<1x8xf32, #tpu.memory_space<vmem>>, vector<1x8xf32>
    %c0_5 = arith.constant 0 : index
    %c0_6 = arith.constant 0 : index
    %c0_7 = arith.constant 0 : index
    %8 = vector.load %arg7[%c0_5, %c0_6, %c0_7] : memref<1x1x128xf32, #tpu.memory_space<vmem>>, vector<1x1x128xf32>
    %9 = vector.shape_cast %8 : vector<1x1x128xf32> to vector<1x128xf32>
    %c0_8 = arith.constant 0 : index
    %c0_9 = arith.constant 0 : index
    %c0_10 = arith.constant 0 : index
    %10 = vector.load %arg8[%c0_8, %c0_9, %c0_10] : memref<1x1x128xf32, #tpu.memory_space<vmem>>, vector<1x1x128xf32>
    %11 = vector.shape_cast %10 : vector<1x1x128xf32> to vector<1x128xf32>
    %c0_11 = arith.constant 0 : index
    %c0_12 = arith.constant 0 : index
    %c0_13 = arith.constant 0 : index
    %12 = vector.load %arg9[%c0_11, %c0_12, %c0_13] : memref<1x128x384xbf16, #tpu.memory_space<vmem>>, vector<1x128x384xbf16>
    %13 = vector.shape_cast %12 : vector<1x128x384xbf16> to vector<128x384xbf16>
    %c0_14 = arith.constant 0 : index
    %c0_15 = arith.constant 0 : index
    %c0_16 = arith.constant 0 : index
    %14 = vector.load %arg10[%c0_14, %c0_15, %c0_16] : memref<1x1x384xf32, #tpu.memory_space<vmem>>, vector<1x1x384xf32>
    %15 = vector.shape_cast %14 : vector<1x1x384xf32> to vector<1x384xf32>
    %c0_17 = arith.constant 0 : index
    %c0_18 = arith.constant 0 : index
    %c0_19 = arith.constant 0 : index
    %c0_20 = arith.constant 0 : index
    %16 = vector.load %arg11[%c0_17, %c0_18, %c0_19, %c0_20] : memref<1x4x32x128xbf16, #tpu.memory_space<vmem>>, vector<1x4x32x128xbf16>
    %17 = vector.shape_cast %16 : vector<1x4x32x128xbf16> to vector<4x32x128xbf16>
    %c0_21 = arith.constant 0 : index
    %c0_22 = arith.constant 0 : index
    %c0_23 = arith.constant 0 : index
    %18 = vector.load %arg12[%c0_21, %c0_22, %c0_23] : memref<1x1x128xf32, #tpu.memory_space<vmem>>, vector<1x1x128xf32>
    %19 = vector.shape_cast %18 : vector<1x1x128xf32> to vector<1x128xf32>
    %c0_24 = arith.constant 0 : index
    %c0_25 = arith.constant 0 : index
    %c0_26 = arith.constant 0 : index
    %20 = vector.load %arg13[%c0_24, %c0_25, %c0_26] : memref<1x1x128xf32, #tpu.memory_space<vmem>>, vector<1x1x128xf32>
    %21 = vector.shape_cast %20 : vector<1x1x128xf32> to vector<1x128xf32>
    %c0_27 = arith.constant 0 : index
    %c0_28 = arith.constant 0 : index
    %c0_29 = arith.constant 0 : index
    %22 = vector.load %arg14[%c0_27, %c0_28, %c0_29] : memref<1x1x128xf32, #tpu.memory_space<vmem>>, vector<1x1x128xf32>
    %23 = vector.shape_cast %22 : vector<1x1x128xf32> to vector<1x128xf32>
    %c0_30 = arith.constant 0 : index
    %c0_31 = arith.constant 0 : index
    %c0_32 = arith.constant 0 : index
    %24 = vector.load %arg15[%c0_30, %c0_31, %c0_32] : memref<1x128x256xbf16, #tpu.memory_space<vmem>>, vector<1x128x256xbf16>
    %25 = vector.shape_cast %24 : vector<1x128x256xbf16> to vector<128x256xbf16>
    %c0_33 = arith.constant 0 : index
    %c0_34 = arith.constant 0 : index
    %c0_35 = arith.constant 0 : index
    %26 = vector.load %arg16[%c0_33, %c0_34, %c0_35] : memref<1x1x256xf32, #tpu.memory_space<vmem>>, vector<1x1x256xf32>
    %27 = vector.shape_cast %26 : vector<1x1x256xf32> to vector<1x256xf32>
    %c0_36 = arith.constant 0 : index
    %c0_37 = arith.constant 0 : index
    %c0_38 = arith.constant 0 : index
    %28 = vector.load %arg17[%c0_36, %c0_37, %c0_38] : memref<1x256x128xbf16, #tpu.memory_space<vmem>>, vector<1x256x128xbf16>
    %29 = vector.shape_cast %28 : vector<1x256x128xbf16> to vector<256x128xbf16>
    %c0_39 = arith.constant 0 : index
    %c0_40 = arith.constant 0 : index
    %c0_41 = arith.constant 0 : index
    %30 = vector.load %arg18[%c0_39, %c0_40, %c0_41] : memref<1x1x128xf32, #tpu.memory_space<vmem>>, vector<1x1x128xf32>
    %31 = vector.shape_cast %30 : vector<1x1x128xf32> to vector<1x128xf32>
    %cst = arith.constant dense<0.000000e+00> : vector<8xf32>
    %32 = vector.multi_reduction <add>, %6, %cst [1] : vector<8x128xf32> to vector<8xf32>
    %33 = vector.shape_cast %32 : vector<8xf32> to vector<8x1xf32>
    %cst_42 = arith.constant 1.280000e+02 : f32
    %34 = vector.broadcast %cst_42 : f32 to vector<8x1xf32>
    %35 = arith.divf %33, %34 : vector<8x1xf32>
    %36 = vector.broadcast %35 : vector<8x1xf32> to vector<8x128xf32>
    %37 = arith.subf %6, %36 : vector<8x128xf32>
    %38 = vector.broadcast %35 : vector<8x1xf32> to vector<8x128xf32>
    %39 = arith.subf %6, %38 : vector<8x128xf32>
    %40 = arith.mulf %37, %39 : vector<8x128xf32>
    %cst_43 = arith.constant dense<0.000000e+00> : vector<8xf32>
    %41 = vector.multi_reduction <add>, %40, %cst_43 [1] : vector<8x128xf32> to vector<8xf32>
    %42 = vector.shape_cast %41 : vector<8xf32> to vector<8x1xf32>
    %cst_44 = arith.constant 1.280000e+02 : f32
    %43 = vector.broadcast %cst_44 : f32 to vector<8x1xf32>
    %44 = arith.divf %42, %43 : vector<8x1xf32>
    %45 = vector.broadcast %35 : vector<8x1xf32> to vector<8x128xf32>
    %46 = arith.subf %6, %45 : vector<8x128xf32>
    %cst_45 = arith.constant 9.99999974E-6 : f32
    %47 = vector.broadcast %cst_45 : f32 to vector<8x1xf32>
    %48 = arith.addf %44, %47 : vector<8x1xf32>
    %49 = math.rsqrt %48 : vector<8x1xf32>
    %50 = vector.broadcast %49 : vector<8x1xf32> to vector<8x128xf32>
    %51 = arith.mulf %46, %50 : vector<8x128xf32>
    %52 = vector.broadcast %9 : vector<1x128xf32> to vector<8x128xf32>
    %53 = arith.mulf %51, %52 : vector<8x128xf32>
    %54 = vector.broadcast %11 : vector<1x128xf32> to vector<8x128xf32>
    %55 = arith.addf %53, %54 : vector<8x128xf32>
    %56 = arith.truncf %55 : vector<8x128xf32> to vector<8x128xbf16>
    %cst_46 = arith.constant dense<0.000000e+00> : vector<8x384xf32>
    %57 = tpu.matmul %56, %13, %cst_46 {dimension_numbers = #tpu.dot_dimension_numbers<[1], [0], [0], [1], [0, 0, 1, 1], [], []>} : vector<8x128xbf16>, vector<128x384xbf16>, vector<8x384xf32> -> vector<8x384xf32>
    %58 = vector.broadcast %15 : vector<1x384xf32> to vector<8x384xf32>
    %59 = arith.addf %57, %58 : vector<8x384xf32>
    %60 = tpu.transpose %59, [1, 0] : vector<8x384xf32> -> vector<384x8xf32>
    %61 = vector.extract_strided_slice %60 {offsets = [0, 0], sizes = [128, 8], strides = [1, 1]} : vector<384x8xf32> to vector<128x8xf32>
    %62 = vector.shape_cast %61 : vector<128x8xf32> to vector<4x32x8xf32>
    %63 = tpu.transpose %62, [0, 2, 1] : vector<4x32x8xf32> -> vector<4x8x32xf32>
    %64 = arith.truncf %63 : vector<4x8x32xf32> to vector<4x8x32xbf16>
    %65 = vector.extract_strided_slice %60 {offsets = [128, 0], sizes = [128, 8], strides = [1, 1]} : vector<384x8xf32> to vector<128x8xf32>
    %66 = vector.shape_cast %65 : vector<128x8xf32> to vector<4x32x8xf32>
    %67 = arith.truncf %66 : vector<4x32x8xf32> to vector<4x32x8xbf16>
    %68 = vector.extract_strided_slice %60 {offsets = [256, 0], sizes = [128, 8], strides = [1, 1]} : vector<384x8xf32> to vector<128x8xf32>
    %69 = vector.shape_cast %68 : vector<128x8xf32> to vector<4x32x8xf32>
    %70 = arith.truncf %69 : vector<4x32x8xf32> to vector<4x32x8xbf16>
    %cst_47 = arith.constant 0.000000e+00 : f32
    %71 = vector.broadcast %cst_47 : f32 to vector<1x8xf32>
    %72 = arith.cmpf oeq, %7, %71 : vector<1x8xf32>
    %cst_48 = arith.constant -1.000000e+09 : f32
    %cst_49 = arith.constant 0.000000e+00 : f32
    %73 = vector.broadcast %cst_48 : f32 to vector<1x8xf32>
    %74 = vector.broadcast %cst_49 : f32 to vector<1x8xf32>
    %75 = arith.select %72, %73, %74 : vector<1x8xi1>, vector<1x8xf32>
    "tpu.trace_start"() <{level = 10 : i32, message = "hqd,hdk->hqk"}> : () -> ()
    %cst_50 = arith.constant dense<0.000000e+00> : vector<4x8x8xf32>
    %76 = tpu.matmul %64, %67, %cst_50 {dimension_numbers = #tpu.dot_dimension_numbers<[2], [1], [1], [2], [0, 0, 0, 1, 1, 2], [0], [0]>} : vector<4x8x32xbf16>, vector<4x32x8xbf16>, vector<4x8x8xf32> -> vector<4x8x8xf32>
    "tpu.trace_stop"() : () -> ()
    %cst_51 = arith.constant 0.176776692 : f32
    %77 = vector.broadcast %cst_51 : f32 to vector<4x8x8xf32>
    %78 = arith.mulf %76, %77 : vector<4x8x8xf32>
    %79 = vector.shape_cast %75 : vector<1x8xf32> to vector<1x1x8xf32>
    %80 = vector.broadcast %79 : vector<1x1x8xf32> to vector<4x8x8xf32>
    %81 = arith.addf %78, %80 : vector<4x8x8xf32>
    %cst_52 = arith.constant dense<0xFF800000> : vector<4x8xf32>
    %82 = vector.multi_reduction <maximumf>, %81, %cst_52 [2] : vector<4x8x8xf32> to vector<4x8xf32>
    %83 = vector.shape_cast %82 : vector<4x8xf32> to vector<4x8x1xf32>
    %84 = vector.broadcast %83 : vector<4x8x1xf32> to vector<4x8x8xf32>
    %85 = arith.subf %81, %84 : vector<4x8x8xf32>
    %86 = math.exp %85 : vector<4x8x8xf32>
    %cst_53 = arith.constant dense<0.000000e+00> : vector<4x8xf32>
    %87 = vector.multi_reduction <add>, %86, %cst_53 [2] : vector<4x8x8xf32> to vector<4x8xf32>
    %88 = vector.shape_cast %87 : vector<4x8xf32> to vector<4x8x1xf32>
    %89 = tpu.reciprocal %88 {approx = true} : vector<4x8x1xf32> -> vector<4x8x1xf32>
    %90 = vector.broadcast %89 : vector<4x8x1xf32> to vector<4x8x8xf32>
    %91 = arith.mulf %86, %90 : vector<4x8x8xf32>
    %92 = arith.truncf %91 : vector<4x8x8xf32> to vector<4x8x8xbf16>
    "tpu.trace_start"() <{level = 10 : i32, message = "hqk,hdk->hqd"}> : () -> ()
    %cst_54 = arith.constant dense<0.000000e+00> : vector<4x8x32xf32>
    %93 = tpu.matmul %92, %70, %cst_54 {dimension_numbers = #tpu.dot_dimension_numbers<[2], [2], [1], [1], [0, 0, 0, 1, 1, 1], [0], [0]>} : vector<4x8x8xbf16>, vector<4x32x8xbf16>, vector<4x8x32xf32> -> vector<4x8x32xf32>
    "tpu.trace_stop"() : () -> ()
    %94 = arith.truncf %93 : vector<4x8x32xf32> to vector<4x8x32xbf16>
    "tpu.trace_start"() <{level = 10 : i32, message = "hqd,hde->hqe"}> : () -> ()
    %cst_55 = arith.constant dense<0.000000e+00> : vector<4x8x128xf32>
    %95 = tpu.matmul %94, %17, %cst_55 {dimension_numbers = #tpu.dot_dimension_numbers<[2], [1], [1], [2], [0, 0, 0, 1, 1, 2], [0], [0]>} : vector<4x8x32xbf16>, vector<4x32x128xbf16>, vector<4x8x128xf32> -> vector<4x8x128xf32>
    "tpu.trace_stop"() : () -> ()
    %cst_56 = arith.constant dense<0.000000e+00> : vector<8x128xf32>
    %96 = vector.multi_reduction <add>, %95, %cst_56 [0] : vector<4x8x128xf32> to vector<8x128xf32>
    %97 = vector.broadcast %19 : vector<1x128xf32> to vector<8x128xf32>
    %98 = arith.addf %96, %97 : vector<8x128xf32>
    %99 = arith.addf %6, %98 : vector<8x128xf32>
    %cst_57 = arith.constant dense<0.000000e+00> : vector<8xf32>
    %100 = vector.multi_reduction <add>, %99, %cst_57 [1] : vector<8x128xf32> to vector<8xf32>
    %101 = vector.shape_cast %100 : vector<8xf32> to vector<8x1xf32>
    %cst_58 = arith.constant 1.280000e+02 : f32
    %102 = vector.broadcast %cst_58 : f32 to vector<8x1xf32>
    %103 = arith.divf %101, %102 : vector<8x1xf32>
    %104 = vector.broadcast %103 : vector<8x1xf32> to vector<8x128xf32>
    %105 = arith.subf %99, %104 : vector<8x128xf32>
    %106 = vector.broadcast %103 : vector<8x1xf32> to vector<8x128xf32>
    %107 = arith.subf %99, %106 : vector<8x128xf32>
    %108 = arith.mulf %105, %107 : vector<8x128xf32>
    %cst_59 = arith.constant dense<0.000000e+00> : vector<8xf32>
    %109 = vector.multi_reduction <add>, %108, %cst_59 [1] : vector<8x128xf32> to vector<8xf32>
    %110 = vector.shape_cast %109 : vector<8xf32> to vector<8x1xf32>
    %cst_60 = arith.constant 1.280000e+02 : f32
    %111 = vector.broadcast %cst_60 : f32 to vector<8x1xf32>
    %112 = arith.divf %110, %111 : vector<8x1xf32>
    %113 = vector.broadcast %103 : vector<8x1xf32> to vector<8x128xf32>
    %114 = arith.subf %99, %113 : vector<8x128xf32>
    %cst_61 = arith.constant 9.99999974E-6 : f32
    %115 = vector.broadcast %cst_61 : f32 to vector<8x1xf32>
    %116 = arith.addf %112, %115 : vector<8x1xf32>
    %117 = math.rsqrt %116 : vector<8x1xf32>
    %118 = vector.broadcast %117 : vector<8x1xf32> to vector<8x128xf32>
    %119 = arith.mulf %114, %118 : vector<8x128xf32>
    %120 = vector.broadcast %21 : vector<1x128xf32> to vector<8x128xf32>
    %121 = arith.mulf %119, %120 : vector<8x128xf32>
    %122 = vector.broadcast %23 : vector<1x128xf32> to vector<8x128xf32>
    %123 = arith.addf %121, %122 : vector<8x128xf32>
    %124 = arith.truncf %123 : vector<8x128xf32> to vector<8x128xbf16>
    %cst_62 = arith.constant dense<0.000000e+00> : vector<8x256xf32>
    %125 = tpu.matmul %124, %25, %cst_62 {dimension_numbers = #tpu.dot_dimension_numbers<[1], [0], [0], [1], [0, 0, 1, 1], [], []>} : vector<8x128xbf16>, vector<128x256xbf16>, vector<8x256xf32> -> vector<8x256xf32>
    %126 = vector.broadcast %27 : vector<1x256xf32> to vector<8x256xf32>
    %127 = arith.addf %125, %126 : vector<8x256xf32>
    %cst_63 = arith.constant 0.000000e+00 : f32
    %128 = vector.broadcast %cst_63 : f32 to vector<8x256xf32>
    %129 = arith.maximumf %127, %128 : vector<8x256xf32>
    %130 = arith.truncf %129 : vector<8x256xf32> to vector<8x256xbf16>
    %cst_64 = arith.constant dense<0.000000e+00> : vector<8x128xf32>
    %131 = tpu.matmul %130, %29, %cst_64 {dimension_numbers = #tpu.dot_dimension_numbers<[1], [0], [0], [1], [0, 0, 1, 1], [], []>} : vector<8x256xbf16>, vector<256x128xbf16>, vector<8x128xf32> -> vector<8x128xf32>
    %132 = vector.broadcast %31 : vector<1x128xf32> to vector<8x128xf32>
    %133 = arith.addf %131, %132 : vector<8x128xf32>
    %134 = arith.addf %99, %133 : vector<8x128xf32>
    %c0_65 = arith.constant 0 : index
    %c0_66 = arith.constant 0 : index
    %135 = vector.load %arg21[%c0_65, %c0_66] : memref<8x128xf32, #tpu.memory_space<vmem>>, vector<8x128xf32>
    tpu.vector_store %arg21[%c0_65, %c0_66], %134 {strides = array<i32>} : memref<8x128xf32, #tpu.memory_space<vmem>>, vector<8x128xf32>,
    %c1_i32_67 = arith.constant 1 : i32
    %136 = arith.cmpi sge, %arg1, %c1_i32_67 : i32
    %137 = arith.extui %136 : i1 to i32
    %c0_i32_68 = arith.constant 0 : i32
    %138 = arith.cmpi ne, %137, %c0_i32_68 : i32
    scf.if %138 {
      %c0_69 = arith.constant 0 : index
      %c0_70 = arith.constant 0 : index
      %139 = vector.load %arg21[%c0_69, %c0_70] : memref<8x128xf32, #tpu.memory_space<vmem>>, vector<8x128xf32>
      %c0_71 = arith.constant 0 : index
      %c0_72 = arith.constant 0 : index
      %140 = vector.load %arg5[%c0_71, %c0_72] : memref<1x128xf32, #tpu.memory_space<vmem>>, vector<1x128xf32>
      %c0_73 = arith.constant 0 : index
      %c0_74 = arith.constant 0 : index
      %141 = vector.load %arg6[%c0_73, %c0_74] : memref<1x128xf32, #tpu.memory_space<vmem>>, vector<1x128xf32>
      %cst_75 = arith.constant dense<0.000000e+00> : vector<8xf32>
      %142 = vector.multi_reduction <add>, %139, %cst_75 [1] : vector<8x128xf32> to vector<8xf32>
      %143 = vector.shape_cast %142 : vector<8xf32> to vector<8x1xf32>
      %cst_76 = arith.constant 1.280000e+02 : f32
      %144 = vector.broadcast %cst_76 : f32 to vector<8x1xf32>
      %145 = arith.divf %143, %144 : vector<8x1xf32>
      %146 = vector.broadcast %145 : vector<8x1xf32> to vector<8x128xf32>
      %147 = arith.subf %139, %146 : vector<8x128xf32>
      %148 = vector.broadcast %145 : vector<8x1xf32> to vector<8x128xf32>
      %149 = arith.subf %139, %148 : vector<8x128xf32>
      %150 = arith.mulf %147, %149 : vector<8x128xf32>
      %cst_77 = arith.constant dense<0.000000e+00> : vector<8xf32>
      %151 = vector.multi_reduction <add>, %150, %cst_77 [1] : vector<8x128xf32> to vector<8xf32>
      %152 = vector.shape_cast %151 : vector<8xf32> to vector<8x1xf32>
      %cst_78 = arith.constant 1.280000e+02 : f32
      %153 = vector.broadcast %cst_78 : f32 to vector<8x1xf32>
      %154 = arith.divf %152, %153 : vector<8x1xf32>
      %155 = vector.broadcast %145 : vector<8x1xf32> to vector<8x128xf32>
      %156 = arith.subf %139, %155 : vector<8x128xf32>
      %cst_79 = arith.constant 9.99999974E-6 : f32
      %157 = vector.broadcast %cst_79 : f32 to vector<8x1xf32>
      %158 = arith.addf %154, %157 : vector<8x1xf32>
      %159 = math.rsqrt %158 : vector<8x1xf32>
      %160 = vector.broadcast %159 : vector<8x1xf32> to vector<8x128xf32>
      %161 = arith.mulf %156, %160 : vector<8x128xf32>
      %162 = vector.broadcast %140 : vector<1x128xf32> to vector<8x128xf32>
      %163 = arith.mulf %161, %162 : vector<8x128xf32>
      %164 = vector.broadcast %141 : vector<1x128xf32> to vector<8x128xf32>
      %165 = arith.addf %163, %164 : vector<8x128xf32>
      %c0_80 = arith.constant 0 : index
      %c0_81 = arith.constant 0 : index
      %c0_82 = arith.constant 0 : index
      %c0_83 = arith.constant 0 : index
      %166 = vector.load %arg19[%c0_80, %c0_81, %c0_82, %c0_83] : memref<1x1x8x128xf32, #tpu.memory_space<vmem>>, vector<1x1x8x128xf32>
      %167 = vector.shape_cast %166 : vector<1x1x8x128xf32> to vector<8x128xf32>
      %168 = vector.shape_cast %165 : vector<8x128xf32> to vector<1x1x8x128xf32>
      tpu.vector_store %arg19[%c0_80, %c0_81, %c0_82, %c0_83], %168 {strides = array<i32>} : memref<1x1x8x128xf32, #tpu.memory_space<vmem>>, vector<1x1x8x128xf32>,
      %c0_84 = arith.constant 0 : index
      %c0_85 = arith.constant 0 : index
      %169 = vector.load %arg22[%c0_84, %c0_85] : memref<1x8xf32, #tpu.memory_space<vmem>>, vector<1x8xf32>
      %c0_86 = arith.constant 0 : index
      %c0_87 = arith.constant 0 : index
      %c0_88 = arith.constant 0 : index
      %c0_89 = arith.constant 0 : index
      %170 = vector.load %arg20[%c0_86, %c0_87, %c0_88, %c0_89] : memref<1x1x1x8xf32, #tpu.memory_space<vmem>>, vector<1x1x1x8xf32>
      %171 = vector.shape_cast %170 : vector<1x1x1x8xf32> to vector<1x8xf32>
      %172 = vector.shape_cast %169 : vector<1x8xf32> to vector<1x1x1x8xf32>
      tpu.vector_store %arg20[%c0_86, %c0_87, %c0_88, %c0_89], %172 {strides = array<i32>} : memref<1x1x1x8xf32, #tpu.memory_space<vmem>>, vector<1x1x1x8xf32>,
    } else {
    }
    return
  }
  func.func @transform_0(%arg0: i32, %arg1: i32) -> i32 {
    %c0_i32 = arith.constant 0 : i32
    %c0_i32_0 = arith.constant 0 : i32
    return %c0_i32 : i32
  }
  func.func @transform_1(%arg0: i32, %arg1: i32) -> (i32, i32, i32) {
    %c0_i32 = arith.constant 0 : i32
    %c0_i32_0 = arith.constant 0 : i32
    %c0_i32_1 = arith.constant 0 : i32
    return %arg0, %c0_i32, %c0_i32_0 : i32, i32, i32
  }
  func.func @transform_2(%arg0: i32, %arg1: i32) -> (i32, i32, i32) {
    %c0_i32 = arith.constant 0 : i32
    %c0_i32_0 = arith.constant 0 : i32
    %c0_i32_1 = arith.constant 0 : i32
    return %arg0, %c0_i32, %c0_i32_0 : i32, i32, i32
  }
  func.func @transform_3(%arg0: i32, %arg1: i32) -> (i32, i32) {
    %c0_i32 = arith.constant 0 : i32
    %c0_i32_0 = arith.constant 0 : i32
    %c0_i32_1 = arith.constant 0 : i32
    return %c0_i32, %c0_i32_0 : i32, i32
  }
  func.func @transform_4(%arg0: i32, %arg1: i32) -> (i32, i32) {
    %c0_i32 = arith.constant 0 : i32
    %c0_i32_0 = arith.constant 0 : i32
    %c0_i32_1 = arith.constant 0 : i32
    return %c0_i32, %c0_i32_0 : i32, i32
  }
  func.func @transform_5(%arg0: i32, %arg1: i32) -> (i32, i32, i32) {
    %c0_i32 = arith.constant 0 : i32
    %c0_i32_0 = arith.constant 0 : i32
    %c0_i32_1 = arith.constant 0 : i32
    return %arg1, %c0_i32, %c0_i32_0 : i32, i32, i32
  }
  func.func @transform_6(%arg0: i32, %arg1: i32) -> (i32, i32, i32) {
    %c0_i32 = arith.constant 0 : i32
    %c0_i32_0 = arith.constant 0 : i32
    %c0_i32_1 = arith.constant 0 : i32
    return %arg1, %c0_i32, %c0_i32_0 : i32, i32, i32
  }
  func.func @transform_7(%arg0: i32, %arg1: i32) -> (i32, i32, i32) {
    %c0_i32 = arith.constant 0 : i32
    %c0_i32_0 = arith.constant 0 : i32
    %c0_i32_1 = arith.constant 0 : i32
    return %arg1, %c0_i32, %c0_i32_0 : i32, i32, i32
  }
  func.func @transform_8(%arg0: i32, %arg1: i32) -> (i32, i32, i32) {
    %c0_i32 = arith.constant 0 : i32
    %c0_i32_0 = arith.constant 0 : i32
    %c0_i32_1 = arith.constant 0 : i32
    return %arg1, %c0_i32, %c0_i32_0 : i32, i32, i32
  }
  func.func @transform_9(%arg0: i32, %arg1: i32) -> (i32, i32, i32, i32) {
    %c0_i32 = arith.constant 0 : i32
    %c0_i32_0 = arith.constant 0 : i32
    %c0_i32_1 = arith.constant 0 : i32
    %c0_i32_2 = arith.constant 0 : i32
    return %arg1, %c0_i32, %c0_i32_0, %c0_i32_1 : i32, i32, i32, i32
  }
  func.func @transform_10(%arg0: i32, %arg1: i32) -> (i32, i32, i32) {
    %c0_i32 = arith.constant 0 : i32
    %c0_i32_0 = arith.constant 0 : i32
    %c0_i32_1 = arith.constant 0 : i32
    return %arg1, %c0_i32, %c0_i32_0 : i32, i32, i32
  }
  func.func @transform_11(%arg0: i32, %arg1: i32) -> (i32, i32, i32) {
    %c0_i32 = arith.constant 0 : i32
    %c0_i32_0 = arith.constant 0 : i32
    %c0_i32_1 = arith.constant 0 : i32
    return %arg1, %c0_i32, %c0_i32_0 : i32, i32, i32
  }
  func.func @transform_12(%arg0: i32, %arg1: i32) -> (i32, i32, i32) {
    %c0_i32 = arith.constant 0 : i32
    %c0_i32_0 = arith.constant 0 : i32
    %c0_i32_1 = arith.constant 0 : i32
    return %arg1, %c0_i32, %c0_i32_0 : i32, i32, i32
  }
  func.func @transform_13(%arg0: i32, %arg1: i32) -> (i32, i32, i32) {
    %c0_i32 = arith.constant 0 : i32
    %c0_i32_0 = arith.constant 0 : i32
    %c0_i32_1 = arith.constant 0 : i32
    return %arg1, %c0_i32, %c0_i32_0 : i32, i32, i32
  }
  func.func @transform_14(%arg0: i32, %arg1: i32) -> (i32, i32, i32) {
    %c0_i32 = arith.constant 0 : i32
    %c0_i32_0 = arith.constant 0 : i32
    %c0_i32_1 = arith.constant 0 : i32
    return %arg1, %c0_i32, %c0_i32_0 : i32, i32, i32
  }
  func.func @transform_15(%arg0: i32, %arg1: i32) -> (i32, i32, i32) {
    %c0_i32 = arith.constant 0 : i32
    %c0_i32_0 = arith.constant 0 : i32
    %c0_i32_1 = arith.constant 0 : i32
    return %arg1, %c0_i32, %c0_i32_0 : i32, i32, i32
  }
  func.func @transform_16(%arg0: i32, %arg1: i32) -> (i32, i32, i32) {
    %c0_i32 = arith.constant 0 : i32
    %c0_i32_0 = arith.constant 0 : i32
    %c0_i32_1 = arith.constant 0 : i32
    return %arg1, %c0_i32, %c0_i32_0 : i32, i32, i32
  }
  func.func @transform_17(%arg0: i32, %arg1: i32) -> (i32, i32, i32, i32) {
    %c1_i32 = arith.constant 1 : i32
    %0 = arith.subi %arg1, %c1_i32 : i32
    %c0_i32 = arith.constant 0 : i32
    %1 = arith.maxsi %0, %c0_i32 : i32
    %c0_i32_0 = arith.constant 0 : i32
    %c0_i32_1 = arith.constant 0 : i32
    %c0_i32_2 = arith.constant 0 : i32
    return %1, %arg0, %c0_i32_0, %c0_i32_1 : i32, i32, i32, i32
  }
  func.func @transform_18(%arg0: i32, %arg1: i32) -> (i32, i32, i32, i32) {
    %c1_i32 = arith.constant 1 : i32
    %0 = arith.subi %arg1, %c1_i32 : i32
    %c0_i32 = arith.constant 0 : i32
    %1 = arith.maxsi %0, %c0_i32 : i32
    %c0_i32_0 = arith.constant 0 : i32
    %c0_i32_1 = arith.constant 0 : i32
    %c0_i32_2 = arith.constant 0 : i32
    return %1, %arg0, %c0_i32_0, %c0_i32_1 : i32, i32, i32, i32
  }
}

</mosaic_0001>

<llo_original>
// kernel: multi_scale_encoder.1
$region0: #{multi_scale_encoder.1}
  #allocation0 [shape = 'u32[]', space=smem, size = 0x4, offset = 0x4, fixed_abs, tag = 'smem constant byte address 0x4 - core index']
  #allocation1 [shape = 'u32[144,128]{1,0:T(1,128)}', space=vmem, size = 0x12000, scoped, tag = 'internal scratch']
  #allocation2 [shape = 'f32[8,128]{1,0:T(8,128)}', space=vmem, size = 0x1000, scoped, tag = 'scratch operand']
  #allocation3 [shape = 'f32[1,8]{1,0:T(1,128)}', space=vmem, size = 0x200, scoped, tag = 'scratch operand']
  #allocation4 [shape = 'f32[1,1]{1,0:T(1,128)}', space=vmem, size = 0x200, scoped, tag = 'scratch operand']
  %s0 = inlined_call_operand.vmem [shape: f32[4], index: 0, kind: input, shape index: {}]
  %s1 = inlined_call_operand.vmem [shape: f32[2,8,128], index: 1, kind: input, shape index: {}]
  %s2 = inlined_call_operand.vmem [shape: f32[2,1,8], index: 2, kind: input, shape index: {}]
  %s3 = inlined_call_operand.vmem [shape: f32[1,128], index: 3, kind: input, shape index: {}]
  %s4 = inlined_call_operand.vmem [shape: f32[1,128], index: 4, kind: input, shape index: {}]
  %s5 = inlined_call_operand.vmem [shape: f32[4,1,128], index: 5, kind: input, shape index: {}]
  %s6 = inlined_call_operand.vmem [shape: f32[4,1,128], index: 6, kind: input, shape index: {}]
  %s7 = inlined_call_operand.vmem [shape: bf16[4,128,384], index: 7, kind: input, shape index: {}]
  %s8 = inlined_call_operand.vmem [shape: f32[4,1,384], index: 8, kind: input, shape index: {}]
  %s9 = inlined_call_operand.vmem [shape: bf16[4,4,32,128], index: 9, kind: input, shape index: {}]
  %s10 = inlined_call_operand.vmem [shape: f32[4,1,128], index: 10, kind: input, shape index: {}]
  %s11 = inlined_call_operand.vmem [shape: f32[4,1,128], index: 11, kind: input, shape index: {}]
  %s12 = inlined_call_operand.vmem [shape: f32[4,1,128], index: 12, kind: input, shape index: {}]
  %s13 = inlined_call_operand.vmem [shape: bf16[4,128,256], index: 13, kind: input, shape index: {}]
  %s14 = inlined_call_operand.vmem [shape: f32[4,1,256], index: 14, kind: input, shape index: {}]
  %s15 = inlined_call_operand.vmem [shape: bf16[4,256,128], index: 15, kind: input, shape index: {}]
  %s16 = inlined_call_operand.vmem [shape: f32[4,1,128], index: 16, kind: input, shape index: {}]
  %s17 = inlined_call_operand.hbm [shape: f32[3,2,8,128], index: 17, kind: output, shape index: {0}]
  %s18 = inlined_call_operand.hbm [shape: f32[3,2,1,8], index: 18, kind: output, shape index: {1}]
  %19 = xla_tuple %s17, %s18
  %s20 = sld [smem:[#allocation0]]
  $region125: #{multi_scale_encoder.1} parent=0
    _
  %s22 = ssub.s32 1, %s20
  %s23 = scalar_select 0, %s22, %s20
  $region1: #{multi_scale_encoder.1} parent=0
    #allocation5 [shape = 'u8[512]{0}', space=smem, size = 0x200, scoped, tag = 'input window, operand 0, single buffered']
    #allocation6 [shape = 's32[2]{0}', space=sflag, size = 0x8, scoped, tag = 'scoped memory for multi_scale_encoder.1']
    #allocation7 [shape = 's32[2]{0}', space=sflag, size = 0x8, scoped, tag = 'scoped memory for multi_scale_encoder.1']
    #allocation8 [shape = 'u8[8192]{0}', space=vmem, size = 0x2000, scoped, tag = 'output window, operand 0']
    #allocation9 [shape = 'u8[1024]{0}', space=vmem, size = 0x400, scoped, tag = 'output window, operand 1']
    #allocation10 [shape = 's32[2]{0}', space=sflag, size = 0x8, scoped, tag = 'scoped memory for multi_scale_encoder.1']
    %24 = vsyncpa [#allocation7], 0
    %25 = vsyncpa [#allocation6], 0
    %s26 = scalar_lea.sflag [#allocation6], 1
    %27 = vsyncpa %s26, 0
    %28 = vsyncpa [#allocation10], 0
    %s29 = scalar_lea.sflag [#allocation10], 1
    %30 = vsyncpa %s29, 0
    loop: start=0, step=1, limit=10
    $region2: #{multi_scale_encoder.1} parent=1 // loop_pre_header
      _
    $region3: #{multi_scale_encoder.1} parent=1 // loop_header
      %s32 = sphi 0, %s36
      %p33 = scmp.ge.s32.totalorder %s32, 10
      %s39 = sphi 0, %s51
      %s40 = sphi 0, %s47
      %s41 = sphi 0, %s39
      %s42 = sphi 0, %s40
      %s43 = sphi 0, %s41
      %s44 = sphi 0, %s42
      %s52 = sphi 0, %s52
      %s54 = sphi 0, %s52
      %s55 = sphi 0, %s54
      %s69 = sphi 0, %s55
      %s75 = sphi 0, %s77
      %s78 = sphi 0, %s75
      %s79 = sphi 0, %s78
      %s95 = sphi 0, %s79
      %s101 = sphi 0, %s103
      %s104 = sphi 0, %s101
      %s105 = sphi 0, %s104
      %s121 = sphi 0, %s105
      %s125 = sphi 0, %s125
      %s127 = sphi 0, %s125
      %s128 = sphi 0, %s127
      %s142 = sphi 0, %s128
      %s146 = sphi 0, %s146
      %s148 = sphi 0, %s146
      %s149 = sphi 0, %s148
      %s163 = sphi 0, %s149
      %s169 = sphi 0, %s171
      %s172 = sphi 0, %s169
      %s173 = sphi 0, %s172
      %s189 = sphi 0, %s173
      %s195 = sphi 0, %s197
      %s198 = sphi 0, %s195
      %s199 = sphi 0, %s198
      %s215 = sphi 0, %s199
      %s221 = sphi 0, %s223
      %s224 = sphi 0, %s221
      %s225 = sphi 0, %s224
      %s241 = sphi 0, %s225
      %s247 = sphi 0, %s249
      %s250 = sphi 0, %s247
      %s251 = sphi 0, %s250
      %s267 = sphi 0, %s251
      %s273 = sphi 0, %s275
      %s276 = sphi 0, %s273
      %s277 = sphi 0, %s276
      %s293 = sphi 0, %s277
      %s299 = sphi 0, %s301
      %s302 = sphi 0, %s299
      %s303 = sphi 0, %s302
      %s319 = sphi 0, %s303
      %s325 = sphi 0, %s327
      %s328 = sphi 0, %s325
      %s329 = sphi 0, %s328
      %s345 = sphi 0, %s329
      %s351 = sphi 0, %s353
      %s354 = sphi 0, %s351
      %s355 = sphi 0, %s354
      %s371 = sphi 0, %s355
      %s377 = sphi 0, %s379
      %s380 = sphi 0, %s377
      %s381 = sphi 0, %s380
      %s397 = sphi 0, %s381
      %s403 = sphi 0, %s405
      %s406 = sphi 0, %s403
      %s407 = sphi 0, %s406
      %s423 = sphi 0, %s407
      %s429 = sphi 0, %s431
      %s432 = sphi 0, %s429
      %s433 = sphi 0, %s432
      %s449 = sphi 0, %s433
      %s455 = sphi 0, %s457
      %s458 = sphi 0, %s455
      %s459 = sphi 0, %s458
      %s475 = sphi 0, %s459
      %s489 = sphi 0, %s491
      %s492 = sphi 0, %s489
      %s493 = sphi 0, %s492
      %s509 = sphi 0, %s493
      %s523 = sphi 0, %s525
      %s526 = sphi 0, %s523
      %s527 = sphi 0, %s526
      %s543 = sphi 0, %s527
    $region4: #{multi_scale_encoder.1} parent=1 // loop_header_branch
      %35 = sbr.rel (%p33) target = $region8
    $region5: #{multi_scale_encoder.1} parent=1 // loop_body
      %s37 = ssub.s32 %s32, 1
      %s38 = ssub.s32 %s32, 2
      %s45 = sadd.s32 1, %s40
      %p46 = scmp.ge.s32.totalorder %s45, 4
      %s47 = scalar_select %p46, 0, %s45
      %s48 = sadd.s32 1, %s39
      %s49 = scalar_select %p46, %s48, %s39
      %p50 = scmp.ge.s32.totalorder %s49, 2
      %s51 = scalar_select %p50, 0, %s49
      %s53 = sadd.s32 %s52, 1
      %p56 = scmp.eq.s32.totalorder %s32, 7
      %p57 = scmp.ne.s32.totalorder %s52, %s54
      %p58 = scmp.eq.s32.totalorder %s32, 0
      %p59 = por %p57, %p58
      %p60 = scmp.ne.s32.totalorder %s52, %s54
      %p61 = scmp.eq.s32.totalorder %s37, 7
      %p62 = por %p60, %p61
      %p63 = scmp.ne.s32.totalorder %s54, %s55
      %p64 = scmp.eq.s32.totalorder %s37, 0
      %p65 = por %p63, %p64
      %p66 = scmp.ne.s32.totalorder %s54, %s55
      %p67 = scmp.eq.s32.totalorder %s38, 7
      %p68 = por %p66, %p67
      %p70 = scmp.ne.s32.totalorder %s55, %s69
      %p71 = scmp.eq.s32.totalorder %s38, 0
      %p72 = por %p70, %p71
      %s73 = ssub.s32 %s39, %s51
      %p74 = scmp.eq.s32.totalorder %s73, 0
      %s76 = sadd.s32 %s75, 1
      %s77 = scalar_select %p74, %s75, %s76
      %p80 = pneg %p74
      %p81 = scmp.eq.s32.totalorder %s32, 7
      %p82 = por %p80, %p81
      %p83 = scmp.ne.s32.totalorder %s75, %s78
      %p84 = scmp.eq.s32.totalorder %s32, 0
      %p85 = por %p83, %p84
      %p86 = scmp.ne.s32.totalorder %s75, %s78
      %p87 = scmp.eq.s32.totalorder %s37, 7
      %p88 = por %p86, %p87
      %p89 = scmp.ne.s32.totalorder %s78, %s79
      %p90 = scmp.eq.s32.totalorder %s37, 0
      %p91 = por %p89, %p90
      %p92 = scmp.ne.s32.totalorder %s78, %s79
      %p93 = scmp.eq.s32.totalorder %s38, 7
      %p94 = por %p92, %p93
      %p96 = scmp.ne.s32.totalorder %s79, %s95
      %p97 = scmp.eq.s32.totalorder %s38, 0
      %p98 = por %p96, %p97
      %s99 = ssub.s32 %s39, %s51
      %p100 = scmp.eq.s32.totalorder %s99, 0
      %s102 = sadd.s32 %s101, 1
      %s103 = scalar_select %p100, %s101, %s102
      %p106 = pneg %p100
      %p107 = scmp.eq.s32.totalorder %s32, 7
      %p108 = por %p106, %p107
      %p109 = scmp.ne.s32.totalorder %s101, %s104
      %p110 = scmp.eq.s32.totalorder %s32, 0
      %p111 = por %p109, %p110
      %p112 = scmp.ne.s32.totalorder %s101, %s104
      %p113 = scmp.eq.s32.totalorder %s37, 7
      %p114 = por %p112, %p113
      %p115 = scmp.ne.s32.totalorder %s104, %s105
      %p116 = scmp.eq.s32.totalorder %s37, 0
      %p117 = por %p115, %p116
      %p118 = scmp.ne.s32.totalorder %s104, %s105
      %p119 = scmp.eq.s32.totalorder %s38, 7
      %p120 = por %p118, %p119
      %p122 = scmp.ne.s32.totalorder %s105, %s121
      %p123 = scmp.eq.s32.totalorder %s38, 0
      %p124 = por %p122, %p123
      %s126 = sadd.s32 %s125, 1
      %p129 = scmp.eq.s32.totalorder %s32, 7
      %p130 = scmp.ne.s32.totalorder %s125, %s127
      %p131 = scmp.eq.s32.totalorder %s32, 0
      %p132 = por %p130, %p131
      %p133 = scmp.ne.s32.totalorder %s125, %s127
      %p134 = scmp.eq.s32.totalorder %s37, 7
      %p135 = por %p133, %p134
      %p136 = scmp.ne.s32.totalorder %s127, %s128
      %p137 = scmp.eq.s32.totalorder %s37, 0
      %p138 = por %p136, %p137
      %p139 = scmp.ne.s32.totalorder %s127, %s128
      %p140 = scmp.eq.s32.totalorder %s38, 7
      %p141 = por %p139, %p140
      %p143 = scmp.ne.s32.totalorder %s128, %s142
      %p144 = scmp.eq.s32.totalorder %s38, 0
      %p145 = por %p143, %p144
      %s147 = sadd.s32 %s146, 1
      %p150 = scmp.eq.s32.totalorder %s32, 7
      %p151 = scmp.ne.s32.totalorder %s146, %s148
      %p152 = scmp.eq.s32.totalorder %s32, 0
      %p153 = por %p151, %p152
      %p154 = scmp.ne.s32.totalorder %s146, %s148
      %p155 = scmp.eq.s32.totalorder %s37, 7
      %p156 = por %p154, %p155
      %p157 = scmp.ne.s32.totalorder %s148, %s149
      %p158 = scmp.eq.s32.totalorder %s37, 0
      %p159 = por %p157, %p158
      %p160 = scmp.ne.s32.totalorder %s148, %s149
      %p161 = scmp.eq.s32.totalorder %s38, 7
      %p162 = por %p160, %p161
      %p164 = scmp.ne.s32.totalorder %s149, %s163
      %p165 = scmp.eq.s32.totalorder %s38, 0
      %p166 = por %p164, %p165
      %s167 = ssub.s32 %s40, %s47
      %p168 = scmp.eq.s32.totalorder %s167, 0
      %s170 = sadd.s32 %s169, 1
      %s171 = scalar_select %p168, %s169, %s170
      %p174 = pneg %p168
      %p175 = scmp.eq.s32.totalorder %s32, 7
      %p176 = por %p174, %p175
      %p177 = scmp.ne.s32.totalorder %s169, %s172
      %p178 = scmp.eq.s32.totalorder %s32, 0
      %p179 = por %p177, %p178
      %p180 = scmp.ne.s32.totalorder %s169, %s172
      %p181 = scmp.eq.s32.totalorder %s37, 7
      %p182 = por %p180, %p181
      %p183 = scmp.ne.s32.totalorder %s172, %s173
      %p184 = scmp.eq.s32.totalorder %s37, 0
      %p185 = por %p183, %p184
      %p186 = scmp.ne.s32.totalorder %s172, %s173
      %p187 = scmp.eq.s32.totalorder %s38, 7
      %p188 = por %p186, %p187
      %p190 = scmp.ne.s32.totalorder %s173, %s189
      %p191 = scmp.eq.s32.totalorder %s38, 0
      %p192 = por %p190, %p191
      %s193 = ssub.s32 %s40, %s47
      %p194 = scmp.eq.s32.totalorder %s193, 0
      %s196 = sadd.s32 %s195, 1
      %s197 = scalar_select %p194, %s195, %s196
      %p200 = pneg %p194
      %p201 = scmp.eq.s32.totalorder %s32, 7
      %p202 = por %p200, %p201
      %p203 = scmp.ne.s32.totalorder %s195, %s198
      %p204 = scmp.eq.s32.totalorder %s32, 0
      %p205 = por %p203, %p204
      %p206 = scmp.ne.s32.totalorder %s195, %s198
      %p207 = scmp.eq.s32.totalorder %s37, 7
      %p208 = por %p206, %p207
      %p209 = scmp.ne.s32.totalorder %s198, %s199
      %p210 = scmp.eq.s32.totalorder %s37, 0
      %p211 = por %p209, %p210
      %p212 = scmp.ne.s32.totalorder %s198, %s199
      %p213 = scmp.eq.s32.totalorder %s38, 7
      %p214 = por %p212, %p213
      %p216 = scmp.ne.s32.totalorder %s199, %s215
      %p217 = scmp.eq.s32.totalorder %s38, 0
      %p218 = por %p216, %p217
      %s219 = ssub.s32 %s40, %s47
      %p220 = scmp.eq.s32.totalorder %s219, 0
      %s222 = sadd.s32 %s221, 1
      %s223 = scalar_select %p220, %s221, %s222
      %p226 = pneg %p220
      %p227 = scmp.eq.s32.totalorder %s32, 7
      %p228 = por %p226, %p227
      %p229 = scmp.ne.s32.totalorder %s221, %s224
      %p230 = scmp.eq.s32.totalorder %s32, 0
      %p231 = por %p229, %p230
      %p232 = scmp.ne.s32.totalorder %s221, %s224
      %p233 = scmp.eq.s32.totalorder %s37, 7
      %p234 = por %p232, %p233
      %p235 = scmp.ne.s32.totalorder %s224, %s225
      %p236 = scmp.eq.s32.totalorder %s37, 0
      %p237 = por %p235, %p236
      %p238 = scmp.ne.s32.totalorder %s224, %s225
      %p239 = scmp.eq.s32.totalorder %s38, 7
      %p240 = por %p238, %p239
      %p242 = scmp.ne.s32.totalorder %s225, %s241
      %p243 = scmp.eq.s32.totalorder %s38, 0
      %p244 = por %p242, %p243
      %s245 = ssub.s32 %s40, %s47
      %p246 = scmp.eq.s32.totalorder %s245, 0
      %s248 = sadd.s32 %s247, 1
      %s249 = scalar_select %p246, %s247, %s248
      %p252 = pneg %p246
      %p253 = scmp.eq.s32.totalorder %s32, 7
      %p254 = por %p252, %p253
      %p255 = scmp.ne.s32.totalorder %s247, %s250
      %p256 = scmp.eq.s32.totalorder %s32, 0
      %p257 = por %p255, %p256
      %p258 = scmp.ne.s32.totalorder %s247, %s250
      %p259 = scmp.eq.s32.totalorder %s37, 7
      %p260 = por %p258, %p259
      %p261 = scmp.ne.s32.totalorder %s250, %s251
      %p262 = scmp.eq.s32.totalorder %s37, 0
      %p263 = por %p261, %p262
      %p264 = scmp.ne.s32.totalorder %s250, %s251
      %p265 = scmp.eq.s32.totalorder %s38, 7
      %p266 = por %p264, %p265
      %p268 = scmp.ne.s32.totalorder %s251, %s267
      %p269 = scmp.eq.s32.totalorder %s38, 0
      %p270 = por %p268, %p269
      %s271 = ssub.s32 %s40, %s47
      %p272 = scmp.eq.s32.totalorder %s271, 0
      %s274 = sadd.s32 %s273, 1
      %s275 = scalar_select %p272, %s273, %s274
      %p278 = pneg %p272
      %p279 = scmp.eq.s32.totalorder %s32, 7
      %p280 = por %p278, %p279
      %p281 = scmp.ne.s32.totalorder %s273, %s276
      %p282 = scmp.eq.s32.totalorder %s32, 0
      %p283 = por %p281, %p282
      %p284 = scmp.ne.s32.totalorder %s273, %s276
      %p285 = scmp.eq.s32.totalorder %s37, 7
      %p286 = por %p284, %p285
      %p287 = scmp.ne.s32.totalorder %s276, %s277
      %p288 = scmp.eq.s32.totalorder %s37, 0
      %p289 = por %p287, %p288
      %p290 = scmp.ne.s32.totalorder %s276, %s277
      %p291 = scmp.eq.s32.totalorder %s38, 7
      %p292 = por %p290, %p291
      %p294 = scmp.ne.s32.totalorder %s277, %s293
      %p295 = scmp.eq.s32.totalorder %s38, 0
      %p296 = por %p294, %p295
      %s297 = ssub.s32 %s40, %s47
      %p298 = scmp.eq.s32.totalorder %s297, 0
      %s300 = sadd.s32 %s299, 1
      %s301 = scalar_select %p298, %s299, %s300
      %p304 = pneg %p298
      %p305 = scmp.eq.s32.totalorder %s32, 7
      %p306 = por %p304, %p305
      %p307 = scmp.ne.s32.totalorder %s299, %s302
      %p308 = scmp.eq.s32.totalorder %s32, 0
      %p309 = por %p307, %p308
      %p310 = scmp.ne.s32.totalorder %s299, %s302
      %p311 = scmp.eq.s32.totalorder %s37, 7
      %p312 = por %p310, %p311
      %p313 = scmp.ne.s32.totalorder %s302, %s303
      %p314 = scmp.eq.s32.totalorder %s37, 0
      %p315 = por %p313, %p314
      %p316 = scmp.ne.s32.totalorder %s302, %s303
      %p317 = scmp.eq.s32.totalorder %s38, 7
      %p318 = por %p316, %p317
      %p320 = scmp.ne.s32.totalorder %s303, %s319
      %p321 = scmp.eq.s32.totalorder %s38, 0
      %p322 = por %p320, %p321
      %s323 = ssub.s32 %s40, %s47
      %p324 = scmp.eq.s32.totalorder %s323, 0
      %s326 = sadd.s32 %s325, 1
      %s327 = scalar_select %p324, %s325, %s326
      %p330 = pneg %p324
      %p331 = scmp.eq.s32.totalorder %s32, 7
      %p332 = por %p330, %p331
      %p333 = scmp.ne.s32.totalorder %s325, %s328
      %p334 = scmp.eq.s32.totalorder %s32, 0
      %p335 = por %p333, %p334
      %p336 = scmp.ne.s32.totalorder %s325, %s328
      %p337 = scmp.eq.s32.totalorder %s37, 7
      %p338 = por %p336, %p337
      %p339 = scmp.ne.s32.totalorder %s328, %s329
      %p340 = scmp.eq.s32.totalorder %s37, 0
      %p341 = por %p339, %p340
      %p342 = scmp.ne.s32.totalorder %s328, %s329
      %p343 = scmp.eq.s32.totalorder %s38, 7
      %p344 = por %p342, %p343
      %p346 = scmp.ne.s32.totalorder %s329, %s345
      %p347 = scmp.eq.s32.totalorder %s38, 0
      %p348 = por %p346, %p347
      %s349 = ssub.s32 %s40, %s47
      %p350 = scmp.eq.s32.totalorder %s349, 0
      %s352 = sadd.s32 %s351, 1
      %s353 = scalar_select %p350, %s351, %s352
      %p356 = pneg %p350
      %p357 = scmp.eq.s32.totalorder %s32, 7
      %p358 = por %p356, %p357
      %p359 = scmp.ne.s32.totalorder %s351, %s354
      %p360 = scmp.eq.s32.totalorder %s32, 0
      %p361 = por %p359, %p360
      %p362 = scmp.ne.s32.totalorder %s351, %s354
      %p363 = scmp.eq.s32.totalorder %s37, 7
      %p364 = por %p362, %p363
      %p365 = scmp.ne.s32.totalorder %s354, %s355
      %p366 = scmp.eq.s32.totalorder %s37, 0
      %p367 = por %p365, %p366
      %p368 = scmp.ne.s32.totalorder %s354, %s355
      %p369 = scmp.eq.s32.totalorder %s38, 7
      %p370 = por %p368, %p369
      %p372 = scmp.ne.s32.totalorder %s355, %s371
      %p373 = scmp.eq.s32.totalorder %s38, 0
      %p374 = por %p372, %p373
      %s375 = ssub.s32 %s40, %s47
      %p376 = scmp.eq.s32.totalorder %s375, 0
      %s378 = sadd.s32 %s377, 1
      %s379 = scalar_select %p376, %s377, %s378
      %p382 = pneg %p376
      %p383 = scmp.eq.s32.totalorder %s32, 7
      %p384 = por %p382, %p383
      %p385 = scmp.ne.s32.totalorder %s377, %s380
      %p386 = scmp.eq.s32.totalorder %s32, 0
      %p387 = por %p385, %p386
      %p388 = scmp.ne.s32.totalorder %s377, %s380
      %p389 = scmp.eq.s32.totalorder %s37, 7
      %p390 = por %p388, %p389
      %p391 = scmp.ne.s32.totalorder %s380, %s381
      %p392 = scmp.eq.s32.totalorder %s37, 0
      %p393 = por %p391, %p392
      %p394 = scmp.ne.s32.totalorder %s380, %s381
      %p395 = scmp.eq.s32.totalorder %s38, 7
      %p396 = por %p394, %p395
      %p398 = scmp.ne.s32.totalorder %s381, %s397
      %p399 = scmp.eq.s32.totalorder %s38, 0
      %p400 = por %p398, %p399
      %s401 = ssub.s32 %s40, %s47
      %p402 = scmp.eq.s32.totalorder %s401, 0
      %s404 = sadd.s32 %s403, 1
      %s405 = scalar_select %p402, %s403, %s404
      %p408 = pneg %p402
      %p409 = scmp.eq.s32.totalorder %s32, 7
      %p410 = por %p408, %p409
      %p411 = scmp.ne.s32.totalorder %s403, %s406
      %p412 = scmp.eq.s32.totalorder %s32, 0
      %p413 = por %p411, %p412
      %p414 = scmp.ne.s32.totalorder %s403, %s406
      %p415 = scmp.eq.s32.totalorder %s37, 7
      %p416 = por %p414, %p415
      %p417 = scmp.ne.s32.totalorder %s406, %s407
      %p418 = scmp.eq.s32.totalorder %s37, 0
      %p419 = por %p417, %p418
      %p420 = scmp.ne.s32.totalorder %s406, %s407
      %p421 = scmp.eq.s32.totalorder %s38, 7
      %p422 = por %p420, %p421
      %p424 = scmp.ne.s32.totalorder %s407, %s423
      %p425 = scmp.eq.s32.totalorder %s38, 0
      %p426 = por %p424, %p425
      %s427 = ssub.s32 %s40, %s47
      %p428 = scmp.eq.s32.totalorder %s427, 0
      %s430 = sadd.s32 %s429, 1
      %s431 = scalar_select %p428, %s429, %s430
      %p434 = pneg %p428
      %p435 = scmp.eq.s32.totalorder %s32, 7
      %p436 = por %p434, %p435
      %p437 = scmp.ne.s32.totalorder %s429, %s432
      %p438 = scmp.eq.s32.totalorder %s32, 0
      %p439 = por %p437, %p438
      %p440 = scmp.ne.s32.totalorder %s429, %s432
      %p441 = scmp.eq.s32.totalorder %s37, 7
      %p442 = por %p440, %p441
      %p443 = scmp.ne.s32.totalorder %s432, %s433
      %p444 = scmp.eq.s32.totalorder %s37, 0
      %p445 = por %p443, %p444
      %p446 = scmp.ne.s32.totalorder %s432, %s433
      %p447 = scmp.eq.s32.totalorder %s38, 7
      %p448 = por %p446, %p447
      %p450 = scmp.ne.s32.totalorder %s433, %s449
      %p451 = scmp.eq.s32.totalorder %s38, 0
      %p452 = por %p450, %p451
      %s453 = ssub.s32 %s40, %s47
      %p454 = scmp.eq.s32.totalorder %s453, 0
      %s456 = sadd.s32 %s455, 1
      %s457 = scalar_select %p454, %s455, %s456
      %p460 = pneg %p454
      %p461 = scmp.eq.s32.totalorder %s32, 7
      %p462 = por %p460, %p461
      %p463 = scmp.ne.s32.totalorder %s455, %s458
      %p464 = scmp.eq.s32.totalorder %s32, 0
      %p465 = por %p463, %p464
      %p466 = scmp.ne.s32.totalorder %s455, %s458
      %p467 = scmp.eq.s32.totalorder %s37, 7
      %p468 = por %p466, %p467
      %p469 = scmp.ne.s32.totalorder %s458, %s459
      %p470 = scmp.eq.s32.totalorder %s37, 0
      %p471 = por %p469, %p470
      %p472 = scmp.ne.s32.totalorder %s458, %s459
      %p473 = scmp.eq.s32.totalorder %s38, 7
      %p474 = por %p472, %p473
      %p476 = scmp.ne.s32.totalorder %s459, %s475
      %p477 = scmp.eq.s32.totalorder %s38, 0
      %p478 = por %p476, %p477
      %s479 = ssub.s32 %s40, 1
      %p480 = scmp.gt.s32.totalorder %s479, 0
      %s481 = scalar_select %p480, %s479, 0
      %s482 = ssub.s32 %s47, 1
      %p483 = scmp.gt.s32.totalorder %s482, 0
      %s484 = scalar_select %p483, %s482, 0
      %s485 = ssub.s32 %s481, %s484
      %s486 = ssub.s32 %s39, %s51
      %s487 = sor.u32 %s485, %s486
      %p488 = scmp.eq.s32.totalorder %s487, 0
      %s490 = sadd.s32 %s489, 1
      %s491 = scalar_select %p488, %s489, %s490
      %p494 = pneg %p488
      %p495 = scmp.eq.s32.totalorder %s32, 7
      %p496 = por %p494, %p495
      %p497 = scmp.ne.s32.totalorder %s489, %s492
      %p498 = scmp.eq.s32.totalorder %s32, 0
      %p499 = por %p497, %p498
      %p500 = scmp.ne.s32.totalorder %s489, %s492
      %p501 = scmp.eq.s32.totalorder %s37, 7
      %p502 = por %p500, %p501
      %p503 = scmp.ne.s32.totalorder %s492, %s493
      %p504 = scmp.eq.s32.totalorder %s37, 0
      %p505 = por %p503, %p504
      %p506 = scmp.ne.s32.totalorder %s492, %s493
      %p507 = scmp.eq.s32.totalorder %s38, 7
      %p508 = por %p506, %p507
      %p510 = scmp.ne.s32.totalorder %s493, %s509
      %p511 = scmp.eq.s32.totalorder %s38, 0
      %p512 = por %p510, %p511
      %s513 = ssub.s32 %s40, 1
      %p514 = scmp.gt.s32.totalorder %s513, 0
      %s515 = scalar_select %p514, %s513, 0
      %s516 = ssub.s32 %s47, 1
      %p517 = scmp.gt.s32.totalorder %s516, 0
      %s518 = scalar_select %p517, %s516, 0
      %s519 = ssub.s32 %s515, %s518
      %s520 = ssub.s32 %s39, %s51
      %s521 = sor.u32 %s519, %s520
      %p522 = scmp.eq.s32.totalorder %s521, 0
      %s524 = sadd.s32 %s523, 1
      %s525 = scalar_select %p522, %s523, %s524
      %p528 = pneg %p522
      %p529 = scmp.eq.s32.totalorder %s32, 7
      %p530 = por %p528, %p529
      %p531 = scmp.ne.s32.totalorder %s523, %s526
      %p532 = scmp.eq.s32.totalorder %s32, 0
      %p533 = por %p531, %p532
      %p534 = scmp.ne.s32.totalorder %s523, %s526
      %p535 = scmp.eq.s32.totalorder %s37, 7
      %p536 = por %p534, %p535
      %p537 = scmp.ne.s32.totalorder %s526, %s527
      %p538 = scmp.eq.s32.totalorder %s37, 0
      %p539 = por %p537, %p538
      %p540 = scmp.ne.s32.totalorder %s526, %s527
      %p541 = scmp.eq.s32.totalorder %s38, 7
      %p542 = por %p540, %p541
      %p544 = scmp.ne.s32.totalorder %s527, %s543
      %p545 = scmp.eq.s32.totalorder %s38, 0
      %p546 = por %p544, %p545
      %p547 = scmp.le.s32.totalorder 1, %s32
      %p548 = scmp.lt.s32.totalorder %s32, 9
      %p549 = pnand %p547, %p548
      %p550 = pneg %p549
      // Predicated region
      $region9: #{multi_scale_encoder.1} parent=5 // pred_check
        _
      $region10: #{multi_scale_encoder.1} parent=5 // pred_check_branch
        %552 = sbr.rel (%p549) target = $region12
      $region11: #{multi_scale_encoder.1} parent=5 // pred_region
        %s553 = ssub.s32 %s32, 1
        // Predicated region
        $region13: #{multi_scale_encoder.1} parent=11 // pred_check
          %p554 = pneg %p65
        $region14: #{multi_scale_encoder.1} parent=11 // pred_check_branch
          %556 = sbr.rel (%p554) target = $region16
        $region15: #{multi_scale_encoder.1} parent=11 // pred_region
          %s558 = ssub.s32 16, 16
          %559 = vsyncadd [#allocation7], %s558
          %s561 = sshll.u32 %s0, 4
          %s562 = int_to_ptr.vmem [resolvable:$true] %s561
          %564 = dma.vmem_to_smem %s562, 16, [#allocation5], [#allocation7]
        $region16: #{multi_scale_encoder.1} parent=11 // pred_fallthru
          _
        // Predicated region
        $region17: #{multi_scale_encoder.1} parent=11 // pred_check
          %p565 = pneg %p138
        $region18: #{multi_scale_encoder.1} parent=11 // pred_check_branch
          %567 = sbr.rel (%p565) target = $region20
        $region19: #{multi_scale_encoder.1} parent=11 // pred_region
          _
        $region20: #{multi_scale_encoder.1} parent=11 // pred_fallthru
          _
        // Predicated region
        $region21: #{multi_scale_encoder.1} parent=11 // pred_check
          %p568 = pneg %p159
        $region22: #{multi_scale_encoder.1} parent=11 // pred_check_branch
          %570 = sbr.rel (%p568) target = $region24
        $region23: #{multi_scale_encoder.1} parent=11 // pred_region
          _
        $region24: #{multi_scale_encoder.1} parent=11 // pred_fallthru
          _
      $region12: #{multi_scale_encoder.1} parent=5 // pred_fallthru
        _
      %p571 = scmp.lt.s32.totalorder %s32, 8
      // Predicated region
      $region25: #{multi_scale_encoder.1} parent=5 // pred_check
        %p572 = pneg %p571
      $region26: #{multi_scale_encoder.1} parent=5 // pred_check_branch
        %574 = sbr.rel (%p572) target = $region28
      $region27: #{multi_scale_encoder.1} parent=5 // pred_region
        // Predicated region
        $region29: #{multi_scale_encoder.1} parent=27 // pred_check
          %p575 = pneg %p85
        $region30: #{multi_scale_encoder.1} parent=27 // pred_check_branch
          %577 = sbr.rel (%p575) target = $region32
        $region31: #{multi_scale_encoder.1} parent=27 // pred_region
          %p578 = scmp.lt.s32.totalorder %s39, 1
          %s579 = scalar_select %p578, %s39, 1
          %s580 = smul.addr %s579, 8
          %s581 = scalar_lea.vmem %s1, %s580
        $region32: #{multi_scale_encoder.1} parent=27 // pred_fallthru
          _
        // Predicated region
        $region33: #{multi_scale_encoder.1} parent=27 // pred_check
          %p582 = pneg %p111
        $region34: #{multi_scale_encoder.1} parent=27 // pred_check_branch
          %584 = sbr.rel (%p582) target = $region36
        $region35: #{multi_scale_encoder.1} parent=27 // pred_region
          %p585 = scmp.lt.s32.totalorder %s39, 1
          %s586 = scalar_select %p585, %s39, 1
          %s587 = scalar_lea.vmem %s2, %s586
        $region36: #{multi_scale_encoder.1} parent=27 // pred_fallthru
          _
        // Predicated region
        $region37: #{multi_scale_encoder.1} parent=27 // pred_check
          %p588 = pneg %p179
        $region38: #{multi_scale_encoder.1} parent=27 // pred_check_branch
          %590 = sbr.rel (%p588) target = $region40
        $region39: #{multi_scale_encoder.1} parent=27 // pred_region
          %p591 = scmp.lt.s32.totalorder %s40, 3
          %s592 = scalar_select %p591, %s40, 3
          %s593 = scalar_lea.vmem %s5, %s592
        $region40: #{multi_scale_encoder.1} parent=27 // pred_fallthru
          _
        // Predicated region
        $region41: #{multi_scale_encoder.1} parent=27 // pred_check
          %p594 = pneg %p205
        $region42: #{multi_scale_encoder.1} parent=27 // pred_check_branch
          %596 = sbr.rel (%p594) target = $region44
        $region43: #{multi_scale_encoder.1} parent=27 // pred_region
          %p597 = scmp.lt.s32.totalorder %s40, 3
          %s598 = scalar_select %p597, %s40, 3
          %s599 = scalar_lea.vmem %s6, %s598
        $region44: #{multi_scale_encoder.1} parent=27 // pred_fallthru
          _
        // Predicated region
        $region45: #{multi_scale_encoder.1} parent=27 // pred_check
          %p600 = pneg %p231
        $region46: #{multi_scale_encoder.1} parent=27 // pred_check_branch
          %602 = sbr.rel (%p600) target = $region48
        $region47: #{multi_scale_encoder.1} parent=27 // pred_region
          %p603 = scmp.lt.s32.totalorder %s40, 3
          %s604 = scalar_select %p603, %s40, 3
          %s605 = smul.addr %s604, 48
          %s606 = smul.addr %s605, 4
          %s607 = scalar_lea.vmem %s7, %s606
        $region48: #{multi_scale_encoder.1} parent=27 // pred_fallthru
          _
        // Predicated region
        $region49: #{multi_scale_encoder.1} parent=27 // pred_check
          %p608 = pneg %p257
        $region50: #{multi_scale_encoder.1} parent=27 // pred_check_branch
          %610 = sbr.rel (%p608) target = $region52
        $region51: #{multi_scale_encoder.1} parent=27 // pred_region
          %p611 = scmp.lt.s32.totalorder %s40, 3
          %s612 = scalar_select %p611, %s40, 3
          %s613 = smul.addr %s612, 3
          %s614 = scalar_lea.vmem %s8, %s613
        $region52: #{multi_scale_encoder.1} parent=27 // pred_fallthru
          _
        // Predicated region
        $region53: #{multi_scale_encoder.1} parent=27 // pred_check
          %p615 = pneg %p283
        $region54: #{multi_scale_encoder.1} parent=27 // pred_check_branch
          %617 = sbr.rel (%p615) target = $region56
        $region55: #{multi_scale_encoder.1} parent=27 // pred_region
          %p618 = scmp.lt.s32.totalorder %s40, 3
          %s619 = scalar_select %p618, %s40, 3
          %s620 = smul.addr %s619, 16
          %s621 = smul.addr %s620, 4
          %s622 = scalar_lea.vmem %s9, %s621
        $region56: #{multi_scale_encoder.1} parent=27 // pred_fallthru
          _
        // Predicated region
        $region57: #{multi_scale_encoder.1} parent=27 // pred_check
          %p623 = pneg %p309
        $region58: #{multi_scale_encoder.1} parent=27 // pred_check_branch
          %625 = sbr.rel (%p623) target = $region60
        $region59: #{multi_scale_encoder.1} parent=27 // pred_region
          %p626 = scmp.lt.s32.totalorder %s40, 3
          %s627 = scalar_select %p626, %s40, 3
          %s628 = scalar_lea.vmem %s10, %s627
        $region60: #{multi_scale_encoder.1} parent=27 // pred_fallthru
          _
        // Predicated region
        $region61: #{multi_scale_encoder.1} parent=27 // pred_check
          %p629 = pneg %p335
        $region62: #{multi_scale_encoder.1} parent=27 // pred_check_branch
          %631 = sbr.rel (%p629) target = $region64
        $region63: #{multi_scale_encoder.1} parent=27 // pred_region
          %p632 = scmp.lt.s32.totalorder %s40, 3
          %s633 = scalar_select %p632, %s40, 3
          %s634 = scalar_lea.vmem %s11, %s633
        $region64: #{multi_scale_encoder.1} parent=27 // pred_fallthru
          _
        // Predicated region
        $region65: #{multi_scale_encoder.1} parent=27 // pred_check
          %p635 = pneg %p361
        $region66: #{multi_scale_encoder.1} parent=27 // pred_check_branch
          %637 = sbr.rel (%p635) target = $region68
        $region67: #{multi_scale_encoder.1} parent=27 // pred_region
          %p638 = scmp.lt.s32.totalorder %s40, 3
          %s639 = scalar_select %p638, %s40, 3
          %s640 = scalar_lea.vmem %s12, %s639
        $region68: #{multi_scale_encoder.1} parent=27 // pred_fallthru
          _
        // Predicated region
        $region69: #{multi_scale_encoder.1} parent=27 // pred_check
          %p641 = pneg %p387
        $region70: #{multi_scale_encoder.1} parent=27 // pred_check_branch
          %643 = sbr.rel (%p641) target = $region72
        $region71: #{multi_scale_encoder.1} parent=27 // pred_region
          %p644 = scmp.lt.s32.totalorder %s40, 3
          %s645 = scalar_select %p644, %s40, 3
          %s646 = smul.addr %s645, 32
          %s647 = smul.addr %s646, 4
          %s648 = scalar_lea.vmem %s13, %s647
        $region72: #{multi_scale_encoder.1} parent=27 // pred_fallthru
          _
        // Predicated region
        $region73: #{multi_scale_encoder.1} parent=27 // pred_check
          %p649 = pneg %p413
        $region74: #{multi_scale_encoder.1} parent=27 // pred_check_branch
          %651 = sbr.rel (%p649) target = $region76
        $region75: #{multi_scale_encoder.1} parent=27 // pred_region
          %p652 = scmp.lt.s32.totalorder %s40, 3
          %s653 = scalar_select %p652, %s40, 3
          %s654 = smul.addr %s653, 2
          %s655 = scalar_lea.vmem %s14, %s654
        $region76: #{multi_scale_encoder.1} parent=27 // pred_fallthru
          _
        // Predicated region
        $region77: #{multi_scale_encoder.1} parent=27 // pred_check
          %p656 = pneg %p439
        $region78: #{multi_scale_encoder.1} parent=27 // pred_check_branch
          %658 = sbr.rel (%p656) target = $region80
        $region79: #{multi_scale_encoder.1} parent=27 // pred_region
          %p659 = scmp.lt.s32.totalorder %s40, 3
          %s660 = scalar_select %p659, %s40, 3
          %s661 = smul.addr %s660, 32
          %s662 = smul.addr %s661, 4
          %s663 = scalar_lea.vmem %s15, %s662
        $region80: #{multi_scale_encoder.1} parent=27 // pred_fallthru
          _
        // Predicated region
        $region81: #{multi_scale_encoder.1} parent=27 // pred_check
          %p664 = pneg %p465
        $region82: #{multi_scale_encoder.1} parent=27 // pred_check_branch
          %666 = sbr.rel (%p664) target = $region84
        $region83: #{multi_scale_encoder.1} parent=27 // pred_region
          %p667 = scmp.lt.s32.totalorder %s40, 3
          %s668 = scalar_select %p667, %s40, 3
          %s669 = scalar_lea.vmem %s16, %s668
        $region84: #{multi_scale_encoder.1} parent=27 // pred_fallthru
          _
      $region28: #{multi_scale_encoder.1} parent=5 // pred_fallthru
        _
      %p670 = scmp.le.s32.totalorder 1, %s32
      %p671 = scmp.lt.s32.totalorder %s32, 9
      %p672 = pnand %p670, %p671
      %p673 = pneg %p672
      // Predicated region
      $region85: #{multi_scale_encoder.1} parent=5 // pred_check
        _
      $region86: #{multi_scale_encoder.1} parent=5 // pred_check_branch
        %675 = sbr.rel (%p672) target = $region88
      $region87: #{multi_scale_encoder.1} parent=5 // pred_region
        %s676 = ssub.s32 %s32, 1
        // Predicated region
        $region89: #{multi_scale_encoder.1} parent=87 // pred_check
          %p677 = pneg %p65
        $region90: #{multi_scale_encoder.1} parent=87 // pred_check_branch
          %679 = sbr.rel (%p677) target = $region92
        $region91: #{multi_scale_encoder.1} parent=87 // pred_region
          %680 = dma.done [#allocation7], 16
        $region92: #{multi_scale_encoder.1} parent=87 // pred_fallthru
          _
        %681 = sfence
        %p682 = pneg %p65
        %p683 = pneg %p62
        %p684 = scmp.lt.s32.totalorder %s41, 1
        %s685 = scalar_select %p684, %s41, 1
        %s686 = smul.addr %s685, 8
        %s687 = scalar_lea.vmem %s1, %s686
        %p688 = pneg %p91
        %p689 = pneg %p88
        %p690 = scmp.lt.s32.totalorder %s41, 1
        %s691 = scalar_select %p690, %s41, 1
        %s692 = scalar_lea.vmem %s2, %s691
        %p693 = pneg %p117
        %p694 = pneg %p114
        %p695 = pneg %p138
        %p696 = pneg %p135
        %p697 = pneg %p159
        %p698 = pneg %p156
        %p699 = scmp.lt.s32.totalorder %s42, 3
        %s700 = scalar_select %p699, %s42, 3
        %s701 = scalar_lea.vmem %s5, %s700
        %p702 = pneg %p185
        %p703 = pneg %p182
        %p704 = scmp.lt.s32.totalorder %s42, 3
        %s705 = scalar_select %p704, %s42, 3
        %s706 = scalar_lea.vmem %s6, %s705
        %p707 = pneg %p211
        %p708 = pneg %p208
        %p709 = scmp.lt.s32.totalorder %s42, 3
        %s710 = scalar_select %p709, %s42, 3
        %s711 = smul.addr %s710, 48
        %s712 = smul.addr %s711, 4
        %s713 = scalar_lea.vmem %s7, %s712
        %p714 = pneg %p237
        %p715 = pneg %p234
        %p716 = scmp.lt.s32.totalorder %s42, 3
        %s717 = scalar_select %p716, %s42, 3
        %s718 = smul.addr %s717, 3
        %s719 = scalar_lea.vmem %s8, %s718
        %p720 = pneg %p263
        %p721 = pneg %p260
        %p722 = scmp.lt.s32.totalorder %s42, 3
        %s723 = scalar_select %p722, %s42, 3
        %s724 = smul.addr %s723, 16
        %s725 = smul.addr %s724, 4
        %s726 = scalar_lea.vmem %s9, %s725
        %p727 = pneg %p289
        %p728 = pneg %p286
        %p729 = scmp.lt.s32.totalorder %s42, 3
        %s730 = scalar_select %p729, %s42, 3
        %s731 = scalar_lea.vmem %s10, %s730
        %p732 = pneg %p315
        %p733 = pneg %p312
        %p734 = scmp.lt.s32.totalorder %s42, 3
        %s735 = scalar_select %p734, %s42, 3
        %s736 = scalar_lea.vmem %s11, %s735
        %p737 = pneg %p341
        %p738 = pneg %p338
        %p739 = scmp.lt.s32.totalorder %s42, 3
        %s740 = scalar_select %p739, %s42, 3
        %s741 = scalar_lea.vmem %s12, %s740
        %p742 = pneg %p367
        %p743 = pneg %p364
        %p744 = scmp.lt.s32.totalorder %s42, 3
        %s745 = scalar_select %p744, %s42, 3
        %s746 = smul.addr %s745, 32
        %s747 = smul.addr %s746, 4
        %s748 = scalar_lea.vmem %s13, %s747
        %p749 = pneg %p393
        %p750 = pneg %p390
        %p751 = scmp.lt.s32.totalorder %s42, 3
        %s752 = scalar_select %p751, %s42, 3
        %s753 = smul.addr %s752, 2
        %s754 = scalar_lea.vmem %s14, %s753
        %p755 = pneg %p419
        %p756 = pneg %p416
        %p757 = scmp.lt.s32.totalorder %s42, 3
        %s758 = scalar_select %p757, %s42, 3
        %s759 = smul.addr %s758, 32
        %s760 = smul.addr %s759, 4
        %s761 = scalar_lea.vmem %s15, %s760
        %p762 = pneg %p445
        %p763 = pneg %p442
        %p764 = scmp.lt.s32.totalorder %s42, 3
        %s765 = scalar_select %p764, %s42, 3
        %s766 = scalar_lea.vmem %s16, %s765
        %p767 = pneg %p471
        %p768 = pneg %p468
        %p769 = pneg %p505
        %p770 = pneg %p502
        %s771 = sand.u32 %s492, 1
        %s772 = scalar_lea.sflag [#allocation6], %s771
        %s773 = sand.u32 %s492, 1
        %s774 = smul.addr %s773, 8
        %s775 = scalar_lea.vmem [#allocation8], %s774
        %p776 = pneg %p539
        %p777 = pneg %p536
        %s778 = sand.u32 %s526, 1
        %s779 = scalar_lea.sflag [#allocation10], %s778
        %s780 = sand.u32 %s526, 1
        %s781 = scalar_lea.vmem [#allocation9], %s780
        %p782 = scmp.lt.s32.totalorder %s41, 1
        %s783 = scalar_select %p782, %s41, 1
        %s784 = smul.addr %s783, 8
        %s785 = scalar_lea.vmem %s1, %s784
        %p786 = scmp.lt.s32.totalorder %s41, 1
        %s787 = scalar_select %p786, %s41, 1
        %s788 = scalar_lea.vmem %s2, %s787
        %p789 = scmp.lt.s32.totalorder %s42, 3
        %s790 = scalar_select %p789, %s42, 3
        %s791 = scalar_lea.vmem %s5, %s790
        %p792 = scmp.lt.s32.totalorder %s42, 3
        %s793 = scalar_select %p792, %s42, 3
        %s794 = scalar_lea.vmem %s6, %s793
        %p795 = scmp.lt.s32.totalorder %s42, 3
        %s796 = scalar_select %p795, %s42, 3
        %s797 = smul.addr %s796, 48
        %s798 = smul.addr %s797, 4
        %s799 = scalar_lea.vmem %s7, %s798
        %p800 = scmp.lt.s32.totalorder %s42, 3
        %s801 = scalar_select %p800, %s42, 3
        %s802 = smul.addr %s801, 3
        %s803 = scalar_lea.vmem %s8, %s802
        %p804 = scmp.lt.s32.totalorder %s42, 3
        %s805 = scalar_select %p804, %s42, 3
        %s806 = smul.addr %s805, 16
        %s807 = smul.addr %s806, 4
        %s808 = scalar_lea.vmem %s9, %s807
        %p809 = scmp.lt.s32.totalorder %s42, 3
        %s810 = scalar_select %p809, %s42, 3
        %s811 = scalar_lea.vmem %s10, %s810
        %p812 = scmp.lt.s32.totalorder %s42, 3
        %s813 = scalar_select %p812, %s42, 3
        %s814 = scalar_lea.vmem %s11, %s813
        %p815 = scmp.lt.s32.totalorder %s42, 3
        %s816 = scalar_select %p815, %s42, 3
        %s817 = scalar_lea.vmem %s12, %s816
        %p818 = scmp.lt.s32.totalorder %s42, 3
        %s819 = scalar_select %p818, %s42, 3
        %s820 = smul.addr %s819, 32
        %s821 = smul.addr %s820, 4
        %s822 = scalar_lea.vmem %s13, %s821
        %p823 = scmp.lt.s32.totalorder %s42, 3
        %s824 = scalar_select %p823, %s42, 3
        %s825 = smul.addr %s824, 2
        %s826 = scalar_lea.vmem %s14, %s825
        %p827 = scmp.lt.s32.totalorder %s42, 3
        %s828 = scalar_select %p827, %s42, 3
        %s829 = smul.addr %s828, 32
        %s830 = smul.addr %s829, 4
        %s831 = scalar_lea.vmem %s15, %s830
        %p832 = scmp.lt.s32.totalorder %s42, 3
        %s833 = scalar_select %p832, %s42, 3
        %s834 = scalar_lea.vmem %s16, %s833
        %s835 = ssub.s32 %s42, 1
        %p836 = scmp.gt.s32.totalorder %s835, 0
        %s837 = scalar_select %p836, %s835, 0
        %s838 = ssub.s32 %s42, 1
        %p839 = scmp.gt.s32.totalorder %s838, 0
        %s840 = scalar_select %p839, %s838, 0
        %p842 = scmp.eq.s32.totalorder %s42, 0
        // Predicated region
        $region93: #{multi_scale_encoder.1} parent=87 // pred_check
          %p843 = pneg %p842
        $region94: #{multi_scale_encoder.1} parent=87 // pred_check_branch
          %845 = sbr.rel (%p843) target = $region96
        $region95: #{multi_scale_encoder.1} parent=87 // pred_region
          %v846 = vld [vmem:[%s785] sm:$0xff]
          %847 = vst [vmem:[#allocation2] sm:$0xff] %v846
          %v848 = vld [vmem:[%s788] sm:$0x1]
          %vm849 = vcmask 57344
          %850 = vst.msk [vmem:[#allocation3] sm:$0x1] %vm849, %v848
          %v851 = vld [vmem:[%s788] sm:$0x1]
          %vm852 = vcmp.eq.f32.partialorder %v851, 1.0
          %v853 = vsel %vm852, 1, 0
          %v854 = vcvt.s32.f32 %v853
          %v855 = vsel %vm849, %v854, 0.0
          %856 = vadd.xlane.f32.xlu0 %v855
          %v857 = vpop.xlane.xlu0 %856
          %vm858 = vcmask 0
          %859 = vst.msk [vmem:[#allocation4] sm:$0x1] %vm858, %v857
        $region96: #{multi_scale_encoder.1} parent=87 // pred_fallthru
          _
        %p860 = scmp.ge.s32.totalorder %s42, 1
        // Predicated region
        $region97: #{multi_scale_encoder.1} parent=87 // pred_check
          %p861 = pneg %p860
        $region98: #{multi_scale_encoder.1} parent=87 // pred_check_branch
          %863 = sbr.rel (%p861) target = $region100
        $region99: #{multi_scale_encoder.1} parent=87 // pred_region
          %s864 = sld [smem:[#allocation5 + %s42]]
          %v865 = vld [vmem:[#allocation4] sm:$0x1]
          %v866 = vstv %s864
          %v867 = vmul.f32 %v865, %v866
          %v868 = vcvt.f32.s32.to.zero.pseudo %v867
          %v869 = vlaneseq
          %v870 = vand.u32 %v869, 127
          %871 = vset.pattern.permute.xlu0 0
          %872 = vperm.xlu0 %871, %v868
          %v873 = vpop.permute.xlu0 %872
          %v874 = vlaneseq
          %v875 = vshrl.u32 %v874, 7
          %v876 = vsub.s32 0, %v875
          %v877 = vrot.slane %v873, %v876
          %vm878 = vcmp.lt.s32.totalorder %v870, %v877
          %v879 = vld [vmem:[#allocation3] sm:$0x1]
          %v880 = vsel %vm878, 1.0, %v879
          %vm881 = vcmask 57344
          %882 = vst.msk [vmem:[#allocation3] sm:$0x1] %vm881, %v880
        $region100: #{multi_scale_encoder.1} parent=87 // pred_fallthru
          _
        %v883 = vld [vmem:[#allocation2] sm:$0xff]
        %v884 = vld [vmem:[#allocation3] sm:$0x1]
        %v885 = vld [vmem:[%s791] sm:$0x1]
        %v886 = vld [vmem:[%s794] sm:$0x1]
        %v887 = vld [vmem:[%s799] sm:$0xff]
        %v888 = vld [vmem:[%s799 + $0x8] sm:$0xf]
        %v889 = vld [vmem:[%s799 + $0xc] sm:$0xff]
        %v890 = vld [vmem:[%s799 + $0x14] sm:$0xf]
        %v891 = vld [vmem:[%s799 + $0x18] sm:$0xff]
        %v892 = vld [vmem:[%s799 + $0x20] sm:$0xf]
        %v893 = vld [vmem:[%s799 + $0x24] sm:$0xff]
        %v894 = vld [vmem:[%s799 + $0x2c] sm:$0xf]
        %v895 = vld [vmem:[%s799 + $0x30] sm:$0xff]
        %v896 = vld [vmem:[%s799 + $0x38] sm:$0xf]
        %v897 = vld [vmem:[%s799 + $0x3c] sm:$0xff]
        %v898 = vld [vmem:[%s799 + $0x44] sm:$0xf]
        %v899 = vld [vmem:[%s799 + $0x48] sm:$0xff]
        %v900 = vld [vmem:[%s799 + $0x50] sm:$0xf]
        %v901 = vld [vmem:[%s799 + $0x54] sm:$0xff]
        %v902 = vld [vmem:[%s799 + $0x5c] sm:$0xf]
        %v903 = vld [vmem:[%s799 + $0x60] sm:$0xff]
        %v904 = vld [vmem:[%s799 + $0x68] sm:$0xf]
        %v905 = vld [vmem:[%s799 + $0x6c] sm:$0xff]
        %v906 = vld [vmem:[%s799 + $0x74] sm:$0xf]
        %v907 = vld [vmem:[%s799 + $0x78] sm:$0xff]
        %v908 = vld [vmem:[%s799 + $0x80] sm:$0xf]
        %v909 = vld [vmem:[%s799 + $0x84] sm:$0xff]
        %v910 = vld [vmem:[%s799 + $0x8c] sm:$0xf]
        %v911 = vld [vmem:[%s799 + $0x90] sm:$0xff]
        %v912 = vld [vmem:[%s799 + $0x98] sm:$0xf]
        %v913 = vld [vmem:[%s799 + $0x9c] sm:$0xff]
        %v914 = vld [vmem:[%s799 + $0xa4] sm:$0xf]
        %v915 = vld [vmem:[%s799 + $0xa8] sm:$0xff]
        %v916 = vld [vmem:[%s799 + $0xb0] sm:$0xf]
        %v917 = vld [vmem:[%s799 + $0xb4] sm:$0xff]
        %v918 = vld [vmem:[%s799 + $0xbc] sm:$0xf]
        %v919 = vld [vmem:[%s803] sm:$0x7]
        %v920 = vld [vmem:[%s808] sm:$0xf]
        %v921 = vld [vmem:[%s808 + $0x4] sm:$0xf]
        %v922 = vld [vmem:[%s808 + $0x8] sm:$0xf]
        %v923 = vld [vmem:[%s808 + $0xc] sm:$0xf]
        %v924 = vld [vmem:[%s808 + $0x10] sm:$0xf]
        %v925 = vld [vmem:[%s808 + $0x14] sm:$0xf]
        %v926 = vld [vmem:[%s808 + $0x18] sm:$0xf]
        %v927 = vld [vmem:[%s808 + $0x1c] sm:$0xf]
        %v928 = vld [vmem:[%s808 + $0x20] sm:$0xf]
        %v929 = vld [vmem:[%s808 + $0x24] sm:$0xf]
        %v930 = vld [vmem:[%s808 + $0x28] sm:$0xf]
        %v931 = vld [vmem:[%s808 + $0x2c] sm:$0xf]
        %v932 = vld [vmem:[%s808 + $0x30] sm:$0xf]
        %v933 = vld [vmem:[%s808 + $0x34] sm:$0xf]
        %v934 = vld [vmem:[%s808 + $0x38] sm:$0xf]
        %v935 = vld [vmem:[%s808 + $0x3c] sm:$0xf]
        %v936 = vld [vmem:[%s811] sm:$0x1]
        %v937 = vld [vmem:[%s814] sm:$0x1]
        %v938 = vld [vmem:[%s817] sm:$0x1]
        %v939 = vld [vmem:[%s822] sm:$0xff]
        %v940 = vld [vmem:[%s822 + $0x8] sm:$0xff]
        %v941 = vld [vmem:[%s822 + $0x10] sm:$0xff]
        %v942 = vld [vmem:[%s822 + $0x18] sm:$0xff]
        %v943 = vld [vmem:[%s822 + $0x20] sm:$0xff]
        %v944 = vld [vmem:[%s822 + $0x28] sm:$0xff]
        %v945 = vld [vmem:[%s822 + $0x30] sm:$0xff]
        %v946 = vld [vmem:[%s822 + $0x38] sm:$0xff]
        %v947 = vld [vmem:[%s822 + $0x40] sm:$0xff]
        %v948 = vld [vmem:[%s822 + $0x48] sm:$0xff]
        %v949 = vld [vmem:[%s822 + $0x50] sm:$0xff]
        %v950 = vld [vmem:[%s822 + $0x58] sm:$0xff]
        %v951 = vld [vmem:[%s822 + $0x60] sm:$0xff]
        %v952 = vld [vmem:[%s822 + $0x68] sm:$0xff]
        %v953 = vld [vmem:[%s822 + $0x70] sm:$0xff]
        %v954 = vld [vmem:[%s822 + $0x78] sm:$0xff]
        %v955 = vld [vmem:[%s826] sm:$0x3]
        %v956 = vld [vmem:[%s831] sm:$0xf]
        %v957 = vld [vmem:[%s831 + $0x4] sm:$0xf]
        %v958 = vld [vmem:[%s831 + $0x8] sm:$0xf]
        %v959 = vld [vmem:[%s831 + $0xc] sm:$0xf]
        %v960 = vld [vmem:[%s831 + $0x10] sm:$0xf]
        %v961 = vld [vmem:[%s831 + $0x14] sm:$0xf]
        %v962 = vld [vmem:[%s831 + $0x18] sm:$0xf]
        %v963 = vld [vmem:[%s831 + $0x1c] sm:$0xf]
        %v964 = vld [vmem:[%s831 + $0x20] sm:$0xf]
        %v965 = vld [vmem:[%s831 + $0x24] sm:$0xf]
        %v966 = vld [vmem:[%s831 + $0x28] sm:$0xf]
        %v967 = vld [vmem:[%s831 + $0x2c] sm:$0xf]
        %v968 = vld [vmem:[%s831 + $0x30] sm:$0xf]
        %v969 = vld [vmem:[%s831 + $0x34] sm:$0xf]
        %v970 = vld [vmem:[%s831 + $0x38] sm:$0xf]
        %v971 = vld [vmem:[%s831 + $0x3c] sm:$0xf]
        %v972 = vld [vmem:[%s831 + $0x40] sm:$0xf]
        %v973 = vld [vmem:[%s831 + $0x44] sm:$0xf]
        %v974 = vld [vmem:[%s831 + $0x48] sm:$0xf]
        %v975 = vld [vmem:[%s831 + $0x4c] sm:$0xf]
        %v976 = vld [vmem:[%s831 + $0x50] sm:$0xf]
        %v977 = vld [vmem:[%s831 + $0x54] sm:$0xf]
        %v978 = vld [vmem:[%s831 + $0x58] sm:$0xf]
        %v979 = vld [vmem:[%s831 + $0x5c] sm:$0xf]
        %v980 = vld [vmem:[%s831 + $0x60] sm:$0xf]
        %v981 = vld [vmem:[%s831 + $0x64] sm:$0xf]
        %v982 = vld [vmem:[%s831 + $0x68] sm:$0xf]
        %v983 = vld [vmem:[%s831 + $0x6c] sm:$0xf]
        %v984 = vld [vmem:[%s831 + $0x70] sm:$0xf]
        %v985 = vld [vmem:[%s831 + $0x74] sm:$0xf]
        %v986 = vld [vmem:[%s831 + $0x78] sm:$0xf]
        %v987 = vld [vmem:[%s831 + $0x7c] sm:$0xf]
        %v988 = vld [vmem:[%s834] sm:$0x1]
        %989 = vadd.xlane.f32.xlu0 %v883
        %v990 = vpop.xlane.xlu0 %989
        %v991 = vrcp.pop 128.0
        %v992 = vmul.f32 %v990, %v991
        %v993 = vsub.f32 %v883, %v992
        %v994 = vmul.f32 %v993, %v993
        %995 = vadd.xlane.f32.xlu0 %v994
        %v996 = vpop.xlane.xlu0 %995
        %v997 = vmul.f32 %v996, %v991
        %v998 = vadd.f32 %v997, 1e-05
        %v999 = vrsqrt.pop %v998
        %v1000 = vmul.f32 %v993, %v999
        %v1002 = vlaneseq
        %v1003 = vshrl.u32 %v1002, 7
        %v1004 = vsub.s32 0, %v1003
        %v1005 = vrot.slane %v885, %v1004
        %v1007 = vmul.f32 %v1000, %v1005
        %v1009 = vlaneseq
        %v1010 = vshrl.u32 %v1009, 7
        %v1011 = vsub.s32 0, %v1010
        %v1012 = vrot.slane %v886, %v1011
        %v1014 = vadd.f32 %v1007, %v1012
        %v1015 = vpack.c.bf16 %v1014, %v1014
        %v1017 = vlaneseq
        %v1018 = vshrl.u32 %v1017, 7
        %v1019 = vsub.s32 0, %v1018
        %v1020 = vrot.slane %v919, %v1019
        %v1021 = vlaneseq
        %v1022 = vshrl.u32 %v1021, 7
        %v1023 = vsub.s32 1, %v1022
        %v1024 = vrot.slane %v919, %v1023
        %v1025 = vlaneseq
        %v1026 = vshrl.u32 %v1025, 7
        %v1027 = vsub.s32 2, %v1026
        %v1028 = vrot.slane %v919, %v1027
        %v1064 = vunpack.c.l.b16 %v887
        %v1065 = vunpack.c.h.b16 %v887
        %v1066 = vunpack.c.l.b16 %v888
        %v1067 = vunpack.c.l.b16 %v889
        %v1068 = vunpack.c.h.b16 %v889
        %v1069 = vunpack.c.l.b16 %v890
        %v1070 = vunpack.c.l.b16 %v891
        %v1071 = vunpack.c.h.b16 %v891
        %v1072 = vunpack.c.l.b16 %v892
        %v1073 = vunpack.c.l.b16 %v893
        %v1074 = vunpack.c.h.b16 %v893
        %v1075 = vunpack.c.l.b16 %v894
        %v1076 = vunpack.c.l.b16 %v895
        %v1077 = vunpack.c.h.b16 %v895
        %v1078 = vunpack.c.l.b16 %v896
        %v1079 = vunpack.c.l.b16 %v897
        %v1080 = vunpack.c.h.b16 %v897
        %v1081 = vunpack.c.l.b16 %v898
        %v1082 = vunpack.c.l.b16 %v899
        %v1083 = vunpack.c.h.b16 %v899
        %v1084 = vunpack.c.l.b16 %v900
        %v1085 = vunpack.c.l.b16 %v901
        %v1086 = vunpack.c.h.b16 %v901
        %v1087 = vunpack.c.l.b16 %v902
        %v1088 = vunpack.c.l.b16 %v903
        %v1089 = vunpack.c.h.b16 %v903
        %v1090 = vunpack.c.l.b16 %v904
        %v1091 = vunpack.c.l.b16 %v905
        %v1092 = vunpack.c.h.b16 %v905
        %v1093 = vunpack.c.l.b16 %v906
        %v1094 = vunpack.c.l.b16 %v907
        %v1095 = vunpack.c.h.b16 %v907
        %v1096 = vunpack.c.l.b16 %v908
        %v1097 = vunpack.c.l.b16 %v909
        %v1098 = vunpack.c.h.b16 %v909
        %v1099 = vunpack.c.l.b16 %v910
        %v1100 = vunpack.c.l.b16 %v911
        %v1101 = vunpack.c.h.b16 %v911
        %v1102 = vunpack.c.l.b16 %v912
        %v1103 = vunpack.c.l.b16 %v913
        %v1104 = vunpack.c.h.b16 %v913
        %v1105 = vunpack.c.l.b16 %v914
        %v1106 = vunpack.c.l.b16 %v915
        %v1107 = vunpack.c.h.b16 %v915
        %v1108 = vunpack.c.l.b16 %v916
        %v1109 = vunpack.c.l.b16 %v917
        %v1110 = vunpack.c.h.b16 %v917
        %v1111 = vunpack.c.l.b16 %v918
        %v1112 = vpack.c.b16 %v1067, %v1064
        %v1113 = vpack.c.b16 %v1068, %v1065
        %v1114 = vpack.c.b16 %v1069, %v1066
        %v1115 = vpack.c.b16 %v1073, %v1070
        %v1116 = vpack.c.b16 %v1074, %v1071
        %v1117 = vpack.c.b16 %v1075, %v1072
        %v1118 = vpack.c.b16 %v1079, %v1076
        %v1119 = vpack.c.b16 %v1080, %v1077
        %v1120 = vpack.c.b16 %v1081, %v1078
        %v1121 = vpack.c.b16 %v1085, %v1082
        %v1122 = vpack.c.b16 %v1086, %v1083
        %v1123 = vpack.c.b16 %v1087, %v1084
        %v1124 = vpack.c.b16 %v1091, %v1088
        %v1125 = vpack.c.b16 %v1092, %v1089
        %v1126 = vpack.c.b16 %v1093, %v1090
        %v1127 = vpack.c.b16 %v1097, %v1094
        %v1128 = vpack.c.b16 %v1098, %v1095
        %v1129 = vpack.c.b16 %v1099, %v1096
        %v1130 = vpack.c.b16 %v1103, %v1100
        %v1131 = vpack.c.b16 %v1104, %v1101
        %v1132 = vpack.c.b16 %v1105, %v1102
        %v1133 = vpack.c.b16 %v1109, %v1106
        %v1134 = vpack.c.b16 %v1110, %v1107
        %v1135 = vpack.c.b16 %v1111, %v1108
        %1160 = vmatprep.subr.bf16.mxu0 %v1113
        %1161 = vmatpush1.bf16.msra.mxu0 %v1112
        %1162 = vmatprep.subr.bf16.mxu0 %v1116
        %1163 = vmatpush1.bf16.msra.mxu0 %v1115
        %1164 = vmatprep.subr.bf16.mxu0 %v1119
        %1165 = vmatpush1.bf16.msra.mxu0 %v1118
        %1166 = vmatprep.subr.bf16.mxu0 %v1122
        %1167 = vmatpush1.bf16.msra.mxu0 %v1121
        %1168 = vmatprep.subr.bf16.mxu0 %v1125
        %1169 = vmatpush1.bf16.msra.mxu0 %v1124
        %1170 = vmatprep.subr.bf16.mxu0 %v1128
        %1171 = vmatpush1.bf16.msra.mxu0 %v1127
        %1172 = vmatprep.subr.bf16.mxu0 %v1131
        %1173 = vmatpush1.bf16.msra.mxu0 %v1130
        %1174 = vmatprep.subr.bf16.mxu0 %v1134
        %1175 = vmatpush1.bf16.msra.mxu0 %v1133
        %1176 = vmatprep.subr.bf16.mxu0 0
        %1177 = vmatpush1.bf16.msra.mxu0 0
        %1178 = vmatprep.subr.bf16.mxu0 0
        %1179 = vmatpush1.bf16.msra.mxu0 0
        %1180 = vmatprep.subr.bf16.mxu0 0
        %1181 = vmatpush1.bf16.msra.mxu0 0
        %1182 = vmatprep.subr.bf16.mxu0 0
        %1183 = vmatpush1.bf16.msra.mxu0 0
        %1184 = vmatprep.subr.bf16.mxu0 0
        %1185 = vmatpush1.bf16.msra.mxu0 0
        %1186 = vmatprep.subr.bf16.mxu0 0
        %1187 = vmatpush1.bf16.msra.mxu0 0
        %1188 = vmatprep.subr.bf16.mxu0 0
        %1189 = vmatpush1.bf16.msra.mxu0 0
        %1190 = vmatprep.subr.bf16.mxu0 0
        %1191 = vmatpush1.bf16.msra.mxu0 0
        %1192 = vmatprep.mubr.bf16.mxu0 0
        %1193 = vmatmul.mubr.bf16.gmra.mrb[0].mxu0 %v1015
        %v1194 = vpop.f32.mrb[0].mxu0
        %v1195 = vadd.f32 %v1020, %v1194
        %v1196 = vpop.f32.mrb[0].mxu0
        %v1197 = vadd.f32 %v1024, %v1196
        %v1198 = vpop.f32.mrb[0].mxu0
        %v1199 = vpop.f32.mrb[0].mxu0
        %1200 = vdwg.mxu0
        %1201 = vmatprep.subr.bf16.mxu0 0
        %1202 = vmatpush1.bf16.msra.mxu0 %v1114
        %1203 = vmatprep.subr.bf16.mxu0 0
        %1204 = vmatpush1.bf16.msra.mxu0 %v1117
        %1205 = vmatprep.subr.bf16.mxu0 0
        %1206 = vmatpush1.bf16.msra.mxu0 %v1120
        %1207 = vmatprep.subr.bf16.mxu0 0
        %1208 = vmatpush1.bf16.msra.mxu0 %v1123
        %1209 = vmatprep.subr.bf16.mxu0 0
        %1210 = vmatpush1.bf16.msra.mxu0 %v1126
        %1211 = vmatprep.subr.bf16.mxu0 0
        %1212 = vmatpush1.bf16.msra.mxu0 %v1129
        %1213 = vmatprep.subr.bf16.mxu0 0
        %1214 = vmatpush1.bf16.msra.mxu0 %v1132
        %1215 = vmatprep.subr.bf16.mxu0 0
        %1216 = vmatpush1.bf16.msra.mxu0 %v1135
        %1217 = vmatprep.subr.bf16.mxu0 0
        %1218 = vmatpush1.bf16.msra.mxu0 0
        %1219 = vmatprep.subr.bf16.mxu0 0
        %1220 = vmatpush1.bf16.msra.mxu0 0
        %1221 = vmatprep.subr.bf16.mxu0 0
        %1222 = vmatpush1.bf16.msra.mxu0 0
        %1223 = vmatprep.subr.bf16.mxu0 0
        %1224 = vmatpush1.bf16.msra.mxu0 0
        %1225 = vmatprep.subr.bf16.mxu0 0
        %1226 = vmatpush1.bf16.msra.mxu0 0
        %1227 = vmatprep.subr.bf16.mxu0 0
        %1228 = vmatpush1.bf16.msra.mxu0 0
        %1229 = vmatprep.subr.bf16.mxu0 0
        %1230 = vmatpush1.bf16.msra.mxu0 0
        %1231 = vmatprep.subr.bf16.mxu0 0
        %1232 = vmatpush1.bf16.msra.mxu0 0
        %1233 = vmatprep.mubr.bf16.mxu0 0
        %1234 = vmatmul.mubr.bf16.gmra.mrb[0].mxu0 %v1015
        %v1235 = vpop.f32.mrb[0].mxu0
        %v1236 = vadd.f32 %v1028, %v1235
        %v1237 = vpop.f32.mrb[0].mxu0
        %v1238 = vpop.f32.mrb[0].mxu0
        %v1239 = vpop.f32.mrb[0].mxu0
        %1240 = vdwg.mxu0
        %1241 = vxpose.xlu0.b32.start [1/16] %v1195, 128
        %1242 = vxpose.xlu0.b32.cont [2/16] 0.0, 128
        %1243 = vxpose.xlu0.b32.cont [3/16] 0.0, 128
        %1244 = vxpose.xlu0.b32.cont [4/16] 0.0, 128
        %1245 = vxpose.xlu0.b32.cont [5/16] 0.0, 128
        %1246 = vxpose.xlu0.b32.cont [6/16] 0.0, 128
        %1247 = vxpose.xlu0.b32.cont [7/16] 0.0, 128
        %1248 = vxpose.xlu0.b32.cont [8/16] 0.0, 128
        %1249 = vxpose.xlu0.b32.cont [9/16] 0.0, 128
        %1250 = vxpose.xlu0.b32.cont [10/16] 0.0, 128
        %1251 = vxpose.xlu0.b32.cont [11/16] 0.0, 128
        %1252 = vxpose.xlu0.b32.cont [12/16] 0.0, 128
        %1253 = vxpose.xlu0.b32.cont [13/16] 0.0, 128
        %1254 = vxpose.xlu0.b32.cont [14/16] 0.0, 128
        %1255 = vxpose.xlu0.b32.cont [15/16] 0.0, 128
        %1256 = vxpose.xlu0.b32.end [16/16] 0.0, 128
        %v1257 = vpop.trf.xlu0
        %v1258 = vpop.trf.xlu0
        %v1259 = vpop.trf.xlu0
        %v1260 = vpop.trf.xlu0
        %v1261 = vpop.trf.xlu0
        %v1262 = vpop.trf.xlu0
        %v1263 = vpop.trf.xlu0
        %v1264 = vpop.trf.xlu0
        %v1265 = vpop.trf.xlu0
        %v1266 = vpop.trf.xlu0
        %v1267 = vpop.trf.xlu0
        %v1268 = vpop.trf.xlu0
        %v1269 = vpop.trf.xlu0
        %v1270 = vpop.trf.xlu0
        %v1271 = vpop.trf.xlu0
        %v1272 = vpop.trf.xlu0
        %1273 = vxpose.xlu0.b32.start [1/16] %v1197, 128
        %1274 = vxpose.xlu0.b32.cont [2/16] 0.0, 128
        %1275 = vxpose.xlu0.b32.cont [3/16] 0.0, 128
        %1276 = vxpose.xlu0.b32.cont [4/16] 0.0, 128
        %1277 = vxpose.xlu0.b32.cont [5/16] 0.0, 128
        %1278 = vxpose.xlu0.b32.cont [6/16] 0.0, 128
        %1279 = vxpose.xlu0.b32.cont [7/16] 0.0, 128
        %1280 = vxpose.xlu0.b32.cont [8/16] 0.0, 128
        %1281 = vxpose.xlu0.b32.cont [9/16] 0.0, 128
        %1282 = vxpose.xlu0.b32.cont [10/16] 0.0, 128
        %1283 = vxpose.xlu0.b32.cont [11/16] 0.0, 128
        %1284 = vxpose.xlu0.b32.cont [12/16] 0.0, 128
        %1285 = vxpose.xlu0.b32.cont [13/16] 0.0, 128
        %1286 = vxpose.xlu0.b32.cont [14/16] 0.0, 128
        %1287 = vxpose.xlu0.b32.cont [15/16] 0.0, 128
        %1288 = vxpose.xlu0.b32.end [16/16] 0.0, 128
        %v1289 = vpop.trf.xlu0
        %v1290 = vpop.trf.xlu0
        %v1291 = vpop.trf.xlu0
        %v1292 = vpop.trf.xlu0
        %v1293 = vpop.trf.xlu0
        %v1294 = vpop.trf.xlu0
        %v1295 = vpop.trf.xlu0
        %v1296 = vpop.trf.xlu0
        %v1297 = vpop.trf.xlu0
        %v1298 = vpop.trf.xlu0
        %v1299 = vpop.trf.xlu0
        %v1300 = vpop.trf.xlu0
        %v1301 = vpop.trf.xlu0
        %v1302 = vpop.trf.xlu0
        %v1303 = vpop.trf.xlu0
        %v1304 = vpop.trf.xlu0
        %1305 = vxpose.xlu0.b32.start [1/16] %v1236, 128
        %1306 = vxpose.xlu0.b32.cont [2/16] 0.0, 128
        %1307 = vxpose.xlu0.b32.cont [3/16] 0.0, 128
        %1308 = vxpose.xlu0.b32.cont [4/16] 0.0, 128
        %1309 = vxpose.xlu0.b32.cont [5/16] 0.0, 128
        %1310 = vxpose.xlu0.b32.cont [6/16] 0.0, 128
        %1311 = vxpose.xlu0.b32.cont [7/16] 0.0, 128
        %1312 = vxpose.xlu0.b32.cont [8/16] 0.0, 128
        %1313 = vxpose.xlu0.b32.cont [9/16] 0.0, 128
        %1314 = vxpose.xlu0.b32.cont [10/16] 0.0, 128
        %1315 = vxpose.xlu0.b32.cont [11/16] 0.0, 128
        %1316 = vxpose.xlu0.b32.cont [12/16] 0.0, 128
        %1317 = vxpose.xlu0.b32.cont [13/16] 0.0, 128
        %1318 = vxpose.xlu0.b32.cont [14/16] 0.0, 128
        %1319 = vxpose.xlu0.b32.cont [15/16] 0.0, 128
        %1320 = vxpose.xlu0.b32.end [16/16] 0.0, 128
        %v1321 = vpop.trf.xlu0
        %v1322 = vpop.trf.xlu0
        %v1323 = vpop.trf.xlu0
        %v1324 = vpop.trf.xlu0
        %v1325 = vpop.trf.xlu0
        %v1326 = vpop.trf.xlu0
        %v1327 = vpop.trf.xlu0
        %v1328 = vpop.trf.xlu0
        %v1329 = vpop.trf.xlu0
        %v1330 = vpop.trf.xlu0
        %v1331 = vpop.trf.xlu0
        %v1332 = vpop.trf.xlu0
        %v1333 = vpop.trf.xlu0
        %v1334 = vpop.trf.xlu0
        %v1335 = vpop.trf.xlu0
        %v1336 = vpop.trf.xlu0
        %1337 = vxpose.xlu0.b32.start [1/16] %v1257, 128
        %1338 = vxpose.xlu0.b32.cont [2/16] %v1258, 128
        %1339 = vxpose.xlu0.b32.cont [3/16] %v1259, 128
        %1340 = vxpose.xlu0.b32.cont [4/16] %v1260, 128
        %1341 = vxpose.xlu0.b32.cont [5/16] 0.0, 128
        %1342 = vxpose.xlu0.b32.cont [6/16] 0.0, 128
        %1343 = vxpose.xlu0.b32.cont [7/16] 0.0, 128
        %1344 = vxpose.xlu0.b32.cont [8/16] 0.0, 128
        %1345 = vxpose.xlu0.b32.cont [9/16] 0.0, 128
        %1346 = vxpose.xlu0.b32.cont [10/16] 0.0, 128
        %1347 = vxpose.xlu0.b32.cont [11/16] 0.0, 128
        %1348 = vxpose.xlu0.b32.cont [12/16] 0.0, 128
        %1349 = vxpose.xlu0.b32.cont [13/16] 0.0, 128
        %1350 = vxpose.xlu0.b32.cont [14/16] 0.0, 128
        %1351 = vxpose.xlu0.b32.cont [15/16] 0.0, 128
        %1352 = vxpose.xlu0.b32.end [16/16] 0.0, 128
        %v1353 = vpop.trf.xlu0
        %v1354 = vpop.trf.xlu0
        %v1355 = vpop.trf.xlu0
        %v1356 = vpop.trf.xlu0
        %v1357 = vpop.trf.xlu0
        %v1358 = vpop.trf.xlu0
        %v1359 = vpop.trf.xlu0
        %v1360 = vpop.trf.xlu0
        %v1361 = vpop.trf.xlu0
        %v1362 = vpop.trf.xlu0
        %v1363 = vpop.trf.xlu0
        %v1364 = vpop.trf.xlu0
        %v1365 = vpop.trf.xlu0
        %v1366 = vpop.trf.xlu0
        %v1367 = vpop.trf.xlu0
        %v1368 = vpop.trf.xlu0
        %1369 = vxpose.xlu0.b32.start [1/16] %v1261, 128
        %1370 = vxpose.xlu0.b32.cont [2/16] %v1262, 128
        %1371 = vxpose.xlu0.b32.cont [3/16] %v1263, 128
        %1372 = vxpose.xlu0.b32.cont [4/16] %v1264, 128
        %1373 = vxpose.xlu0.b32.cont [5/16] 0.0, 128
        %1374 = vxpose.xlu0.b32.cont [6/16] 0.0, 128
        %1375 = vxpose.xlu0.b32.cont [7/16] 0.0, 128
        %1376 = vxpose.xlu0.b32.cont [8/16] 0.0, 128
        %1377 = vxpose.xlu0.b32.cont [9/16] 0.0, 128
        %1378 = vxpose.xlu0.b32.cont [10/16] 0.0, 128
        %1379 = vxpose.xlu0.b32.cont [11/16] 0.0, 128
        %1380 = vxpose.xlu0.b32.cont [12/16] 0.0, 128
        %1381 = vxpose.xlu0.b32.cont [13/16] 0.0, 128
        %1382 = vxpose.xlu0.b32.cont [14/16] 0.0, 128
        %1383 = vxpose.xlu0.b32.cont [15/16] 0.0, 128
        %1384 = vxpose.xlu0.b32.end [16/16] 0.0, 128
        %v1385 = vpop.trf.xlu0
        %v1386 = vpop.trf.xlu0
        %v1387 = vpop.trf.xlu0
        %v1388 = vpop.trf.xlu0
        %v1389 = vpop.trf.xlu0
        %v1390 = vpop.trf.xlu0
        %v1391 = vpop.trf.xlu0
        %v1392 = vpop.trf.xlu0
        %v1393 = vpop.trf.xlu0
        %v1394 = vpop.trf.xlu0
        %v1395 = vpop.trf.xlu0
        %v1396 = vpop.trf.xlu0
        %v1397 = vpop.trf.xlu0
        %v1398 = vpop.trf.xlu0
        %v1399 = vpop.trf.xlu0
        %v1400 = vpop.trf.xlu0
        %1401 = vxpose.xlu0.b32.start [1/16] %v1265, 128
        %1402 = vxpose.xlu0.b32.cont [2/16] %v1266, 128
        %1403 = vxpose.xlu0.b32.cont [3/16] %v1267, 128
        %1404 = vxpose.xlu0.b32.cont [4/16] %v1268, 128
        %1405 = vxpose.xlu0.b32.cont [5/16] 0.0, 128
        %1406 = vxpose.xlu0.b32.cont [6/16] 0.0, 128
        %1407 = vxpose.xlu0.b32.cont [7/16] 0.0, 128
        %1408 = vxpose.xlu0.b32.cont [8/16] 0.0, 128
        %1409 = vxpose.xlu0.b32.cont [9/16] 0.0, 128
        %1410 = vxpose.xlu0.b32.cont [10/16] 0.0, 128
        %1411 = vxpose.xlu0.b32.cont [11/16] 0.0, 128
        %1412 = vxpose.xlu0.b32.cont [12/16] 0.0, 128
        %1413 = vxpose.xlu0.b32.cont [13/16] 0.0, 128
        %1414 = vxpose.xlu0.b32.cont [14/16] 0.0, 128
        %1415 = vxpose.xlu0.b32.cont [15/16] 0.0, 128
        %1416 = vxpose.xlu0.b32.end [16/16] 0.0, 128
        %v1417 = vpop.trf.xlu0
        %v1418 = vpop.trf.xlu0
        %v1419 = vpop.trf.xlu0
        %v1420 = vpop.trf.xlu0
        %v1421 = vpop.trf.xlu0
        %v1422 = vpop.trf.xlu0
        %v1423 = vpop.trf.xlu0
        %v1424 = vpop.trf.xlu0
        %v1425 = vpop.trf.xlu0
        %v1426 = vpop.trf.xlu0
        %v1427 = vpop.trf.xlu0
        %v1428 = vpop.trf.xlu0
        %v1429 = vpop.trf.xlu0
        %v1430 = vpop.trf.xlu0
        %v1431 = vpop.trf.xlu0
        %v1432 = vpop.trf.xlu0
        %1433 = vxpose.xlu0.b32.start [1/16] %v1269, 128
        %1434 = vxpose.xlu0.b32.cont [2/16] %v1270, 128
        %1435 = vxpose.xlu0.b32.cont [3/16] %v1271, 128
        %1436 = vxpose.xlu0.b32.cont [4/16] %v1272, 128
        %1437 = vxpose.xlu0.b32.cont [5/16] 0.0, 128
        %1438 = vxpose.xlu0.b32.cont [6/16] 0.0, 128
        %1439 = vxpose.xlu0.b32.cont [7/16] 0.0, 128
        %1440 = vxpose.xlu0.b32.cont [8/16] 0.0, 128
        %1441 = vxpose.xlu0.b32.cont [9/16] 0.0, 128
        %1442 = vxpose.xlu0.b32.cont [10/16] 0.0, 128
        %1443 = vxpose.xlu0.b32.cont [11/16] 0.0, 128
        %1444 = vxpose.xlu0.b32.cont [12/16] 0.0, 128
        %1445 = vxpose.xlu0.b32.cont [13/16] 0.0, 128
        %1446 = vxpose.xlu0.b32.cont [14/16] 0.0, 128
        %1447 = vxpose.xlu0.b32.cont [15/16] 0.0, 128
        %1448 = vxpose.xlu0.b32.end [16/16] 0.0, 128
        %v1449 = vpop.trf.xlu0
        %v1450 = vpop.trf.xlu0
        %v1451 = vpop.trf.xlu0
        %v1452 = vpop.trf.xlu0
        %v1453 = vpop.trf.xlu0
        %v1454 = vpop.trf.xlu0
        %v1455 = vpop.trf.xlu0
        %v1456 = vpop.trf.xlu0
        %v1457 = vpop.trf.xlu0
        %v1458 = vpop.trf.xlu0
        %v1459 = vpop.trf.xlu0
        %v1460 = vpop.trf.xlu0
        %v1461 = vpop.trf.xlu0
        %v1462 = vpop.trf.xlu0
        %v1463 = vpop.trf.xlu0
        %v1464 = vpop.trf.xlu0
        %v1465 = vpack.c.bf16 %v1353, %v1353
        %v1466 = vpack.c.bf16 %v1385, %v1385
        %v1467 = vpack.c.bf16 %v1417, %v1417
        %v1468 = vpack.c.bf16 %v1449, %v1449
        %v1469 = vpack.c.bf16 %v1290, %v1289
        %v1470 = vpack.c.bf16 %v1292, %v1291
        %v1471 = vpack.c.bf16 %v1294, %v1293
        %v1472 = vpack.c.bf16 %v1296, %v1295
        %v1473 = vpack.c.bf16 %v1298, %v1297
        %v1474 = vpack.c.bf16 %v1300, %v1299
        %v1475 = vpack.c.bf16 %v1302, %v1301
        %v1476 = vpack.c.bf16 %v1304, %v1303
        %v1477 = vpack.c.bf16 %v1322, %v1321
        %v1478 = vpack.c.bf16 %v1324, %v1323
        %v1479 = vpack.c.bf16 %v1326, %v1325
        %v1480 = vpack.c.bf16 %v1328, %v1327
        %v1481 = vpack.c.bf16 %v1330, %v1329
        %v1482 = vpack.c.bf16 %v1332, %v1331
        %v1483 = vpack.c.bf16 %v1334, %v1333
        %v1484 = vpack.c.bf16 %v1336, %v1335
        %vm1485 = vcmp.eq.f32.partialorder %v884, 0.0
        %v1486 = vsel %vm1485, -1e+09, 0.0
        %vm1487 = vcmask 261120
        %v1489 = vsel %vm1487, %v1465, 0
        %1491 = vmatprep.subr.bf16.mxu0 0
        %1492 = vmatpush1.bf16.msra.mxu0 %v1469
        %1493 = vmatprep.subr.bf16.mxu0 0
        %1494 = vmatpush1.bf16.msra.mxu0 %v1470
        %1495 = vmatprep.subr.bf16.mxu0 0
        %1496 = vmatpush1.bf16.msra.mxu0 0
        %1497 = vmatprep.subr.bf16.mxu0 0
        %1498 = vmatpush1.bf16.msra.mxu0 0
        %1499 = vmatprep.subr.bf16.mxu0 0
        %1500 = vmatpush1.bf16.msra.mxu0 0
        %1501 = vmatprep.subr.bf16.mxu0 0
        %1502 = vmatpush1.bf16.msra.mxu0 0
        %1503 = vmatprep.subr.bf16.mxu0 0
        %1504 = vmatpush1.bf16.msra.mxu0 0
        %1505 = vmatprep.subr.bf16.mxu0 0
        %1506 = vmatpush1.bf16.msra.mxu0 0
        %1507 = vmatprep.subr.bf16.mxu0 0
        %1508 = vmatpush1.bf16.msra.mxu0 0
        %1509 = vmatprep.subr.bf16.mxu0 0
        %1510 = vmatpush1.bf16.msra.mxu0 0
        %1511 = vmatprep.subr.bf16.mxu0 0
        %1512 = vmatpush1.bf16.msra.mxu0 0
        %1513 = vmatprep.subr.bf16.mxu0 0
        %1514 = vmatpush1.bf16.msra.mxu0 0
        %1515 = vmatprep.subr.bf16.mxu0 0
        %1516 = vmatpush1.bf16.msra.mxu0 0
        %1517 = vmatprep.subr.bf16.mxu0 0
        %1518 = vmatpush1.bf16.msra.mxu0 0
        %1519 = vmatprep.subr.bf16.mxu0 0
        %1520 = vmatpush1.bf16.msra.mxu0 0
        %1521 = vmatprep.subr.bf16.mxu0 0
        %1522 = vmatpush1.bf16.msra.mxu0 0
        %1523 = vmatprep.mubr.bf16.mxu0 0
        %1524 = vmatmul.mubr.bf16.gmra.mrb[0].mxu0 %v1489
        %v1525 = vpop.f32.mrb[0].mxu0
        %v1526 = vadd.f32 0.0, %v1525
        %v1527 = vpop.f32.mrb[0].mxu0
        %v1528 = vpop.f32.mrb[0].mxu0
        %v1529 = vpop.f32.mrb[0].mxu0
        %1530 = vdwg.mxu0
        %v1532 = vsel %vm1487, %v1466, 0
        %1534 = vmatprep.subr.bf16.mxu0 0
        %1535 = vmatpush1.bf16.msra.mxu0 %v1471
        %1536 = vmatprep.subr.bf16.mxu0 0
        %1537 = vmatpush1.bf16.msra.mxu0 %v1472
        %1538 = vmatprep.subr.bf16.mxu0 0
        %1539 = vmatpush1.bf16.msra.mxu0 0
        %1540 = vmatprep.subr.bf16.mxu0 0
        %1541 = vmatpush1.bf16.msra.mxu0 0
        %1542 = vmatprep.subr.bf16.mxu0 0
        %1543 = vmatpush1.bf16.msra.mxu0 0
        %1544 = vmatprep.subr.bf16.mxu0 0
        %1545 = vmatpush1.bf16.msra.mxu0 0
        %1546 = vmatprep.subr.bf16.mxu0 0
        %1547 = vmatpush1.bf16.msra.mxu0 0
        %1548 = vmatprep.subr.bf16.mxu0 0
        %1549 = vmatpush1.bf16.msra.mxu0 0
        %1550 = vmatprep.subr.bf16.mxu0 0
        %1551 = vmatpush1.bf16.msra.mxu0 0
        %1552 = vmatprep.subr.bf16.mxu0 0
        %1553 = vmatpush1.bf16.msra.mxu0 0
        %1554 = vmatprep.subr.bf16.mxu0 0
        %1555 = vmatpush1.bf16.msra.mxu0 0
        %1556 = vmatprep.subr.bf16.mxu0 0
        %1557 = vmatpush1.bf16.msra.mxu0 0
        %1558 = vmatprep.subr.bf16.mxu0 0
        %1559 = vmatpush1.bf16.msra.mxu0 0
        %1560 = vmatprep.subr.bf16.mxu0 0
        %1561 = vmatpush1.bf16.msra.mxu0 0
        %1562 = vmatprep.subr.bf16.mxu0 0
        %1563 = vmatpush1.bf16.msra.mxu0 0
        %1564 = vmatprep.subr.bf16.mxu0 0
        %1565 = vmatpush1.bf16.msra.mxu0 0
        %1566 = vmatprep.mubr.bf16.mxu0 0
        %1567 = vmatmul.mubr.bf16.gmra.mrb[0].mxu0 %v1532
        %v1568 = vpop.f32.mrb[0].mxu0
        %v1569 = vadd.f32 0.0, %v1568
        %v1570 = vpop.f32.mrb[0].mxu0
        %v1571 = vpop.f32.mrb[0].mxu0
        %v1572 = vpop.f32.mrb[0].mxu0
        %1573 = vdwg.mxu0
        %v1575 = vsel %vm1487, %v1467, 0
        %1577 = vmatprep.subr.bf16.mxu0 0
        %1578 = vmatpush1.bf16.msra.mxu0 %v1473
        %1579 = vmatprep.subr.bf16.mxu0 0
        %1580 = vmatpush1.bf16.msra.mxu0 %v1474
        %1581 = vmatprep.subr.bf16.mxu0 0
        %1582 = vmatpush1.bf16.msra.mxu0 0
        %1583 = vmatprep.subr.bf16.mxu0 0
        %1584 = vmatpush1.bf16.msra.mxu0 0
        %1585 = vmatprep.subr.bf16.mxu0 0
        %1586 = vmatpush1.bf16.msra.mxu0 0
        %1587 = vmatprep.subr.bf16.mxu0 0
        %1588 = vmatpush1.bf16.msra.mxu0 0
        %1589 = vmatprep.subr.bf16.mxu0 0
        %1590 = vmatpush1.bf16.msra.mxu0 0
        %1591 = vmatprep.subr.bf16.mxu0 0
        %1592 = vmatpush1.bf16.msra.mxu0 0
        %1593 = vmatprep.subr.bf16.mxu0 0
        %1594 = vmatpush1.bf16.msra.mxu0 0
        %1595 = vmatprep.subr.bf16.mxu0 0
        %1596 = vmatpush1.bf16.msra.mxu0 0
        %1597 = vmatprep.subr.bf16.mxu0 0
        %1598 = vmatpush1.bf16.msra.mxu0 0
        %1599 = vmatprep.subr.bf16.mxu0 0
        %1600 = vmatpush1.bf16.msra.mxu0 0
        %1601 = vmatprep.subr.bf16.mxu0 0
        %1602 = vmatpush1.bf16.msra.mxu0 0
        %1603 = vmatprep.subr.bf16.mxu0 0
        %1604 = vmatpush1.bf16.msra.mxu0 0
        %1605 = vmatprep.subr.bf16.mxu0 0
        %1606 = vmatpush1.bf16.msra.mxu0 0
        %1607 = vmatprep.subr.bf16.mxu0 0
        %1608 = vmatpush1.bf16.msra.mxu0 0
        %1609 = vmatprep.mubr.bf16.mxu0 0
        %1610 = vmatmul.mubr.bf16.gmra.mrb[0].mxu0 %v1575
        %v1611 = vpop.f32.mrb[0].mxu0
        %v1612 = vadd.f32 0.0, %v1611
        %v1613 = vpop.f32.mrb[0].mxu0
        %v1614 = vpop.f32.mrb[0].mxu0
        %v1615 = vpop.f32.mrb[0].mxu0
        %1616 = vdwg.mxu0
        %v1618 = vsel %vm1487, %v1468, 0
        %1620 = vmatprep.subr.bf16.mxu0 0
        %1621 = vmatpush1.bf16.msra.mxu0 %v1475
        %1622 = vmatprep.subr.bf16.mxu0 0
        %1623 = vmatpush1.bf16.msra.mxu0 %v1476
        %1624 = vmatprep.subr.bf16.mxu0 0
        %1625 = vmatpush1.bf16.msra.mxu0 0
        %1626 = vmatprep.subr.bf16.mxu0 0
        %1627 = vmatpush1.bf16.msra.mxu0 0
        %1628 = vmatprep.subr.bf16.mxu0 0
        %1629 = vmatpush1.bf16.msra.mxu0 0
        %1630 = vmatprep.subr.bf16.mxu0 0
        %1631 = vmatpush1.bf16.msra.mxu0 0
        %1632 = vmatprep.subr.bf16.mxu0 0
        %1633 = vmatpush1.bf16.msra.mxu0 0
        %1634 = vmatprep.subr.bf16.mxu0 0
        %1635 = vmatpush1.bf16.msra.mxu0 0
        %1636 = vmatprep.subr.bf16.mxu0 0
        %1637 = vmatpush1.bf16.msra.mxu0 0
        %1638 = vmatprep.subr.bf16.mxu0 0
        %1639 = vmatpush1.bf16.msra.mxu0 0
        %1640 = vmatprep.subr.bf16.mxu0 0
        %1641 = vmatpush1.bf16.msra.mxu0 0
        %1642 = vmatprep.subr.bf16.mxu0 0
        %1643 = vmatpush1.bf16.msra.mxu0 0
        %1644 = vmatprep.subr.bf16.mxu0 0
        %1645 = vmatpush1.bf16.msra.mxu0 0
        %1646 = vmatprep.subr.bf16.mxu0 0
        %1647 = vmatpush1.bf16.msra.mxu0 0
        %1648 = vmatprep.subr.bf16.mxu0 0
        %1649 = vmatpush1.bf16.msra.mxu0 0
        %1650 = vmatprep.subr.bf16.mxu0 0
        %1651 = vmatpush1.bf16.msra.mxu0 0
        %1652 = vmatprep.mubr.bf16.mxu0 0
        %1653 = vmatmul.mubr.bf16.gmra.mrb[0].mxu0 %v1618
        %v1654 = vpop.f32.mrb[0].mxu0
        %v1655 = vadd.f32 0.0, %v1654
        %v1656 = vpop.f32.mrb[0].mxu0
        %v1657 = vpop.f32.mrb[0].mxu0
        %v1658 = vpop.f32.mrb[0].mxu0
        %1659 = vdwg.mxu0
        %v1660 = vmul.f32 %v1526, 0.17677669
        %v1661 = vmul.f32 %v1569, 0.17677669
        %v1662 = vmul.f32 %v1612, 0.17677669
        %v1663 = vmul.f32 %v1655, 0.17677669
        %v1665 = vlaneseq
        %v1666 = vshrl.u32 %v1665, 7
        %v1667 = vsub.s32 0, %v1666
        %v1668 = vrot.slane %v1486, %v1667
        %v1670 = vadd.f32 %v1660, %v1668
        %v1671 = vadd.f32 %v1661, %v1668
        %v1672 = vadd.f32 %v1662, %v1668
        %v1673 = vadd.f32 %v1663, %v1668
        %vm1674 = vcmask 64512
        %v1675 = vsel %vm1674, %v1670, -inf
        %1676 = vmax.xlane.f32.xlu0 %v1675
        %v1677 = vpop.xlane.xlu0 %1676
        %v1678 = vsel %vm1674, %v1671, -inf
        %1679 = vmax.xlane.f32.xlu0 %v1678
        %v1680 = vpop.xlane.xlu0 %1679
        %v1681 = vsel %vm1674, %v1672, -inf
        %1682 = vmax.xlane.f32.xlu0 %v1681
        %v1683 = vpop.xlane.xlu0 %1682
        %v1684 = vsel %vm1674, %v1673, -inf
        %1685 = vmax.xlane.f32.xlu0 %v1684
        %v1686 = vpop.xlane.xlu0 %1685
        %v1687 = vsub.f32 %v1670, %v1677
        %v1688 = vsub.f32 %v1671, %v1680
        %v1689 = vsub.f32 %v1672, %v1683
        %v1690 = vsub.f32 %v1673, %v1686
        %v1691 = vmul.f32 %v1687, 1.442695
        %v1692 = vpow.pop %v1691
        %v1693 = vmul.f32 %v1688, 1.442695
        %v1694 = vpow.pop %v1693
        %v1695 = vmul.f32 %v1689, 1.442695
        %v1696 = vpow.pop %v1695
        %v1697 = vmul.f32 %v1690, 1.442695
        %v1698 = vpow.pop %v1697
        %v1699 = vsel %vm1674, %v1692, 0.0
        %1700 = vadd.xlane.f32.xlu0 %v1699
        %v1701 = vpop.xlane.xlu0 %1700
        %v1702 = vsel %vm1674, %v1694, 0.0
        %1703 = vadd.xlane.f32.xlu0 %v1702
        %v1704 = vpop.xlane.xlu0 %1703
        %v1705 = vsel %vm1674, %v1696, 0.0
        %1706 = vadd.xlane.f32.xlu0 %v1705
        %v1707 = vpop.xlane.xlu0 %1706
        %v1708 = vsel %vm1674, %v1698, 0.0
        %1709 = vadd.xlane.f32.xlu0 %v1708
        %v1710 = vpop.xlane.xlu0 %1709
        %v1711 = vrcp.pop %v1701
        %v1712 = vrcp.pop %v1704
        %v1713 = vrcp.pop %v1707
        %v1714 = vrcp.pop %v1710
        %v1715 = vmul.f32 %v1692, %v1711
        %v1716 = vmul.f32 %v1694, %v1712
        %v1717 = vmul.f32 %v1696, %v1713
        %v1718 = vmul.f32 %v1698, %v1714
        %v1719 = vpack.c.bf16 %v1715, %v1715
        %v1720 = vpack.c.bf16 %v1716, %v1716
        %v1721 = vpack.c.bf16 %v1717, %v1717
        %v1722 = vpack.c.bf16 %v1718, %v1718
        %v1724 = vsel %vm1674, %v1719, 0
        %v1727 = vsel %vm1674, %v1477, 0
        %v1730 = vsel %vm1674, %v1478, 0
        %1732 = vmatprep.subr.bf16.mxu0 0
        %1733 = vmatpush1.bf16.xpose.msra.mxu0 %v1727
        %1734 = vmatprep.subr.bf16.mxu0 0
        %1735 = vmatpush1.bf16.xpose.msra.mxu0 %v1730
        %1736 = vmatprep.subr.bf16.mxu0 0
        %1737 = vmatpush1.bf16.xpose.msra.mxu0 0
        %1738 = vmatprep.subr.bf16.mxu0 0
        %1739 = vmatpush1.bf16.xpose.msra.mxu0 0
        %1740 = vmatprep.subr.bf16.mxu0 0
        %1741 = vmatpush1.bf16.xpose.msra.mxu0 0
        %1742 = vmatprep.subr.bf16.mxu0 0
        %1743 = vmatpush1.bf16.xpose.msra.mxu0 0
        %1744 = vmatprep.subr.bf16.mxu0 0
        %1745 = vmatpush1.bf16.xpose.msra.mxu0 0
        %1746 = vmatprep.subr.bf16.mxu0 0
        %1747 = vmatpush1.bf16.xpose.msra.mxu0 0
        %1748 = vmatprep.subr.bf16.mxu0 0
        %1749 = vmatpush1.bf16.xpose.msra.mxu0 0
        %1750 = vmatprep.subr.bf16.mxu0 0
        %1751 = vmatpush1.bf16.xpose.msra.mxu0 0
        %1752 = vmatprep.subr.bf16.mxu0 0
        %1753 = vmatpush1.bf16.xpose.msra.mxu0 0
        %1754 = vmatprep.subr.bf16.mxu0 0
        %1755 = vmatpush1.bf16.xpose.msra.mxu0 0
        %1756 = vmatprep.subr.bf16.mxu0 0
        %1757 = vmatpush1.bf16.xpose.msra.mxu0 0
        %1758 = vmatprep.subr.bf16.mxu0 0
        %1759 = vmatpush1.bf16.xpose.msra.mxu0 0
        %1760 = vmatprep.subr.bf16.mxu0 0
        %1761 = vmatpush1.bf16.xpose.msra.mxu0 0
        %1762 = vmatprep.subr.bf16.mxu0 0
        %1763 = vmatpush1.bf16.xpose.msra.mxu0 0
        %1764 = vmatprep.mubr.bf16.mxu0 0
        %1765 = vmatmul.mubr.bf16.gmra.mrb[0].mxu0 %v1724
        %v1766 = vpop.f32.mrb[0].mxu0
        %v1767 = vadd.f32 0.0, %v1766
        %v1768 = vpop.f32.mrb[0].mxu0
        %v1769 = vpop.f32.mrb[0].mxu0
        %v1770 = vpop.f32.mrb[0].mxu0
        %1771 = vdwg.mxu0
        %v1773 = vsel %vm1674, %v1720, 0
        %v1776 = vsel %vm1674, %v1479, 0
        %v1779 = vsel %vm1674, %v1480, 0
        %1781 = vmatprep.subr.bf16.mxu0 0
        %1782 = vmatpush1.bf16.xpose.msra.mxu0 %v1776
        %1783 = vmatprep.subr.bf16.mxu0 0
        %1784 = vmatpush1.bf16.xpose.msra.mxu0 %v1779
        %1785 = vmatprep.subr.bf16.mxu0 0
        %1786 = vmatpush1.bf16.xpose.msra.mxu0 0
        %1787 = vmatprep.subr.bf16.mxu0 0
        %1788 = vmatpush1.bf16.xpose.msra.mxu0 0
        %1789 = vmatprep.subr.bf16.mxu0 0
        %1790 = vmatpush1.bf16.xpose.msra.mxu0 0
        %1791 = vmatprep.subr.bf16.mxu0 0
        %1792 = vmatpush1.bf16.xpose.msra.mxu0 0
        %1793 = vmatprep.subr.bf16.mxu0 0
        %1794 = vmatpush1.bf16.xpose.msra.mxu0 0
        %1795 = vmatprep.subr.bf16.mxu0 0
        %1796 = vmatpush1.bf16.xpose.msra.mxu0 0
        %1797 = vmatprep.subr.bf16.mxu0 0
        %1798 = vmatpush1.bf16.xpose.msra.mxu0 0
        %1799 = vmatprep.subr.bf16.mxu0 0
        %1800 = vmatpush1.bf16.xpose.msra.mxu0 0
        %1801 = vmatprep.subr.bf16.mxu0 0
        %1802 = vmatpush1.bf16.xpose.msra.mxu0 0
        %1803 = vmatprep.subr.bf16.mxu0 0
        %1804 = vmatpush1.bf16.xpose.msra.mxu0 0
        %1805 = vmatprep.subr.bf16.mxu0 0
        %1806 = vmatpush1.bf16.xpose.msra.mxu0 0
        %1807 = vmatprep.subr.bf16.mxu0 0
        %1808 = vmatpush1.bf16.xpose.msra.mxu0 0
        %1809 = vmatprep.subr.bf16.mxu0 0
        %1810 = vmatpush1.bf16.xpose.msra.mxu0 0
        %1811 = vmatprep.subr.bf16.mxu0 0
        %1812 = vmatpush1.bf16.xpose.msra.mxu0 0
        %1813 = vmatprep.mubr.bf16.mxu0 0
        %1814 = vmatmul.mubr.bf16.gmra.mrb[0].mxu0 %v1773
        %v1815 = vpop.f32.mrb[0].mxu0
        %v1816 = vadd.f32 0.0, %v1815
        %v1817 = vpop.f32.mrb[0].mxu0
        %v1818 = vpop.f32.mrb[0].mxu0
        %v1819 = vpop.f32.mrb[0].mxu0
        %1820 = vdwg.mxu0
        %v1822 = vsel %vm1674, %v1721, 0
        %v1825 = vsel %vm1674, %v1481, 0
        %v1828 = vsel %vm1674, %v1482, 0
        %1830 = vmatprep.subr.bf16.mxu0 0
        %1831 = vmatpush1.bf16.xpose.msra.mxu0 %v1825
        %1832 = vmatprep.subr.bf16.mxu0 0
        %1833 = vmatpush1.bf16.xpose.msra.mxu0 %v1828
        %1834 = vmatprep.subr.bf16.mxu0 0
        %1835 = vmatpush1.bf16.xpose.msra.mxu0 0
        %1836 = vmatprep.subr.bf16.mxu0 0
        %1837 = vmatpush1.bf16.xpose.msra.mxu0 0
        %1838 = vmatprep.subr.bf16.mxu0 0
        %1839 = vmatpush1.bf16.xpose.msra.mxu0 0
        %1840 = vmatprep.subr.bf16.mxu0 0
        %1841 = vmatpush1.bf16.xpose.msra.mxu0 0
        %1842 = vmatprep.subr.bf16.mxu0 0
        %1843 = vmatpush1.bf16.xpose.msra.mxu0 0
        %1844 = vmatprep.subr.bf16.mxu0 0
        %1845 = vmatpush1.bf16.xpose.msra.mxu0 0
        %1846 = vmatprep.subr.bf16.mxu0 0
        %1847 = vmatpush1.bf16.xpose.msra.mxu0 0
        %1848 = vmatprep.subr.bf16.mxu0 0
        %1849 = vmatpush1.bf16.xpose.msra.mxu0 0
        %1850 = vmatprep.subr.bf16.mxu0 0
        %1851 = vmatpush1.bf16.xpose.msra.mxu0 0
        %1852 = vmatprep.subr.bf16.mxu0 0
        %1853 = vmatpush1.bf16.xpose.msra.mxu0 0
        %1854 = vmatprep.subr.bf16.mxu0 0
        %1855 = vmatpush1.bf16.xpose.msra.mxu0 0
        %1856 = vmatprep.subr.bf16.mxu0 0
        %1857 = vmatpush1.bf16.xpose.msra.mxu0 0
        %1858 = vmatprep.subr.bf16.mxu0 0
        %1859 = vmatpush1.bf16.xpose.msra.mxu0 0
        %1860 = vmatprep.subr.bf16.mxu0 0
        %1861 = vmatpush1.bf16.xpose.msra.mxu0 0
        %1862 = vmatprep.mubr.bf16.mxu0 0
        %1863 = vmatmul.mubr.bf16.gmra.mrb[0].mxu0 %v1822
        %v1864 = vpop.f32.mrb[0].mxu0
        %v1865 = vadd.f32 0.0, %v1864
        %v1866 = vpop.f32.mrb[0].mxu0
        %v1867 = vpop.f32.mrb[0].mxu0
        %v1868 = vpop.f32.mrb[0].mxu0
        %1869 = vdwg.mxu0
        %v1871 = vsel %vm1674, %v1722, 0
        %v1874 = vsel %vm1674, %v1483, 0
        %v1877 = vsel %vm1674, %v1484, 0
        %1879 = vmatprep.subr.bf16.mxu0 0
        %1880 = vmatpush1.bf16.xpose.msra.mxu0 %v1874
        %1881 = vmatprep.subr.bf16.mxu0 0
        %1882 = vmatpush1.bf16.xpose.msra.mxu0 %v1877
        %1883 = vmatprep.subr.bf16.mxu0 0
        %1884 = vmatpush1.bf16.xpose.msra.mxu0 0
        %1885 = vmatprep.subr.bf16.mxu0 0
        %1886 = vmatpush1.bf16.xpose.msra.mxu0 0
        %1887 = vmatprep.subr.bf16.mxu0 0
        %1888 = vmatpush1.bf16.xpose.msra.mxu0 0
        %1889 = vmatprep.subr.bf16.mxu0 0
        %1890 = vmatpush1.bf16.xpose.msra.mxu0 0
        %1891 = vmatprep.subr.bf16.mxu0 0
        %1892 = vmatpush1.bf16.xpose.msra.mxu0 0
        %1893 = vmatprep.subr.bf16.mxu0 0
        %1894 = vmatpush1.bf16.xpose.msra.mxu0 0
        %1895 = vmatprep.subr.bf16.mxu0 0
        %1896 = vmatpush1.bf16.xpose.msra.mxu0 0
        %1897 = vmatprep.subr.bf16.mxu0 0
        %1898 = vmatpush1.bf16.xpose.msra.mxu0 0
        %1899 = vmatprep.subr.bf16.mxu0 0
        %1900 = vmatpush1.bf16.xpose.msra.mxu0 0
        %1901 = vmatprep.subr.bf16.mxu0 0
        %1902 = vmatpush1.bf16.xpose.msra.mxu0 0
        %1903 = vmatprep.subr.bf16.mxu0 0
        %1904 = vmatpush1.bf16.xpose.msra.mxu0 0
        %1905 = vmatprep.subr.bf16.mxu0 0
        %1906 = vmatpush1.bf16.xpose.msra.mxu0 0
        %1907 = vmatprep.subr.bf16.mxu0 0
        %1908 = vmatpush1.bf16.xpose.msra.mxu0 0
        %1909 = vmatprep.subr.bf16.mxu0 0
        %1910 = vmatpush1.bf16.xpose.msra.mxu0 0
        %1911 = vmatprep.mubr.bf16.mxu0 0
        %1912 = vmatmul.mubr.bf16.gmra.mrb[0].mxu0 %v1871
        %v1913 = vpop.f32.mrb[0].mxu0
        %v1914 = vadd.f32 0.0, %v1913
        %v1915 = vpop.f32.mrb[0].mxu0
        %v1916 = vpop.f32.mrb[0].mxu0
        %v1917 = vpop.f32.mrb[0].mxu0
        %1918 = vdwg.mxu0
        %v1919 = vpack.c.bf16 %v1767, %v1767
        %v1920 = vpack.c.bf16 %v1816, %v1816
        %v1921 = vpack.c.bf16 %v1865, %v1865
        %v1922 = vpack.c.bf16 %v1914, %v1914
        %v1927 = vunpack.c.l.b16 %v920
        %v1928 = vunpack.c.l.b16 %v921
        %v1929 = vunpack.c.l.b16 %v922
        %v1930 = vunpack.c.l.b16 %v923
        %v1931 = vpack.c.b16 %v1928, %v1927
        %v1932 = vpack.c.b16 %v1930, %v1929
        %v1936 = vsel %vm1487, %v1919, 0
        %1938 = vmatprep.subr.bf16.mxu0 0
        %1939 = vmatpush1.bf16.msra.mxu0 %v1931
        %1940 = vmatprep.subr.bf16.mxu0 0
        %1941 = vmatpush1.bf16.msra.mxu0 %v1932
        %1942 = vmatprep.subr.bf16.mxu0 0
        %1943 = vmatpush1.bf16.msra.mxu0 0
        %1944 = vmatprep.subr.bf16.mxu0 0
        %1945 = vmatpush1.bf16.msra.mxu0 0
        %1946 = vmatprep.subr.bf16.mxu0 0
        %1947 = vmatpush1.bf16.msra.mxu0 0
        %1948 = vmatprep.subr.bf16.mxu0 0
        %1949 = vmatpush1.bf16.msra.mxu0 0
        %1950 = vmatprep.subr.bf16.mxu0 0
        %1951 = vmatpush1.bf16.msra.mxu0 0
        %1952 = vmatprep.subr.bf16.mxu0 0
        %1953 = vmatpush1.bf16.msra.mxu0 0
        %1954 = vmatprep.subr.bf16.mxu0 0
        %1955 = vmatpush1.bf16.msra.mxu0 0
        %1956 = vmatprep.subr.bf16.mxu0 0
        %1957 = vmatpush1.bf16.msra.mxu0 0
        %1958 = vmatprep.subr.bf16.mxu0 0
        %1959 = vmatpush1.bf16.msra.mxu0 0
        %1960 = vmatprep.subr.bf16.mxu0 0
        %1961 = vmatpush1.bf16.msra.mxu0 0
        %1962 = vmatprep.subr.bf16.mxu0 0
        %1963 = vmatpush1.bf16.msra.mxu0 0
        %1964 = vmatprep.subr.bf16.mxu0 0
        %1965 = vmatpush1.bf16.msra.mxu0 0
        %1966 = vmatprep.subr.bf16.mxu0 0
        %1967 = vmatpush1.bf16.msra.mxu0 0
        %1968 = vmatprep.subr.bf16.mxu0 0
        %1969 = vmatpush1.bf16.msra.mxu0 0
        %1970 = vmatprep.mubr.bf16.mxu0 0
        %1971 = vmatmul.mubr.bf16.gmra.mrb[0].mxu0 %v1936
        %v1972 = vpop.f32.mrb[0].mxu0
        %v1973 = vadd.f32 0.0, %v1972
        %v1974 = vpop.f32.mrb[0].mxu0
        %v1975 = vpop.f32.mrb[0].mxu0
        %v1976 = vpop.f32.mrb[0].mxu0
        %1977 = vdwg.mxu0
        %v1982 = vunpack.c.l.b16 %v924
        %v1983 = vunpack.c.l.b16 %v925
        %v1984 = vunpack.c.l.b16 %v926
        %v1985 = vunpack.c.l.b16 %v927
        %v1986 = vpack.c.b16 %v1983, %v1982
        %v1987 = vpack.c.b16 %v1985, %v1984
        %v1991 = vsel %vm1487, %v1920, 0
        %1993 = vmatprep.subr.bf16.mxu0 0
        %1994 = vmatpush1.bf16.msra.mxu0 %v1986
        %1995 = vmatprep.subr.bf16.mxu0 0
        %1996 = vmatpush1.bf16.msra.mxu0 %v1987
        %1997 = vmatprep.subr.bf16.mxu0 0
        %1998 = vmatpush1.bf16.msra.mxu0 0
        %1999 = vmatprep.subr.bf16.mxu0 0
        %2000 = vmatpush1.bf16.msra.mxu0 0
        %2001 = vmatprep.subr.bf16.mxu0 0
        %2002 = vmatpush1.bf16.msra.mxu0 0
        %2003 = vmatprep.subr.bf16.mxu0 0
        %2004 = vmatpush1.bf16.msra.mxu0 0
        %2005 = vmatprep.subr.bf16.mxu0 0
        %2006 = vmatpush1.bf16.msra.mxu0 0
        %2007 = vmatprep.subr.bf16.mxu0 0
        %2008 = vmatpush1.bf16.msra.mxu0 0
        %2009 = vmatprep.subr.bf16.mxu0 0
        %2010 = vmatpush1.bf16.msra.mxu0 0
        %2011 = vmatprep.subr.bf16.mxu0 0
        %2012 = vmatpush1.bf16.msra.mxu0 0
        %2013 = vmatprep.subr.bf16.mxu0 0
        %2014 = vmatpush1.bf16.msra.mxu0 0
        %2015 = vmatprep.subr.bf16.mxu0 0
        %2016 = vmatpush1.bf16.msra.mxu0 0
        %2017 = vmatprep.subr.bf16.mxu0 0
        %2018 = vmatpush1.bf16.msra.mxu0 0
        %2019 = vmatprep.subr.bf16.mxu0 0
        %2020 = vmatpush1.bf16.msra.mxu0 0
        %2021 = vmatprep.subr.bf16.mxu0 0
        %2022 = vmatpush1.bf16.msra.mxu0 0
        %2023 = vmatprep.subr.bf16.mxu0 0
        %2024 = vmatpush1.bf16.msra.mxu0 0
        %2025 = vmatprep.mubr.bf16.mxu0 0
        %2026 = vmatmul.mubr.bf16.gmra.mrb[0].mxu0 %v1991
        %v2027 = vpop.f32.mrb[0].mxu0
        %v2028 = vadd.f32 0.0, %v2027
        %v2029 = vpop.f32.mrb[0].mxu0
        %v2030 = vpop.f32.mrb[0].mxu0
        %v2031 = vpop.f32.mrb[0].mxu0
        %2032 = vdwg.mxu0
        %v2037 = vunpack.c.l.b16 %v928
        %v2038 = vunpack.c.l.b16 %v929
        %v2039 = vunpack.c.l.b16 %v930
        %v2040 = vunpack.c.l.b16 %v931
        %v2041 = vpack.c.b16 %v2038, %v2037
        %v2042 = vpack.c.b16 %v2040, %v2039
        %v2046 = vsel %vm1487, %v1921, 0
        %2048 = vmatprep.subr.bf16.mxu0 0
        %2049 = vmatpush1.bf16.msra.mxu0 %v2041
        %2050 = vmatprep.subr.bf16.mxu0 0
        %2051 = vmatpush1.bf16.msra.mxu0 %v2042
        %2052 = vmatprep.subr.bf16.mxu0 0
        %2053 = vmatpush1.bf16.msra.mxu0 0
        %2054 = vmatprep.subr.bf16.mxu0 0
        %2055 = vmatpush1.bf16.msra.mxu0 0
        %2056 = vmatprep.subr.bf16.mxu0 0
        %2057 = vmatpush1.bf16.msra.mxu0 0
        %2058 = vmatprep.subr.bf16.mxu0 0
        %2059 = vmatpush1.bf16.msra.mxu0 0
        %2060 = vmatprep.subr.bf16.mxu0 0
        %2061 = vmatpush1.bf16.msra.mxu0 0
        %2062 = vmatprep.subr.bf16.mxu0 0
        %2063 = vmatpush1.bf16.msra.mxu0 0
        %2064 = vmatprep.subr.bf16.mxu0 0
        %2065 = vmatpush1.bf16.msra.mxu0 0
        %2066 = vmatprep.subr.bf16.mxu0 0
        %2067 = vmatpush1.bf16.msra.mxu0 0
        %2068 = vmatprep.subr.bf16.mxu0 0
        %2069 = vmatpush1.bf16.msra.mxu0 0
        %2070 = vmatprep.subr.bf16.mxu0 0
        %2071 = vmatpush1.bf16.msra.mxu0 0
        %2072 = vmatprep.subr.bf16.mxu0 0
        %2073 = vmatpush1.bf16.msra.mxu0 0
        %2074 = vmatprep.subr.bf16.mxu0 0
        %2075 = vmatpush1.bf16.msra.mxu0 0
        %2076 = vmatprep.subr.bf16.mxu0 0
        %2077 = vmatpush1.bf16.msra.mxu0 0
        %2078 = vmatprep.subr.bf16.mxu0 0
        %2079 = vmatpush1.bf16.msra.mxu0 0
        %2080 = vmatprep.mubr.bf16.mxu0 0
        %2081 = vmatmul.mubr.bf16.gmra.mrb[0].mxu0 %v2046
        %v2082 = vpop.f32.mrb[0].mxu0
        %v2083 = vadd.f32 0.0, %v2082
        %v2084 = vpop.f32.mrb[0].mxu0
        %v2085 = vpop.f32.mrb[0].mxu0
        %v2086 = vpop.f32.mrb[0].mxu0
        %2087 = vdwg.mxu0
        %v2092 = vunpack.c.l.b16 %v932
        %v2093 = vunpack.c.l.b16 %v933
        %v2094 = vunpack.c.l.b16 %v934
        %v2095 = vunpack.c.l.b16 %v935
        %v2096 = vpack.c.b16 %v2093, %v2092
        %v2097 = vpack.c.b16 %v2095, %v2094
        %v2101 = vsel %vm1487, %v1922, 0
        %2103 = vmatprep.subr.bf16.mxu0 0
        %2104 = vmatpush1.bf16.msra.mxu0 %v2096
        %2105 = vmatprep.subr.bf16.mxu0 0
        %2106 = vmatpush1.bf16.msra.mxu0 %v2097
        %2107 = vmatprep.subr.bf16.mxu0 0
        %2108 = vmatpush1.bf16.msra.mxu0 0
        %2109 = vmatprep.subr.bf16.mxu0 0
        %2110 = vmatpush1.bf16.msra.mxu0 0
        %2111 = vmatprep.subr.bf16.mxu0 0
        %2112 = vmatpush1.bf16.msra.mxu0 0
        %2113 = vmatprep.subr.bf16.mxu0 0
        %2114 = vmatpush1.bf16.msra.mxu0 0
        %2115 = vmatprep.subr.bf16.mxu0 0
        %2116 = vmatpush1.bf16.msra.mxu0 0
        %2117 = vmatprep.subr.bf16.mxu0 0
        %2118 = vmatpush1.bf16.msra.mxu0 0
        %2119 = vmatprep.subr.bf16.mxu0 0
        %2120 = vmatpush1.bf16.msra.mxu0 0
        %2121 = vmatprep.subr.bf16.mxu0 0
        %2122 = vmatpush1.bf16.msra.mxu0 0
        %2123 = vmatprep.subr.bf16.mxu0 0
        %2124 = vmatpush1.bf16.msra.mxu0 0
        %2125 = vmatprep.subr.bf16.mxu0 0
        %2126 = vmatpush1.bf16.msra.mxu0 0
        %2127 = vmatprep.subr.bf16.mxu0 0
        %2128 = vmatpush1.bf16.msra.mxu0 0
        %2129 = vmatprep.subr.bf16.mxu0 0
        %2130 = vmatpush1.bf16.msra.mxu0 0
        %2131 = vmatprep.subr.bf16.mxu0 0
        %2132 = vmatpush1.bf16.msra.mxu0 0
        %2133 = vmatprep.subr.bf16.mxu0 0
        %2134 = vmatpush1.bf16.msra.mxu0 0
        %2135 = vmatprep.mubr.bf16.mxu0 0
        %2136 = vmatmul.mubr.bf16.gmra.mrb[0].mxu0 %v2101
        %v2137 = vpop.f32.mrb[0].mxu0
        %v2138 = vadd.f32 0.0, %v2137
        %v2139 = vpop.f32.mrb[0].mxu0
        %v2140 = vpop.f32.mrb[0].mxu0
        %v2141 = vpop.f32.mrb[0].mxu0
        %2142 = vdwg.mxu0
        %v2143 = vadd.f32 %v1973, %v2028
        %v2144 = vadd.f32 %v2143, %v2083
        %v2145 = vadd.f32 %v2144, %v2138
        %v2147 = vlaneseq
        %v2148 = vshrl.u32 %v2147, 7
        %v2149 = vsub.s32 0, %v2148
        %v2150 = vrot.slane %v936, %v2149
        %v2152 = vadd.f32 %v2145, %v2150
        %v2153 = vadd.f32 %v883, %v2152
        %2154 = vadd.xlane.f32.xlu0 %v2153
        %v2155 = vpop.xlane.xlu0 %2154
        %v2156 = vmul.f32 %v2155, %v991
        %v2157 = vsub.f32 %v2153, %v2156
        %v2158 = vmul.f32 %v2157, %v2157
        %2159 = vadd.xlane.f32.xlu0 %v2158
        %v2160 = vpop.xlane.xlu0 %2159
        %v2161 = vmul.f32 %v2160, %v991
        %v2162 = vadd.f32 %v2161, 1e-05
        %v2163 = vrsqrt.pop %v2162
        %v2164 = vmul.f32 %v2157, %v2163
        %v2166 = vlaneseq
        %v2167 = vshrl.u32 %v2166, 7
        %v2168 = vsub.s32 0, %v2167
        %v2169 = vrot.slane %v937, %v2168
        %v2171 = vmul.f32 %v2164, %v2169
        %v2173 = vlaneseq
        %v2174 = vshrl.u32 %v2173, 7
        %v2175 = vsub.s32 0, %v2174
        %v2176 = vrot.slane %v938, %v2175
        %v2178 = vadd.f32 %v2171, %v2176
        %v2179 = vpack.c.bf16 %v2178, %v2178
        %v2181 = vlaneseq
        %v2182 = vshrl.u32 %v2181, 7
        %v2183 = vsub.s32 0, %v2182
        %v2184 = vrot.slane %v955, %v2183
        %v2185 = vlaneseq
        %v2186 = vshrl.u32 %v2185, 7
        %v2187 = vsub.s32 1, %v2186
        %v2188 = vrot.slane %v955, %v2187
        %v2207 = vunpack.c.l.b16 %v939
        %v2208 = vunpack.c.h.b16 %v939
        %v2209 = vunpack.c.l.b16 %v940
        %v2210 = vunpack.c.h.b16 %v940
        %v2211 = vunpack.c.l.b16 %v941
        %v2212 = vunpack.c.h.b16 %v941
        %v2213 = vunpack.c.l.b16 %v942
        %v2214 = vunpack.c.h.b16 %v942
        %v2215 = vunpack.c.l.b16 %v943
        %v2216 = vunpack.c.h.b16 %v943
        %v2217 = vunpack.c.l.b16 %v944
        %v2218 = vunpack.c.h.b16 %v944
        %v2219 = vunpack.c.l.b16 %v945
        %v2220 = vunpack.c.h.b16 %v945
        %v2221 = vunpack.c.l.b16 %v946
        %v2222 = vunpack.c.h.b16 %v946
        %v2223 = vunpack.c.l.b16 %v947
        %v2224 = vunpack.c.h.b16 %v947
        %v2225 = vunpack.c.l.b16 %v948
        %v2226 = vunpack.c.h.b16 %v948
        %v2227 = vunpack.c.l.b16 %v949
        %v2228 = vunpack.c.h.b16 %v949
        %v2229 = vunpack.c.l.b16 %v950
        %v2230 = vunpack.c.h.b16 %v950
        %v2231 = vunpack.c.l.b16 %v951
        %v2232 = vunpack.c.h.b16 %v951
        %v2233 = vunpack.c.l.b16 %v952
        %v2234 = vunpack.c.h.b16 %v952
        %v2235 = vunpack.c.l.b16 %v953
        %v2236 = vunpack.c.h.b16 %v953
        %v2237 = vunpack.c.l.b16 %v954
        %v2238 = vunpack.c.h.b16 %v954
        %v2239 = vpack.c.b16 %v2209, %v2207
        %v2240 = vpack.c.b16 %v2210, %v2208
        %v2241 = vpack.c.b16 %v2213, %v2211
        %v2242 = vpack.c.b16 %v2214, %v2212
        %v2243 = vpack.c.b16 %v2217, %v2215
        %v2244 = vpack.c.b16 %v2218, %v2216
        %v2245 = vpack.c.b16 %v2221, %v2219
        %v2246 = vpack.c.b16 %v2222, %v2220
        %v2247 = vpack.c.b16 %v2225, %v2223
        %v2248 = vpack.c.b16 %v2226, %v2224
        %v2249 = vpack.c.b16 %v2229, %v2227
        %v2250 = vpack.c.b16 %v2230, %v2228
        %v2251 = vpack.c.b16 %v2233, %v2231
        %v2252 = vpack.c.b16 %v2234, %v2232
        %v2253 = vpack.c.b16 %v2237, %v2235
        %v2254 = vpack.c.b16 %v2238, %v2236
        %2271 = vmatprep.subr.bf16.mxu0 %v2240
        %2272 = vmatpush1.bf16.msra.mxu0 %v2239
        %2273 = vmatprep.subr.bf16.mxu0 %v2242
        %2274 = vmatpush1.bf16.msra.mxu0 %v2241
        %2275 = vmatprep.subr.bf16.mxu0 %v2244
        %2276 = vmatpush1.bf16.msra.mxu0 %v2243
        %2277 = vmatprep.subr.bf16.mxu0 %v2246
        %2278 = vmatpush1.bf16.msra.mxu0 %v2245
        %2279 = vmatprep.subr.bf16.mxu0 %v2248
        %2280 = vmatpush1.bf16.msra.mxu0 %v2247
        %2281 = vmatprep.subr.bf16.mxu0 %v2250
        %2282 = vmatpush1.bf16.msra.mxu0 %v2249
        %2283 = vmatprep.subr.bf16.mxu0 %v2252
        %2284 = vmatpush1.bf16.msra.mxu0 %v2251
        %2285 = vmatprep.subr.bf16.mxu0 %v2254
        %2286 = vmatpush1.bf16.msra.mxu0 %v2253
        %2287 = vmatprep.subr.bf16.mxu0 0
        %2288 = vmatpush1.bf16.msra.mxu0 0
        %2289 = vmatprep.subr.bf16.mxu0 0
        %2290 = vmatpush1.bf16.msra.mxu0 0
        %2291 = vmatprep.subr.bf16.mxu0 0
        %2292 = vmatpush1.bf16.msra.mxu0 0
        %2293 = vmatprep.subr.bf16.mxu0 0
        %2294 = vmatpush1.bf16.msra.mxu0 0
        %2295 = vmatprep.subr.bf16.mxu0 0
        %2296 = vmatpush1.bf16.msra.mxu0 0
        %2297 = vmatprep.subr.bf16.mxu0 0
        %2298 = vmatpush1.bf16.msra.mxu0 0
        %2299 = vmatprep.subr.bf16.mxu0 0
        %2300 = vmatpush1.bf16.msra.mxu0 0
        %2301 = vmatprep.subr.bf16.mxu0 0
        %2302 = vmatpush1.bf16.msra.mxu0 0
        %2303 = vmatprep.mubr.bf16.mxu0 0
        %2304 = vmatmul.mubr.bf16.gmra.mrb[0].mxu0 %v2179
        %v2305 = vpop.f32.mrb[0].mxu0
        %v2306 = vadd.f32 %v2184, %v2305
        %v2307 = vpop.f32.mrb[0].mxu0
        %v2308 = vadd.f32 %v2188, %v2307
        %v2309 = vpop.f32.mrb[0].mxu0
        %v2310 = vpop.f32.mrb[0].mxu0
        %2311 = vdwg.mxu0
        %v2312 = vmax.f32 %v2306, 0.0
        %v2313 = vmax.f32 %v2308, 0.0
        %v2314 = vpack.c.bf16 %v2312, %v2312
        %v2315 = vpack.c.bf16 %v2313, %v2313
        %v2317 = vlaneseq
        %v2318 = vshrl.u32 %v2317, 7
        %v2319 = vsub.s32 0, %v2318
        %v2320 = vrot.slane %v988, %v2319
        %v2354 = vunpack.c.l.b16 %v956
        %v2355 = vunpack.c.l.b16 %v957
        %v2356 = vunpack.c.l.b16 %v958
        %v2357 = vunpack.c.l.b16 %v959
        %v2358 = vunpack.c.l.b16 %v960
        %v2359 = vunpack.c.l.b16 %v961
        %v2360 = vunpack.c.l.b16 %v962
        %v2361 = vunpack.c.l.b16 %v963
        %v2362 = vunpack.c.l.b16 %v964
        %v2363 = vunpack.c.l.b16 %v965
        %v2364 = vunpack.c.l.b16 %v966
        %v2365 = vunpack.c.l.b16 %v967
        %v2366 = vunpack.c.l.b16 %v968
        %v2367 = vunpack.c.l.b16 %v969
        %v2368 = vunpack.c.l.b16 %v970
        %v2369 = vunpack.c.l.b16 %v971
        %v2370 = vunpack.c.l.b16 %v972
        %v2371 = vunpack.c.l.b16 %v973
        %v2372 = vunpack.c.l.b16 %v974
        %v2373 = vunpack.c.l.b16 %v975
        %v2374 = vunpack.c.l.b16 %v976
        %v2375 = vunpack.c.l.b16 %v977
        %v2376 = vunpack.c.l.b16 %v978
        %v2377 = vunpack.c.l.b16 %v979
        %v2378 = vunpack.c.l.b16 %v980
        %v2379 = vunpack.c.l.b16 %v981
        %v2380 = vunpack.c.l.b16 %v982
        %v2381 = vunpack.c.l.b16 %v983
        %v2382 = vunpack.c.l.b16 %v984
        %v2383 = vunpack.c.l.b16 %v985
        %v2384 = vunpack.c.l.b16 %v986
        %v2385 = vunpack.c.l.b16 %v987
        %v2386 = vpack.c.b16 %v2355, %v2354
        %v2387 = vpack.c.b16 %v2357, %v2356
        %v2388 = vpack.c.b16 %v2359, %v2358
        %v2389 = vpack.c.b16 %v2361, %v2360
        %v2390 = vpack.c.b16 %v2363, %v2362
        %v2391 = vpack.c.b16 %v2365, %v2364
        %v2392 = vpack.c.b16 %v2367, %v2366
        %v2393 = vpack.c.b16 %v2369, %v2368
        %v2394 = vpack.c.b16 %v2371, %v2370
        %v2395 = vpack.c.b16 %v2373, %v2372
        %v2396 = vpack.c.b16 %v2375, %v2374
        %v2397 = vpack.c.b16 %v2377, %v2376
        %v2398 = vpack.c.b16 %v2379, %v2378
        %v2399 = vpack.c.b16 %v2381, %v2380
        %v2400 = vpack.c.b16 %v2383, %v2382
        %v2401 = vpack.c.b16 %v2385, %v2384
        %2418 = vmatprep.subr.bf16.mxu0 0
        %2419 = vmatpush1.bf16.msra.mxu0 %v2386
        %2420 = vmatprep.subr.bf16.mxu0 0
        %2421 = vmatpush1.bf16.msra.mxu0 %v2387
        %2422 = vmatprep.subr.bf16.mxu0 0
        %2423 = vmatpush1.bf16.msra.mxu0 %v2388
        %2424 = vmatprep.subr.bf16.mxu0 0
        %2425 = vmatpush1.bf16.msra.mxu0 %v2389
        %2426 = vmatprep.subr.bf16.mxu0 0
        %2427 = vmatpush1.bf16.msra.mxu0 %v2390
        %2428 = vmatprep.subr.bf16.mxu0 0
        %2429 = vmatpush1.bf16.msra.mxu0 %v2391
        %2430 = vmatprep.subr.bf16.mxu0 0
        %2431 = vmatpush1.bf16.msra.mxu0 %v2392
        %2432 = vmatprep.subr.bf16.mxu0 0
        %2433 = vmatpush1.bf16.msra.mxu0 %v2393
        %2434 = vmatprep.subr.bf16.mxu0 0
        %2435 = vmatpush1.bf16.msra.mxu0 %v2394
        %2436 = vmatprep.subr.bf16.mxu0 0
        %2437 = vmatpush1.bf16.msra.mxu0 %v2395
        %2438 = vmatprep.subr.bf16.mxu0 0
        %2439 = vmatpush1.bf16.msra.mxu0 %v2396
        %2440 = vmatprep.subr.bf16.mxu0 0
        %2441 = vmatpush1.bf16.msra.mxu0 %v2397
        %2442 = vmatprep.subr.bf16.mxu0 0
        %2443 = vmatpush1.bf16.msra.mxu0 %v2398
        %2444 = vmatprep.subr.bf16.mxu0 0
        %2445 = vmatpush1.bf16.msra.mxu0 %v2399
        %2446 = vmatprep.subr.bf16.mxu0 0
        %2447 = vmatpush1.bf16.msra.mxu0 %v2400
        %2448 = vmatprep.subr.bf16.mxu0 0
        %2449 = vmatpush1.bf16.msra.mxu0 %v2401
        %2450 = vmatprep.mubr.bf16.mxu0 %v2315
        %2451 = vmatmul.mubr.bf16.gmra.mrb[0].mxu0 %v2314
        %v2452 = vpop.f32.mrb[0].mxu0
        %v2453 = vadd.f32 %v2320, %v2452
        %v2454 = vpop.f32.mrb[0].mxu0
        %v2455 = vpop.f32.mrb[0].mxu0
        %v2456 = vpop.f32.mrb[0].mxu0
        %2457 = vdwg.mxu0
        %v2458 = vadd.f32 %v2153, %v2453
        %2459 = vst [vmem:[#allocation2] sm:$0xff] %v2458
        // Predicated region
        $region101: #{multi_scale_encoder.1} parent=87 // pred_check
          %p2460 = pneg %p860
        $region102: #{multi_scale_encoder.1} parent=87 // pred_check_branch
          %2462 = sbr.rel (%p2460) target = $region104
        $region103: #{multi_scale_encoder.1} parent=87 // pred_region
          %v2463 = vld [vmem:[#allocation2] sm:$0xff]
          %v2464 = vld [vmem:[%s3] sm:$0x1]
          %v2465 = vld [vmem:[%s4] sm:$0x1]
          %2466 = vadd.xlane.f32.xlu0 %v2463
          %v2467 = vpop.xlane.xlu0 %2466
          %v2468 = vmul.f32 %v2467, %v991
          %v2469 = vsub.f32 %v2463, %v2468
          %v2470 = vmul.f32 %v2469, %v2469
          %2471 = vadd.xlane.f32.xlu0 %v2470
          %v2472 = vpop.xlane.xlu0 %2471
          %v2473 = vmul.f32 %v2472, %v991
          %v2474 = vadd.f32 %v2473, 1e-05
          %v2475 = vrsqrt.pop %v2474
          %v2476 = vmul.f32 %v2469, %v2475
          %v2478 = vlaneseq
          %v2479 = vshrl.u32 %v2478, 7
          %v2480 = vsub.s32 0, %v2479
          %v2481 = vrot.slane %v2464, %v2480
          %v2483 = vmul.f32 %v2476, %v2481
          %v2485 = vlaneseq
          %v2486 = vshrl.u32 %v2485, 7
          %v2487 = vsub.s32 0, %v2486
          %v2488 = vrot.slane %v2465, %v2487
          %v2490 = vadd.f32 %v2483, %v2488
          %2491 = vst [vmem:[%s775] sm:$0xff] %v2490
          %v2492 = vld [vmem:[#allocation3] sm:$0x1]
          %vm2493 = vcmask 57344
          %2494 = vst.msk [vmem:[%s781] sm:$0x1] %vm2493, %v2492
        $region104: #{multi_scale_encoder.1} parent=87 // pred_fallthru
          _
        %s2495 = sand.u32 %s492, 1
        %s2496 = scalar_lea.sflag [#allocation6], %s2495
        %s2497 = sand.u32 %s492, 1
        %s2498 = smul.addr %s2497, 8
        %s2499 = scalar_lea.vmem [#allocation8], %s2498
        %s2500 = sand.u32 %s526, 1
        %s2501 = scalar_lea.sflag [#allocation10], %s2500
        %s2502 = sand.u32 %s526, 1
        %s2503 = scalar_lea.vmem [#allocation9], %s2502
        // Predicated region
        $region105: #{multi_scale_encoder.1} parent=87 // pred_check
          %p2504 = pneg %p502
        $region106: #{multi_scale_encoder.1} parent=87 // pred_check_branch
          %2506 = sbr.rel (%p2504) target = $region108
        $region107: #{multi_scale_encoder.1} parent=87 // pred_region
          %s2507 = ssub.s32 %s42, 1
          %p2508 = scmp.gt.s32.totalorder %s2507, 0
          %s2509 = scalar_select %p2508, %s2507, 0
          %s2511 = ssub.s32 128, 128
          %2512 = vsyncadd %s2496, %s2511
          %s2513 = smul.addr %s2509, 2
          %s2514 = sadd.s32 %s41, %s2513
          %s2515 = smul.addr %s2514, 128
          %s2516 = scalar_lea.hbm %s17, %s2515
          %s2518 = sshll.u32 %s2499, 4
          %s2519 = int_to_ptr.vmem [resolvable:$true] %s2518
          %2521 = dma.vmem_to_hbm [thread:$0]  %s2519, 128, %s2516, %s2496
        $region108: #{multi_scale_encoder.1} parent=87 // pred_fallthru
          _
        // Predicated region
        $region109: #{multi_scale_encoder.1} parent=87 // pred_check
          %p2522 = pneg %p536
        $region110: #{multi_scale_encoder.1} parent=87 // pred_check_branch
          %2524 = sbr.rel (%p2522) target = $region112
        $region111: #{multi_scale_encoder.1} parent=87 // pred_region
          %s2525 = ssub.s32 %s42, 1
          %p2526 = scmp.gt.s32.totalorder %s2525, 0
          %s2527 = scalar_select %p2526, %s2525, 0
          %s2529 = ssub.s32 16, 16
          %2530 = vsyncadd %s2501, %s2529
          %s2531 = smul.addr %s2527, 2
          %s2532 = sadd.s32 %s41, %s2531
          %s2533 = smul.addr %s2532, 16
          %s2534 = scalar_lea.hbm %s18, %s2533
          %s2536 = sshll.u32 %s2503, 4
          %s2537 = int_to_ptr.vmem [resolvable:$true] %s2536
          %2539 = dma.vmem_to_hbm [thread:$0]  %s2537, 16, %s2534, %s2501
        $region112: #{multi_scale_encoder.1} parent=87 // pred_fallthru
          _
      $region88: #{multi_scale_encoder.1} parent=5 // pred_fallthru
        _
      %p2540 = scmp.le.s32.totalorder 2, %s32
      // Predicated region
      $region113: #{multi_scale_encoder.1} parent=5 // pred_check
        %p2541 = pneg %p2540
      $region114: #{multi_scale_encoder.1} parent=5 // pred_check_branch
        %2543 = sbr.rel (%p2541) target = $region116
      $region115: #{multi_scale_encoder.1} parent=5 // pred_region
        %s2544 = ssub.s32 %s32, 2
        // Predicated region
        $region117: #{multi_scale_encoder.1} parent=115 // pred_check
          %p2545 = pneg %p508
        $region118: #{multi_scale_encoder.1} parent=115 // pred_check_branch
          %2547 = sbr.rel (%p2545) target = $region120
        $region119: #{multi_scale_encoder.1} parent=115 // pred_region
          %s2548 = sand.u32 %s493, 1
          %s2549 = scalar_lea.sflag [#allocation6], %s2548
          %s2550 = sand.u32 %s493, 1
          %s2551 = smul.addr %s2550, 8
          %s2552 = scalar_lea.vmem [#allocation8], %s2551
          %2553 = dma.done %s2549, 128
        $region120: #{multi_scale_encoder.1} parent=115 // pred_fallthru
          _
        // Predicated region
        $region121: #{multi_scale_encoder.1} parent=115 // pred_check
          %p2554 = pneg %p542
        $region122: #{multi_scale_encoder.1} parent=115 // pred_check_branch
          %2556 = sbr.rel (%p2554) target = $region124
        $region123: #{multi_scale_encoder.1} parent=115 // pred_region
          %s2557 = sand.u32 %s527, 1
          %s2558 = scalar_lea.sflag [#allocation10], %s2557
          %s2559 = sand.u32 %s527, 1
          %s2560 = scalar_lea.vmem [#allocation9], %s2559
          %2561 = dma.done %s2558, 16
        $region124: #{multi_scale_encoder.1} parent=115 // pred_fallthru
          _
      $region116: #{multi_scale_encoder.1} parent=5 // pred_fallthru
        _
    $region6: #{multi_scale_encoder.1} parent=1 // loop_footer
      %s36 = sadd.s32 1, %s32
    $region7: #{multi_scale_encoder.1} parent=1 // loop_footer_branch
      %31 = sbr.rel target = $region3
    $region8: #{multi_scale_encoder.1} parent=1 // loop_exit
      _
    %2562 = vsyncpa [#allocation6], 1
    %s2563 = scalar_lea.sflag [#allocation6], 1
    %2564 = vsyncpa %s2563, 1
    %2565 = vsyncpa [#allocation10], 1
    %s2566 = scalar_lea.sflag [#allocation10], 1
    %2567 = vsyncpa %s2566, 1
    %2568 = vsyncpa [#allocation7], 1
    %s2569 = scalar_lea.sflag [#allocation7], 1
    %2570 = vsyncpa %s2569, 1

</llo_original>
